<compile_context>
chip_gen: v5e
topology: v5e:2x2
jax: 0.10.0
libtpu: 0.0.40
codegen_flags: <defaults>
</compile_context>

<pallas_src>
import functools

import jax
import jax.numpy as jnp
from jax.experimental import pallas as pl
from jax.experimental.pallas import tpu as pltpu

_VMEM_LIMIT = 32 * 1024 * 1024  # safe on v5e (128M phys), v6e (128M), v7x (64M)


def _round_up(v, m):
    return (v + m - 1) // m * m


def _pick_tile(dim, pref, align):
    """Return (tile, padded_dim) with tile | padded_dim and tile % align == 0
    (or tile == padded_dim == round_up(dim, align) when dim <= pref)."""
    if dim <= pref:
        t = _round_up(dim, align)
        return t, t
    return pref, _round_up(dim, pref)


# ----------------------------------------------------------------------------
# Tiled matmul (+ bias, optional fused LayerNorm epilogue)
# ----------------------------------------------------------------------------
def _matmul_kernel(x_ref, w_ref, b_ref, g_ref, be_ref, o_ref, acc_ref, *,
                   fuse_ln, ln_eps):
    k = pl.program_id(2)

    @pl.when(k == 0)
    def _():
        acc_ref[...] = jnp.zeros_like(acc_ref)

    acc_ref[...] += jnp.dot(x_ref[...], w_ref[...],
                            preferred_element_type=jnp.float32)

    @pl.when(k == pl.num_programs(2) - 1)
    def _():
        y = acc_ref[...] + b_ref[...]
        if fuse_ln:
            # Only valid because the wrapper forces a single tile along N.
            mu = jnp.mean(y, axis=-1, keepdims=True)
            yc = y - mu
            var = jnp.mean(yc * yc, axis=-1, keepdims=True)
            y = yc * jax.lax.rsqrt(var + ln_eps) * g_ref[...] + be_ref[...]
        o_ref[...] = y.astype(o_ref.dtype)


def matmul_bias(x, w, b, *, ln_gamma=None, ln_beta=None, ln_eps=1e-5):
    """(M, K) @ (K, N) + b, optionally followed by LayerNorm over N.

    Tiled for MXU / BlockSpec pipelining; inputs cast to bf16, accumulation f32.
    """
    M, K = x.shape
    _, N = w.shape
    fuse_ln = ln_gamma is not None

    tm, Mp = _pick_tile(M, 256, 8)
    tk, Kp = _pick_tile(K, 256, 128)
    if fuse_ln:
        tn, Np = N, N                       # LN needs the full row in one tile
    else:
        tn, Np = _pick_tile(N, 256, 128)

    xp = x if (Mp, Kp) == (M, K) else jnp.pad(x, ((0, Mp - M), (0, Kp - K)))
    wp = w if (Kp, Np) == (K, N) else jnp.pad(w, ((0, Kp - K), (0, Np - N)))
    bp = b.reshape(1, N)
    if Np != N:
        bp = jnp.pad(bp, ((0, 0), (0, Np - N)))
    if fuse_ln:
        g = ln_gamma.reshape(1, N).astype(jnp.float32)
        be = ln_beta.reshape(1, N).astype(jnp.float32)
    else:
        g = jnp.ones((1, Np), jnp.float32)
        be = jnp.zeros((1, Np), jnp.float32)

    kern = functools.partial(_matmul_kernel, fuse_ln=fuse_ln, ln_eps=ln_eps)
    out = pl.pallas_call(
        kern,
        out_shape=jax.ShapeDtypeStruct((Mp, Np), jnp.float32),
        grid=(Mp // tm, Np // tn, Kp // tk),
        in_specs=[
            pl.BlockSpec((tm, tk), lambda i, j, k: (i, k)),
            pl.BlockSpec((tk, tn), lambda i, j, k: (k, j)),
            pl.BlockSpec((1, tn), lambda i, j, k: (0, j)),
            pl.BlockSpec((1, tn), lambda i, j, k: (0, j)),
            pl.BlockSpec((1, tn), lambda i, j, k: (0, j)),
        ],
        out_specs=pl.BlockSpec((tm, tn), lambda i, j, k: (i, j)),
        scratch_shapes=[pltpu.VMEM((tm, tn), jnp.float32)],
        compiler_params=pltpu.CompilerParams(
            dimension_semantics=("parallel", "parallel", "arbitrary"),
            vmem_limit_bytes=_VMEM_LIMIT),
    )(xp.astype(jnp.bfloat16), wp.astype(jnp.bfloat16),
      bp.astype(jnp.float32), g, be)

    if (Mp, Np) != (M, N):
        out = out[:M, :N]
    return out


# ----------------------------------------------------------------------------
# Flash-style attention (online softmax, heads folded into lane-dense output)
# ----------------------------------------------------------------------------
def _flash_attn_kernel(q_ref, k_ref, v_ref, o_ref, m_sc, l_sc, acc_sc, *,
                       scale, nk_valid, tk, num_heads):
    ki = pl.program_id(2)

    @pl.when(ki == 0)
    def _():
        m_sc[...] = jnp.full_like(m_sc, -jnp.inf)
        l_sc[...] = jnp.zeros_like(l_sc)
        acc_sc[...] = jnp.zeros_like(acc_sc)

    q = q_ref[0]                                   # (nh, tq, D) bf16
    k = k_ref[0]                                   # (nh, tk, D) bf16
    v = v_ref[0]                                   # (nh, tk, D) bf16

    s = jnp.einsum("hqd,hkd->hqk", q, k,
                   preferred_element_type=jnp.float32) * scale
    if nk_valid % tk != 0:                         # static: mask only if padded
        col = jax.lax.broadcasted_iota(jnp.int32, s.shape, 2) + ki * tk
        s = jnp.where(col < nk_valid, s, -1e30)

    m_prev = m_sc[...]
    m_new = jnp.maximum(m_prev, jnp.max(s, axis=-1, keepdims=True))
    alpha = jnp.exp(m_prev - m_new)
    p = jnp.exp(s - m_new)
    l_sc[...] = alpha * l_sc[...] + jnp.sum(p, axis=-1, keepdims=True)
    acc_sc[...] = alpha * acc_sc[...] + jnp.einsum(
        "hqk,hkd->hqd", p.astype(v.dtype), v,
        preferred_element_type=jnp.float32)
    m_sc[...] = m_new

    @pl.when(ki == pl.num_programs(2) - 1)
    def _():
        inv_l = pl.reciprocal(l_sc[...], approx=True)      # (nh, tq, 1)
        outs = [(acc_sc[h] * inv_l[h]).astype(o_ref.dtype)
                for h in range(num_heads)]
        # heads folded into the last (lane) dim -> one lane-dense store.
        o_ref[0] = jnp.concatenate(outs, axis=-1)


def flash_attention(q, k, v, scale):
    """q: (B, nh, N, D); k, v: (B, nh, Nk, D) -> (B, N, nh*D)."""
    B, nh, N, D = q.shape
    Nk = k.shape[2]
    C = nh * D

    tq, Np = _pick_tile(N, 128, 8)
    tk_, Nkp = _pick_tile(Nk, 128, 8)
    if Np != N:
        q = jnp.pad(q, ((0, 0), (0, 0), (0, Np - N), (0, 0)))
    if Nkp != Nk:
        k = jnp.pad(k, ((0, 0), (0, 0), (0, Nkp - Nk), (0, 0)))
        v = jnp.pad(v, ((0, 0), (0, 0), (0, Nkp - Nk), (0, 0)))

    kern = functools.partial(_flash_attn_kernel, scale=scale, nk_valid=Nk,
                             tk=tk_, num_heads=nh)
    out = pl.pallas_call(
        kern,
        out_shape=jax.ShapeDtypeStruct((B, Np, C), jnp.float32),
        grid=(B, Np // tq, Nkp // tk_),
        in_specs=[
            pl.BlockSpec((1, nh, tq, D), lambda b, qi, ki: (b, 0, qi, 0)),
            pl.BlockSpec((1, nh, tk_, D), lambda b, qi, ki: (b, 0, ki, 0)),
            pl.BlockSpec((1, nh, tk_, D), lambda b, qi, ki: (b, 0, ki, 0)),
        ],
        out_specs=pl.BlockSpec((1, tq, C), lambda b, qi, ki: (b, qi, 0)),
        scratch_shapes=[pltpu.VMEM((nh, tq, 1), jnp.float32),
                        pltpu.VMEM((nh, tq, 1), jnp.float32),
                        pltpu.VMEM((nh, tq, D), jnp.float32)],
        compiler_params=pltpu.CompilerParams(
            dimension_semantics=("parallel", "parallel", "arbitrary"),
            vmem_limit_bytes=_VMEM_LIMIT),
    )(q.astype(jnp.bfloat16), k.astype(jnp.bfloat16), v.astype(jnp.bfloat16))

    if Np != N:
        out = out[:, :N, :]
    return out


# ----------------------------------------------------------------------------
# Attention module forward (matches the PyTorch PVT Attention)
# ----------------------------------------------------------------------------
def attention_forward(params, x, *, H, W, num_heads, sr_ratio):
    B, N, C = x.shape
    D = C // num_heads
    scale = D ** (-0.5)
    x2 = x.reshape(B * N, C)

    if sr_ratio > 1:
        q2 = matmul_bias(x2, params["q_w"], params["q_b"])          # (B*N, C)
        # sr Conv2d(kernel=stride=sr) == non-overlapping space-to-depth matmul.
        # Strided conv drops the remainder, so truncate like PyTorch would.
        Hs, Ws = H // sr_ratio, W // sr_ratio
        x_img = x.reshape(B, H, W, C)[:, :Hs * sr_ratio, :Ws * sr_ratio, :]
        xg = x_img.reshape(B, Hs, sr_ratio, Ws, sr_ratio, C)
        xg = jnp.transpose(xg, (0, 1, 3, 2, 4, 5))    # (B, Hs, Ws, sr, sr, C)
        Nk = Hs * Ws
        patches = xg.reshape(B * Nk, sr_ratio * sr_ratio * C)
        # sr conv matmul with the LayerNorm fused into its epilogue.
        x_ = matmul_bias(patches, params["sr_w"], params["sr_b"],
                         ln_gamma=params["norm_g"], ln_beta=params["norm_b"],
                         ln_eps=1e-5)
        kv2 = matmul_bias(x_, params["kv_w"], params["kv_b"])        # (B*Nk,2C)
    else:
        Nk = N
        # Shared input: merge q and kv projections into one matmul.
        qkv = matmul_bias(x2,
                          jnp.concatenate([params["q_w"], params["kv_w"]], 1),
                          jnp.concatenate([params["q_b"], params["kv_b"]], 0))
        q2 = qkv[:, :C]
        kv2 = qkv[:, C:]

    q4 = q2.reshape(B, N, num_heads, D).transpose(0, 2, 1, 3)       # (B,nh,N,D)
    kv5 = kv2.reshape(B, Nk, 2, num_heads, D)
    k4 = kv5[:, :, 0].transpose(0, 2, 1, 3)                          # (B,nh,Nk,D)
    v4 = kv5[:, :, 1].transpose(0, 2, 1, 3)

    # TODO(synk): attn_drop / proj_drop are identity (p=0 defaults / eval mode).
    o = flash_attention(q4, k4, v4, scale)                           # (B, N, C)
    o = matmul_bias(o.reshape(B * N, C), params["proj_w"], params["proj_b"])
    return o.reshape(B, N, C)


# ----------------------------------------------------------------------------
# Pure-JAX reference (same weight layout) for correctness checking
# ----------------------------------------------------------------------------
def reference_attention(params, x, *, H, W, num_heads, sr_ratio):
    B, N, C = x.shape
    D = C // num_heads
    scale = D ** (-0.5)
    q = x.reshape(B * N, C) @ params["q_w"] + params["q_b"]
    q = q.reshape(B, N, num_heads, D).transpose(0, 2, 1, 3)
    if sr_ratio > 1:
        Hs, Ws = H // sr_ratio, W // sr_ratio
        xg = x.reshape(B, H, W, C)[:, :Hs * sr_ratio, :Ws * sr_ratio, :]
        xg = xg.reshape(B, Hs, sr_ratio, Ws, sr_ratio, C)
        xg = jnp.transpose(xg, (0, 1, 3, 2, 4, 5)).reshape(
            B, Hs * Ws, sr_ratio * sr_ratio * C)
        x_ = xg @ params["sr_w"] + params["sr_b"]
        mu = x_.mean(-1, keepdims=True)
        var = ((x_ - mu) ** 2).mean(-1, keepdims=True)
        x_ = (x_ - mu) * jax.lax.rsqrt(var + 1e-5) * params["norm_g"] \
            + params["norm_b"]
        Nk = Hs * Ws
    else:
        x_ = x
        Nk = N
    kv = x_.reshape(-1, C) @ params["kv_w"] + params["kv_b"]
    kv = kv.reshape(B, Nk, 2, num_heads, D).transpose(2, 0, 3, 1, 4)
    k, v = kv[0], kv[1]
    attn = jnp.einsum("bhqd,bhkd->bhqk", q, k) * scale
    attn = jax.nn.softmax(attn, axis=-1)
    o = jnp.einsum("bhqk,bhkd->bhqd", attn, v)
    o = o.transpose(0, 2, 1, 3).reshape(B * N, C)
    o = o @ params["proj_w"] + params["proj_b"]
    return o.reshape(B, N, C)


# ----------------------------------------------------------------------------
# Deterministic synthetic parameters
# ----------------------------------------------------------------------------
def _normal(key, shape, scale=0.02):
    return scale * jax.random.normal(key, shape, jnp.float32)


def init_attention_params(key, dim, sr_ratio, qkv_bias=False):
    ks = jax.random.split(key, 6)
    p = {
        "q_w": _normal(ks[0], (dim, dim)),
        "q_b": jnp.zeros((dim,), jnp.float32),       # qkv_bias=False default
        "kv_w": _normal(ks[1], (dim, 2 * dim)),
        "kv_b": jnp.zeros((2 * dim,), jnp.float32),
        "proj_w": _normal(ks[2], (dim, dim)),
        "proj_b": _normal(ks[3], (dim,)),
    }
    del qkv_bias
    if sr_ratio > 1:
        p["sr_w"] = _normal(ks[4], (sr_ratio * sr_ratio * dim, dim))
        p["sr_b"] = _normal(ks[5], (dim,))
        p["norm_g"] = jnp.ones((dim,), jnp.float32)
        p["norm_b"] = jnp.zeros((dim,), jnp.float32)
    return p


# ----------------------------------------------------------------------------
if __name__ == "__main__":
    key = jax.random.PRNGKey(0)
    configs = [
        dict(B=2, dim=64, num_heads=2, H=16, W=16, sr_ratio=2),   # sr path
        dict(B=2, dim=64, num_heads=4, H=8, W=8, sr_ratio=1),     # merged qkv
    ]
    for cfg in configs:
        key, kx, kp = jax.random.split(key, 3)
        B, dim, H, W = cfg["B"], cfg["dim"], cfg["H"], cfg["W"]
        N = H * W
        x = jax.random.normal(kx, (B, N, dim), jnp.float32)
        params = init_attention_params(kp, dim, cfg["sr_ratio"])

        fwd = jax.jit(functools.partial(
            attention_forward, H=H, W=W,
            num_heads=cfg["num_heads"], sr_ratio=cfg["sr_ratio"]))
        out = jax.block_until_ready(fwd(params, x))

        assert out.shape == (B, N, dim), out.shape
        assert bool(jnp.all(jnp.isfinite(out)))

        ref = reference_attention(params, x, H=H, W=W,
                                  num_heads=cfg["num_heads"],
                                  sr_ratio=cfg["sr_ratio"])
        rel = float(jnp.max(jnp.abs(out - ref)) /
                    (jnp.max(jnp.abs(ref)) + 1e-9))
        assert rel < 0.08, f"relative error too large: {rel}"

    print("KERNEL_OK")
</pallas_src>

<mosaic_0001>
module attributes {stable_mosaic.version = 11 : i64} {
  func.func @_matmul_kernel(%arg0: i32, %arg1: i32, %arg2: i32, %arg3: memref<128x256xbf16, #tpu.memory_space<vmem>>, %arg4: memref<256x64xbf16, #tpu.memory_space<vmem>>, %arg5: memref<1x64xf32, #tpu.memory_space<vmem>>, %arg6: memref<1x64xf32, #tpu.memory_space<vmem>>, %arg7: memref<1x64xf32, #tpu.memory_space<vmem>>, %arg8: memref<128x64xf32, #tpu.memory_space<vmem>>, %arg9: memref<128x64xf32, #tpu.memory_space<vmem>>) attributes {dimension_semantics = [#tpu.dimension_semantics<parallel>, #tpu.dimension_semantics<parallel>, #tpu.dimension_semantics<arbitrary>], iteration_bounds = array<i64: 1, 1, 1>, scalar_prefetch = 0 : i64, scratch_operands = 1 : i64, tpu.core_type = #tpu.core_type<tc>, window_params = [{transform_indices = @transform_0, window_bounds = array<i64: 128, 256>}, {transform_indices = @transform_1, window_bounds = array<i64: 256, 64>}, {transform_indices = @transform_2, window_bounds = array<i64: 1, 64>}, {transform_indices = @transform_3, window_bounds = array<i64: 1, 64>}, {transform_indices = @transform_4, window_bounds = array<i64: 1, 64>}, {transform_indices = @transform_5, window_bounds = array<i64: 128, 64>}]} {
    %c0_i32 = arith.constant 0 : i32
    %0 = arith.cmpi eq, %arg2, %c0_i32 : i32
    %1 = arith.extui %0 : i1 to i32
    %c0_i32_0 = arith.constant 0 : i32
    %2 = arith.cmpi ne, %1, %c0_i32_0 : i32
    scf.if %2 {
      %cst_10 = arith.constant 0.000000e+00 : f32
      %12 = vector.broadcast %cst_10 : f32 to vector<128x64xf32>
      %c0_11 = arith.constant 0 : index
      %c0_12 = arith.constant 0 : index
      %13 = vector.load %arg9[%c0_11, %c0_12] : memref<128x64xf32, #tpu.memory_space<vmem>>, vector<128x64xf32>
      tpu.vector_store %arg9[%c0_11, %c0_12], %12 {strides = array<i32>} : memref<128x64xf32, #tpu.memory_space<vmem>>, vector<128x64xf32>,
    } else {
    }
    %c0 = arith.constant 0 : index
    %c0_1 = arith.constant 0 : index
    %3 = vector.load %arg9[%c0, %c0_1] : memref<128x64xf32, #tpu.memory_space<vmem>>, vector<128x64xf32>
    %c0_2 = arith.constant 0 : index
    %c0_3 = arith.constant 0 : index
    %4 = vector.load %arg3[%c0_2, %c0_3] : memref<128x256xbf16, #tpu.memory_space<vmem>>, vector<128x256xbf16>
    %c0_4 = arith.constant 0 : index
    %c0_5 = arith.constant 0 : index
    %5 = vector.load %arg4[%c0_4, %c0_5] : memref<256x64xbf16, #tpu.memory_space<vmem>>, vector<256x64xbf16>
    %cst = arith.constant dense<0.000000e+00> : vector<128x64xf32>
    %6 = tpu.matmul %4, %5, %cst {dimension_numbers = #tpu.dot_dimension_numbers<[1], [0], [0], [1], [0, 0, 1, 1], [], []>} : vector<128x256xbf16>, vector<256x64xbf16>, vector<128x64xf32> -> vector<128x64xf32>
    %7 = arith.addf %3, %6 : vector<128x64xf32>
    %c0_6 = arith.constant 0 : index
    %c0_7 = arith.constant 0 : index
    %8 = vector.load %arg9[%c0_6, %c0_7] : memref<128x64xf32, #tpu.memory_space<vmem>>, vector<128x64xf32>
    tpu.vector_store %arg9[%c0_6, %c0_7], %7 {strides = array<i32>} : memref<128x64xf32, #tpu.memory_space<vmem>>, vector<128x64xf32>,
    %c0_i32_8 = arith.constant 0 : i32
    %9 = arith.cmpi eq, %arg2, %c0_i32_8 : i32
    %10 = arith.extui %9 : i1 to i32
    %c0_i32_9 = arith.constant 0 : i32
    %11 = arith.cmpi ne, %10, %c0_i32_9 : i32
    scf.if %11 {
      %c0_10 = arith.constant 0 : index
      %c0_11 = arith.constant 0 : index
      %12 = vector.load %arg9[%c0_10, %c0_11] : memref<128x64xf32, #tpu.memory_space<vmem>>, vector<128x64xf32>
      %c0_12 = arith.constant 0 : index
      %c0_13 = arith.constant 0 : index
      %13 = vector.load %arg5[%c0_12, %c0_13] : memref<1x64xf32, #tpu.memory_space<vmem>>, vector<1x64xf32>
      %14 = vector.broadcast %13 : vector<1x64xf32> to vector<128x64xf32>
      %15 = arith.addf %12, %14 : vector<128x64xf32>
      %cst_14 = arith.constant dense<0.000000e+00> : vector<128xf32>
      %16 = vector.multi_reduction <add>, %15, %cst_14 [1] : vector<128x64xf32> to vector<128xf32>
      %17 = vector.shape_cast %16 : vector<128xf32> to vector<128x1xf32>
      %cst_15 = arith.constant 6.400000e+01 : f32
      %18 = vector.broadcast %cst_15 : f32 to vector<128x1xf32>
      %19 = arith.divf %17, %18 : vector<128x1xf32>
      %20 = vector.broadcast %19 : vector<128x1xf32> to vector<128x64xf32>
      %21 = arith.subf %15, %20 : vector<128x64xf32>
      %22 = arith.mulf %21, %21 : vector<128x64xf32>
      %cst_16 = arith.constant dense<0.000000e+00> : vector<128xf32>
      %23 = vector.multi_reduction <add>, %22, %cst_16 [1] : vector<128x64xf32> to vector<128xf32>
      %24 = vector.shape_cast %23 : vector<128xf32> to vector<128x1xf32>
      %cst_17 = arith.constant 6.400000e+01 : f32
      %25 = vector.broadcast %cst_17 : f32 to vector<128x1xf32>
      %26 = arith.divf %24, %25 : vector<128x1xf32>
      %cst_18 = arith.constant 9.99999974E-6 : f32
      %27 = vector.broadcast %cst_18 : f32 to vector<128x1xf32>
      %28 = arith.addf %26, %27 : vector<128x1xf32>
      %29 = math.rsqrt %28 : vector<128x1xf32>
      %30 = vector.broadcast %29 : vector<128x1xf32> to vector<128x64xf32>
      %31 = arith.mulf %21, %30 : vector<128x64xf32>
      %c0_19 = arith.constant 0 : index
      %c0_20 = arith.constant 0 : index
      %32 = vector.load %arg6[%c0_19, %c0_20] : memref<1x64xf32, #tpu.memory_space<vmem>>, vector<1x64xf32>
      %33 = vector.broadcast %32 : vector<1x64xf32> to vector<128x64xf32>
      %34 = arith.mulf %31, %33 : vector<128x64xf32>
      %c0_21 = arith.constant 0 : index
      %c0_22 = arith.constant 0 : index
      %35 = vector.load %arg7[%c0_21, %c0_22] : memref<1x64xf32, #tpu.memory_space<vmem>>, vector<1x64xf32>
      %36 = vector.broadcast %35 : vector<1x64xf32> to vector<128x64xf32>
      %37 = arith.addf %34, %36 : vector<128x64xf32>
      %c0_23 = arith.constant 0 : index
      %c0_24 = arith.constant 0 : index
      %38 = vector.load %arg8[%c0_23, %c0_24] : memref<128x64xf32, #tpu.memory_space<vmem>>, vector<128x64xf32>
      tpu.vector_store %arg8[%c0_23, %c0_24], %37 {strides = array<i32>} : memref<128x64xf32, #tpu.memory_space<vmem>>, vector<128x64xf32>,
    } else {
    }
    return
  }
  func.func @transform_0(%arg0: i32, %arg1: i32, %arg2: i32) -> (i32, i32) {
    %c0_i32 = arith.constant 0 : i32
    return %arg0, %arg2 : i32, i32
  }
  func.func @transform_1(%arg0: i32, %arg1: i32, %arg2: i32) -> (i32, i32) {
    %c0_i32 = arith.constant 0 : i32
    return %arg2, %arg1 : i32, i32
  }
  func.func @transform_2(%arg0: i32, %arg1: i32, %arg2: i32) -> (i32, i32) {
    %c0_i32 = arith.constant 0 : i32
    %c0_i32_0 = arith.constant 0 : i32
    return %c0_i32, %arg1 : i32, i32
  }
  func.func @transform_3(%arg0: i32, %arg1: i32, %arg2: i32) -> (i32, i32) {
    %c0_i32 = arith.constant 0 : i32
    %c0_i32_0 = arith.constant 0 : i32
    return %c0_i32, %arg1 : i32, i32
  }
  func.func @transform_4(%arg0: i32, %arg1: i32, %arg2: i32) -> (i32, i32) {
    %c0_i32 = arith.constant 0 : i32
    %c0_i32_0 = arith.constant 0 : i32
    return %c0_i32, %arg1 : i32, i32
  }
  func.func @transform_5(%arg0: i32, %arg1: i32, %arg2: i32) -> (i32, i32) {
    %c0_i32 = arith.constant 0 : i32
    return %arg0, %arg1 : i32, i32
  }
}

module attributes {stable_mosaic.version = 11 : i64} {
  func.func @_matmul_kernel(%arg0: i32, %arg1: i32, %arg2: i32, %arg3: memref<128x128xbf16, #tpu.memory_space<vmem>>, %arg4: memref<128x128xbf16, #tpu.memory_space<vmem>>, %arg5: memref<1x128xf32, #tpu.memory_space<vmem>>, %arg6: memref<1x128xf32, #tpu.memory_space<vmem>>, %arg7: memref<1x128xf32, #tpu.memory_space<vmem>>, %arg8: memref<128x128xf32, #tpu.memory_space<vmem>>, %arg9: memref<128x128xf32, #tpu.memory_space<vmem>>) attributes {dimension_semantics = [#tpu.dimension_semantics<parallel>, #tpu.dimension_semantics<parallel>, #tpu.dimension_semantics<arbitrary>], iteration_bounds = array<i64: 1, 1, 1>, scalar_prefetch = 0 : i64, scratch_operands = 1 : i64, tpu.core_type = #tpu.core_type<tc>, window_params = [{transform_indices = @transform_0, window_bounds = array<i64: 128, 128>}, {transform_indices = @transform_1, window_bounds = array<i64: 128, 128>}, {transform_indices = @transform_2, window_bounds = array<i64: 1, 128>}, {transform_indices = @transform_3, window_bounds = array<i64: 1, 128>}, {transform_indices = @transform_4, window_bounds = array<i64: 1, 128>}, {transform_indices = @transform_5, window_bounds = array<i64: 128, 128>}]} {
    %c0_i32 = arith.constant 0 : i32
    %0 = arith.cmpi eq, %arg2, %c0_i32 : i32
    %1 = arith.extui %0 : i1 to i32
    %c0_i32_0 = arith.constant 0 : i32
    %2 = arith.cmpi ne, %1, %c0_i32_0 : i32
    scf.if %2 {
      %cst_10 = arith.constant 0.000000e+00 : f32
      %12 = vector.broadcast %cst_10 : f32 to vector<128x128xf32>
      %c0_11 = arith.constant 0 : index
      %c0_12 = arith.constant 0 : index
      %13 = vector.load %arg9[%c0_11, %c0_12] : memref<128x128xf32, #tpu.memory_space<vmem>>, vector<128x128xf32>
      tpu.vector_store %arg9[%c0_11, %c0_12], %12 {strides = array<i32>} : memref<128x128xf32, #tpu.memory_space<vmem>>, vector<128x128xf32>,
    } else {
    }
    %c0 = arith.constant 0 : index
    %c0_1 = arith.constant 0 : index
    %3 = vector.load %arg9[%c0, %c0_1] : memref<128x128xf32, #tpu.memory_space<vmem>>, vector<128x128xf32>
    %c0_2 = arith.constant 0 : index
    %c0_3 = arith.constant 0 : index
    %4 = vector.load %arg3[%c0_2, %c0_3] : memref<128x128xbf16, #tpu.memory_space<vmem>>, vector<128x128xbf16>
    %c0_4 = arith.constant 0 : index
    %c0_5 = arith.constant 0 : index
    %5 = vector.load %arg4[%c0_4, %c0_5] : memref<128x128xbf16, #tpu.memory_space<vmem>>, vector<128x128xbf16>
    %cst = arith.constant dense<0.000000e+00> : vector<128x128xf32>
    %6 = tpu.matmul %4, %5, %cst {dimension_numbers = #tpu.dot_dimension_numbers<[1], [0], [0], [1], [0, 0, 1, 1], [], []>} : vector<128x128xbf16>, vector<128x128xbf16>, vector<128x128xf32> -> vector<128x128xf32>
    %7 = arith.addf %3, %6 : vector<128x128xf32>
    %c0_6 = arith.constant 0 : index
    %c0_7 = arith.constant 0 : index
    %8 = vector.load %arg9[%c0_6, %c0_7] : memref<128x128xf32, #tpu.memory_space<vmem>>, vector<128x128xf32>
    tpu.vector_store %arg9[%c0_6, %c0_7], %7 {strides = array<i32>} : memref<128x128xf32, #tpu.memory_space<vmem>>, vector<128x128xf32>,
    %c0_i32_8 = arith.constant 0 : i32
    %9 = arith.cmpi eq, %arg2, %c0_i32_8 : i32
    %10 = arith.extui %9 : i1 to i32
    %c0_i32_9 = arith.constant 0 : i32
    %11 = arith.cmpi ne, %10, %c0_i32_9 : i32
    scf.if %11 {
      %c0_10 = arith.constant 0 : index
      %c0_11 = arith.constant 0 : index
      %12 = vector.load %arg9[%c0_10, %c0_11] : memref<128x128xf32, #tpu.memory_space<vmem>>, vector<128x128xf32>
      %c0_12 = arith.constant 0 : index
      %c0_13 = arith.constant 0 : index
      %13 = vector.load %arg5[%c0_12, %c0_13] : memref<1x128xf32, #tpu.memory_space<vmem>>, vector<1x128xf32>
      %14 = vector.broadcast %13 : vector<1x128xf32> to vector<128x128xf32>
      %15 = arith.addf %12, %14 : vector<128x128xf32>
      %c0_14 = arith.constant 0 : index
      %c0_15 = arith.constant 0 : index
      %16 = vector.load %arg8[%c0_14, %c0_15] : memref<128x128xf32, #tpu.memory_space<vmem>>, vector<128x128xf32>
      tpu.vector_store %arg8[%c0_14, %c0_15], %15 {strides = array<i32>} : memref<128x128xf32, #tpu.memory_space<vmem>>, vector<128x128xf32>,
    } else {
    }
    return
  }
  func.func @transform_0(%arg0: i32, %arg1: i32, %arg2: i32) -> (i32, i32) {
    %c0_i32 = arith.constant 0 : i32
    return %arg0, %arg2 : i32, i32
  }
  func.func @transform_1(%arg0: i32, %arg1: i32, %arg2: i32) -> (i32, i32) {
    %c0_i32 = arith.constant 0 : i32
    return %arg2, %arg1 : i32, i32
  }
  func.func @transform_2(%arg0: i32, %arg1: i32, %arg2: i32) -> (i32, i32) {
    %c0_i32 = arith.constant 0 : i32
    %c0_i32_0 = arith.constant 0 : i32
    return %c0_i32, %arg1 : i32, i32
  }
  func.func @transform_3(%arg0: i32, %arg1: i32, %arg2: i32) -> (i32, i32) {
    %c0_i32 = arith.constant 0 : i32
    %c0_i32_0 = arith.constant 0 : i32
    return %c0_i32, %arg1 : i32, i32
  }
  func.func @transform_4(%arg0: i32, %arg1: i32, %arg2: i32) -> (i32, i32) {
    %c0_i32 = arith.constant 0 : i32
    %c0_i32_0 = arith.constant 0 : i32
    return %c0_i32, %arg1 : i32, i32
  }
  func.func @transform_5(%arg0: i32, %arg1: i32, %arg2: i32) -> (i32, i32) {
    %c0_i32 = arith.constant 0 : i32
    return %arg0, %arg1 : i32, i32
  }
}

module attributes {stable_mosaic.version = 11 : i64} {
  func.func @_matmul_kernel(%arg0: i32, %arg1: i32, %arg2: i32, %arg3: memref<256x128xbf16, #tpu.memory_space<vmem>>, %arg4: memref<128x128xbf16, #tpu.memory_space<vmem>>, %arg5: memref<1x128xf32, #tpu.memory_space<vmem>>, %arg6: memref<1x128xf32, #tpu.memory_space<vmem>>, %arg7: memref<1x128xf32, #tpu.memory_space<vmem>>, %arg8: memref<256x128xf32, #tpu.memory_space<vmem>>, %arg9: memref<256x128xf32, #tpu.memory_space<vmem>>) attributes {dimension_semantics = [#tpu.dimension_semantics<parallel>, #tpu.dimension_semantics<parallel>, #tpu.dimension_semantics<arbitrary>], iteration_bounds = array<i64: 2, 1, 1>, scalar_prefetch = 0 : i64, scratch_operands = 1 : i64, tpu.core_type = #tpu.core_type<tc>, window_params = [{transform_indices = @transform_0, window_bounds = array<i64: 256, 128>}, {transform_indices = @transform_1, window_bounds = array<i64: 128, 128>}, {transform_indices = @transform_2, window_bounds = array<i64: 1, 128>}, {transform_indices = @transform_3, window_bounds = array<i64: 1, 128>}, {transform_indices = @transform_4, window_bounds = array<i64: 1, 128>}, {transform_indices = @transform_5, window_bounds = array<i64: 256, 128>}]} {
    %c0_i32 = arith.constant 0 : i32
    %0 = arith.cmpi eq, %arg2, %c0_i32 : i32
    %1 = arith.extui %0 : i1 to i32
    %c0_i32_0 = arith.constant 0 : i32
    %2 = arith.cmpi ne, %1, %c0_i32_0 : i32
    scf.if %2 {
      %cst_10 = arith.constant 0.000000e+00 : f32
      %12 = vector.broadcast %cst_10 : f32 to vector<256x128xf32>
      %c0_11 = arith.constant 0 : index
      %c0_12 = arith.constant 0 : index
      %13 = vector.load %arg9[%c0_11, %c0_12] : memref<256x128xf32, #tpu.memory_space<vmem>>, vector<256x128xf32>
      tpu.vector_store %arg9[%c0_11, %c0_12], %12 {strides = array<i32>} : memref<256x128xf32, #tpu.memory_space<vmem>>, vector<256x128xf32>,
    } else {
    }
    %c0 = arith.constant 0 : index
    %c0_1 = arith.constant 0 : index
    %3 = vector.load %arg9[%c0, %c0_1] : memref<256x128xf32, #tpu.memory_space<vmem>>, vector<256x128xf32>
    %c0_2 = arith.constant 0 : index
    %c0_3 = arith.constant 0 : index
    %4 = vector.load %arg3[%c0_2, %c0_3] : memref<256x128xbf16, #tpu.memory_space<vmem>>, vector<256x128xbf16>
    %c0_4 = arith.constant 0 : index
    %c0_5 = arith.constant 0 : index
    %5 = vector.load %arg4[%c0_4, %c0_5] : memref<128x128xbf16, #tpu.memory_space<vmem>>, vector<128x128xbf16>
    %cst = arith.constant dense<0.000000e+00> : vector<256x128xf32>
    %6 = tpu.matmul %4, %5, %cst {dimension_numbers = #tpu.dot_dimension_numbers<[1], [0], [0], [1], [0, 0, 1, 1], [], []>} : vector<256x128xbf16>, vector<128x128xbf16>, vector<256x128xf32> -> vector<256x128xf32>
    %7 = arith.addf %3, %6 : vector<256x128xf32>
    %c0_6 = arith.constant 0 : index
    %c0_7 = arith.constant 0 : index
    %8 = vector.load %arg9[%c0_6, %c0_7] : memref<256x128xf32, #tpu.memory_space<vmem>>, vector<256x128xf32>
    tpu.vector_store %arg9[%c0_6, %c0_7], %7 {strides = array<i32>} : memref<256x128xf32, #tpu.memory_space<vmem>>, vector<256x128xf32>,
    %c0_i32_8 = arith.constant 0 : i32
    %9 = arith.cmpi eq, %arg2, %c0_i32_8 : i32
    %10 = arith.extui %9 : i1 to i32
    %c0_i32_9 = arith.constant 0 : i32
    %11 = arith.cmpi ne, %10, %c0_i32_9 : i32
    scf.if %11 {
      %c0_10 = arith.constant 0 : index
      %c0_11 = arith.constant 0 : index
      %12 = vector.load %arg9[%c0_10, %c0_11] : memref<256x128xf32, #tpu.memory_space<vmem>>, vector<256x128xf32>
      %c0_12 = arith.constant 0 : index
      %c0_13 = arith.constant 0 : index
      %13 = vector.load %arg5[%c0_12, %c0_13] : memref<1x128xf32, #tpu.memory_space<vmem>>, vector<1x128xf32>
      %14 = vector.broadcast %13 : vector<1x128xf32> to vector<256x128xf32>
      %15 = arith.addf %12, %14 : vector<256x128xf32>
      %c0_14 = arith.constant 0 : index
      %c0_15 = arith.constant 0 : index
      %16 = vector.load %arg8[%c0_14, %c0_15] : memref<256x128xf32, #tpu.memory_space<vmem>>, vector<256x128xf32>
      tpu.vector_store %arg8[%c0_14, %c0_15], %15 {strides = array<i32>} : memref<256x128xf32, #tpu.memory_space<vmem>>, vector<256x128xf32>,
    } else {
    }
    return
  }
  func.func @transform_0(%arg0: i32, %arg1: i32, %arg2: i32) -> (i32, i32) {
    %c0_i32 = arith.constant 0 : i32
    return %arg0, %arg2 : i32, i32
  }
  func.func @transform_1(%arg0: i32, %arg1: i32, %arg2: i32) -> (i32, i32) {
    %c0_i32 = arith.constant 0 : i32
    return %arg2, %arg1 : i32, i32
  }
  func.func @transform_2(%arg0: i32, %arg1: i32, %arg2: i32) -> (i32, i32) {
    %c0_i32 = arith.constant 0 : i32
    %c0_i32_0 = arith.constant 0 : i32
    return %c0_i32, %arg1 : i32, i32
  }
  func.func @transform_3(%arg0: i32, %arg1: i32, %arg2: i32) -> (i32, i32) {
    %c0_i32 = arith.constant 0 : i32
    %c0_i32_0 = arith.constant 0 : i32
    return %c0_i32, %arg1 : i32, i32
  }
  func.func @transform_4(%arg0: i32, %arg1: i32, %arg2: i32) -> (i32, i32) {
    %c0_i32 = arith.constant 0 : i32
    %c0_i32_0 = arith.constant 0 : i32
    return %c0_i32, %arg1 : i32, i32
  }
  func.func @transform_5(%arg0: i32, %arg1: i32, %arg2: i32) -> (i32, i32) {
    %c0_i32 = arith.constant 0 : i32
    return %arg0, %arg1 : i32, i32
  }
}

module attributes {stable_mosaic.version = 11 : i64} {
  func.func @_flash_attn_kernel(%arg0: i32, %arg1: i32, %arg2: i32, %arg3: memref<1x2x128x32xbf16, #tpu.memory_space<vmem>>, %arg4: memref<1x2x64x32xbf16, #tpu.memory_space<vmem>>, %arg5: memref<1x2x64x32xbf16, #tpu.memory_space<vmem>>, %arg6: memref<1x128x64xf32, #tpu.memory_space<vmem>>, %arg7: memref<2x128x1xf32, #tpu.memory_space<vmem>>, %arg8: memref<2x128x1xf32, #tpu.memory_space<vmem>>, %arg9: memref<2x128x32xf32, #tpu.memory_space<vmem>>) attributes {dimension_semantics = [#tpu.dimension_semantics<parallel>, #tpu.dimension_semantics<parallel>, #tpu.dimension_semantics<arbitrary>], iteration_bounds = array<i64: 2, 2, 1>, scalar_prefetch = 0 : i64, scratch_operands = 3 : i64, tpu.core_type = #tpu.core_type<tc>, window_params = [{transform_indices = @transform_0, window_bounds = array<i64: 1, 2, 128, 32>}, {transform_indices = @transform_1, window_bounds = array<i64: 1, 2, 64, 32>}, {transform_indices = @transform_2, window_bounds = array<i64: 1, 2, 64, 32>}, {transform_indices = @transform_3, window_bounds = array<i64: 1, 128, 64>}]} {
    %c0_i32 = arith.constant 0 : i32
    %0 = arith.cmpi eq, %arg2, %c0_i32 : i32
    %1 = arith.extui %0 : i1 to i32
    %c0_i32_0 = arith.constant 0 : i32
    %2 = arith.cmpi ne, %1, %c0_i32_0 : i32
    scf.if %2 {
      %cst_36 = arith.constant 0xFF800000 : f32
      %38 = vector.broadcast %cst_36 : f32 to vector<2x128x1xf32>
      %c0_37 = arith.constant 0 : index
      %c0_38 = arith.constant 0 : index
      %c0_39 = arith.constant 0 : index
      %39 = vector.load %arg7[%c0_37, %c0_38, %c0_39] : memref<2x128x1xf32, #tpu.memory_space<vmem>>, vector<2x128x1xf32>
      tpu.vector_store %arg7[%c0_37, %c0_38, %c0_39], %38 {strides = array<i32>} : memref<2x128x1xf32, #tpu.memory_space<vmem>>, vector<2x128x1xf32>,
      %cst_40 = arith.constant 0.000000e+00 : f32
      %40 = vector.broadcast %cst_40 : f32 to vector<2x128x1xf32>
      %c0_41 = arith.constant 0 : index
      %c0_42 = arith.constant 0 : index
      %c0_43 = arith.constant 0 : index
      %41 = vector.load %arg8[%c0_41, %c0_42, %c0_43] : memref<2x128x1xf32, #tpu.memory_space<vmem>>, vector<2x128x1xf32>
      tpu.vector_store %arg8[%c0_41, %c0_42, %c0_43], %40 {strides = array<i32>} : memref<2x128x1xf32, #tpu.memory_space<vmem>>, vector<2x128x1xf32>,
      %cst_44 = arith.constant 0.000000e+00 : f32
      %42 = vector.broadcast %cst_44 : f32 to vector<2x128x32xf32>
      %c0_45 = arith.constant 0 : index
      %c0_46 = arith.constant 0 : index
      %c0_47 = arith.constant 0 : index
      %43 = vector.load %arg9[%c0_45, %c0_46, %c0_47] : memref<2x128x32xf32, #tpu.memory_space<vmem>>, vector<2x128x32xf32>
      tpu.vector_store %arg9[%c0_45, %c0_46, %c0_47], %42 {strides = array<i32>} : memref<2x128x32xf32, #tpu.memory_space<vmem>>, vector<2x128x32xf32>,
    } else {
    }
    %c0 = arith.constant 0 : index
    %c0_1 = arith.constant 0 : index
    %c0_2 = arith.constant 0 : index
    %c0_3 = arith.constant 0 : index
    %3 = vector.load %arg3[%c0, %c0_1, %c0_2, %c0_3] : memref<1x2x128x32xbf16, #tpu.memory_space<vmem>>, vector<1x2x128x32xbf16>
    %4 = vector.shape_cast %3 : vector<1x2x128x32xbf16> to vector<2x128x32xbf16>
    %c0_4 = arith.constant 0 : index
    %c0_5 = arith.constant 0 : index
    %c0_6 = arith.constant 0 : index
    %c0_7 = arith.constant 0 : index
    %5 = vector.load %arg4[%c0_4, %c0_5, %c0_6, %c0_7] : memref<1x2x64x32xbf16, #tpu.memory_space<vmem>>, vector<1x2x64x32xbf16>
    %6 = vector.shape_cast %5 : vector<1x2x64x32xbf16> to vector<2x64x32xbf16>
    %c0_8 = arith.constant 0 : index
    %c0_9 = arith.constant 0 : index
    %c0_10 = arith.constant 0 : index
    %c0_11 = arith.constant 0 : index
    %7 = vector.load %arg5[%c0_8, %c0_9, %c0_10, %c0_11] : memref<1x2x64x32xbf16, #tpu.memory_space<vmem>>, vector<1x2x64x32xbf16>
    %8 = vector.shape_cast %7 : vector<1x2x64x32xbf16> to vector<2x64x32xbf16>
    "tpu.trace_start"() <{level = 10 : i32, message = "hqd,hkd->hqk"}> : () -> ()
    %cst = arith.constant dense<0.000000e+00> : vector<2x128x64xf32>
    %9 = tpu.matmul %4, %6, %cst {dimension_numbers = #tpu.dot_dimension_numbers<[2], [2], [1], [1], [0, 0, 0, 1, 1, 1], [0], [0]>} : vector<2x128x32xbf16>, vector<2x64x32xbf16>, vector<2x128x64xf32> -> vector<2x128x64xf32>
    "tpu.trace_stop"() : () -> ()
    %cst_12 = arith.constant 0.176776692 : f32
    %10 = vector.broadcast %cst_12 : f32 to vector<2x128x64xf32>
    %11 = arith.mulf %9, %10 : vector<2x128x64xf32>
    %c0_13 = arith.constant 0 : index
    %c0_14 = arith.constant 0 : index
    %c0_15 = arith.constant 0 : index
    %12 = vector.load %arg7[%c0_13, %c0_14, %c0_15] : memref<2x128x1xf32, #tpu.memory_space<vmem>>, vector<2x128x1xf32>
    %cst_16 = arith.constant dense<0xFF800000> : vector<2x128xf32>
    %13 = vector.multi_reduction <maximumf>, %11, %cst_16 [2] : vector<2x128x64xf32> to vector<2x128xf32>
    %14 = vector.shape_cast %13 : vector<2x128xf32> to vector<2x128x1xf32>
    %15 = arith.maximumf %12, %14 : vector<2x128x1xf32>
    %16 = arith.subf %12, %15 : vector<2x128x1xf32>
    %17 = math.exp %16 : vector<2x128x1xf32>
    %18 = vector.broadcast %15 : vector<2x128x1xf32> to vector<2x128x64xf32>
    %19 = arith.subf %11, %18 : vector<2x128x64xf32>
    %20 = math.exp %19 : vector<2x128x64xf32>
    %c0_17 = arith.constant 0 : index
    %c0_18 = arith.constant 0 : index
    %c0_19 = arith.constant 0 : index
    %21 = vector.load %arg8[%c0_17, %c0_18, %c0_19] : memref<2x128x1xf32, #tpu.memory_space<vmem>>, vector<2x128x1xf32>
    %22 = arith.mulf %17, %21 : vector<2x128x1xf32>
    %cst_20 = arith.constant dense<0.000000e+00> : vector<2x128xf32>
    %23 = vector.multi_reduction <add>, %20, %cst_20 [2] : vector<2x128x64xf32> to vector<2x128xf32>
    %24 = vector.shape_cast %23 : vector<2x128xf32> to vector<2x128x1xf32>
    %25 = arith.addf %22, %24 : vector<2x128x1xf32>
    %c0_21 = arith.constant 0 : index
    %c0_22 = arith.constant 0 : index
    %c0_23 = arith.constant 0 : index
    %26 = vector.load %arg8[%c0_21, %c0_22, %c0_23] : memref<2x128x1xf32, #tpu.memory_space<vmem>>, vector<2x128x1xf32>
    tpu.vector_store %arg8[%c0_21, %c0_22, %c0_23], %25 {strides = array<i32>} : memref<2x128x1xf32, #tpu.memory_space<vmem>>, vector<2x128x1xf32>,
    %c0_24 = arith.constant 0 : index
    %c0_25 = arith.constant 0 : index
    %c0_26 = arith.constant 0 : index
    %27 = vector.load %arg9[%c0_24, %c0_25, %c0_26] : memref<2x128x32xf32, #tpu.memory_space<vmem>>, vector<2x128x32xf32>
    %28 = vector.broadcast %17 : vector<2x128x1xf32> to vector<2x128x32xf32>
    %29 = arith.mulf %28, %27 : vector<2x128x32xf32>
    %30 = arith.truncf %20 : vector<2x128x64xf32> to vector<2x128x64xbf16>
    "tpu.trace_start"() <{level = 10 : i32, message = "hqk,hkd->hqd"}> : () -> ()
    %cst_27 = arith.constant dense<0.000000e+00> : vector<2x128x32xf32>
    %31 = tpu.matmul %30, %8, %cst_27 {dimension_numbers = #tpu.dot_dimension_numbers<[2], [1], [1], [2], [0, 0, 0, 1, 1, 2], [0], [0]>} : vector<2x128x64xbf16>, vector<2x64x32xbf16>, vector<2x128x32xf32> -> vector<2x128x32xf32>
    "tpu.trace_stop"() : () -> ()
    %32 = arith.addf %29, %31 : vector<2x128x32xf32>
    %c0_28 = arith.constant 0 : index
    %c0_29 = arith.constant 0 : index
    %c0_30 = arith.constant 0 : index
    %33 = vector.load %arg9[%c0_28, %c0_29, %c0_30] : memref<2x128x32xf32, #tpu.memory_space<vmem>>, vector<2x128x32xf32>
    tpu.vector_store %arg9[%c0_28, %c0_29, %c0_30], %32 {strides = array<i32>} : memref<2x128x32xf32, #tpu.memory_space<vmem>>, vector<2x128x32xf32>,
    %c0_31 = arith.constant 0 : index
    %c0_32 = arith.constant 0 : index
    %c0_33 = arith.constant 0 : index
    %34 = vector.load %arg7[%c0_31, %c0_32, %c0_33] : memref<2x128x1xf32, #tpu.memory_space<vmem>>, vector<2x128x1xf32>
    tpu.vector_store %arg7[%c0_31, %c0_32, %c0_33], %15 {strides = array<i32>} : memref<2x128x1xf32, #tpu.memory_space<vmem>>, vector<2x128x1xf32>,
    %c0_i32_34 = arith.constant 0 : i32
    %35 = arith.cmpi eq, %arg2, %c0_i32_34 : i32
    %36 = arith.extui %35 : i1 to i32
    %c0_i32_35 = arith.constant 0 : i32
    %37 = arith.cmpi ne, %36, %c0_i32_35 : i32
    scf.if %37 {
      %c0_36 = arith.constant 0 : index
      %c0_37 = arith.constant 0 : index
      %c0_38 = arith.constant 0 : index
      %38 = vector.load %arg8[%c0_36, %c0_37, %c0_38] : memref<2x128x1xf32, #tpu.memory_space<vmem>>, vector<2x128x1xf32>
      %39 = tpu.reciprocal %38 {approx = true} : vector<2x128x1xf32> -> vector<2x128x1xf32>
      %c0_39 = arith.constant 0 : index
      %c0_40 = arith.constant 0 : index
      %c0_41 = arith.constant 0 : index
      %40 = vector.load %arg9[%c0_39, %c0_40, %c0_41] : memref<2x128x32xf32, #tpu.memory_space<vmem>>, vector<1x128x32xf32>
      %41 = vector.shape_cast %40 : vector<1x128x32xf32> to vector<128x32xf32>
      %42 = vector.extract_strided_slice %39 {offsets = [0, 0, 0], sizes = [1, 128, 1], strides = [1, 1, 1]} : vector<2x128x1xf32> to vector<1x128x1xf32>
      %43 = vector.shape_cast %42 : vector<1x128x1xf32> to vector<128x1xf32>
      %44 = vector.broadcast %43 : vector<128x1xf32> to vector<128x32xf32>
      %45 = arith.mulf %41, %44 : vector<128x32xf32>
      %c1 = arith.constant 1 : index
      %c0_42 = arith.constant 0 : index
      %c0_43 = arith.constant 0 : index
      %46 = vector.load %arg9[%c1, %c0_42, %c0_43] : memref<2x128x32xf32, #tpu.memory_space<vmem>>, vector<1x128x32xf32>
      %47 = vector.shape_cast %46 : vector<1x128x32xf32> to vector<128x32xf32>
      %48 = vector.extract_strided_slice %39 {offsets = [1, 0, 0], sizes = [1, 128, 1], strides = [1, 1, 1]} : vector<2x128x1xf32> to vector<1x128x1xf32>
      %49 = vector.shape_cast %48 : vector<1x128x1xf32> to vector<128x1xf32>
      %50 = vector.broadcast %49 : vector<128x1xf32> to vector<128x32xf32>
      %51 = arith.mulf %47, %50 : vector<128x32xf32>
      %52 = tpu.concatenate %45, %51 in 1 : vector<128x32xf32>, vector<128x32xf32> -> vector<128x64xf32>
      %c0_44 = arith.constant 0 : index
      %c0_45 = arith.constant 0 : index
      %c0_46 = arith.constant 0 : index
      %53 = vector.load %arg6[%c0_44, %c0_45, %c0_46] : memref<1x128x64xf32, #tpu.memory_space<vmem>>, vector<1x128x64xf32>
      %54 = vector.shape_cast %53 : vector<1x128x64xf32> to vector<128x64xf32>
      %55 = vector.shape_cast %52 : vector<128x64xf32> to vector<1x128x64xf32>
      tpu.vector_store %arg6[%c0_44, %c0_45, %c0_46], %55 {strides = array<i32>} : memref<1x128x64xf32, #tpu.memory_space<vmem>>, vector<1x128x64xf32>,
    } else {
    }
    return
  }
  func.func @transform_0(%arg0: i32, %arg1: i32, %arg2: i32) -> (i32, i32, i32, i32) {
    %c0_i32 = arith.constant 0 : i32
    %c0_i32_0 = arith.constant 0 : i32
    %c0_i32_1 = arith.constant 0 : i32
    return %arg0, %c0_i32, %arg1, %c0_i32_0 : i32, i32, i32, i32
  }
  func.func @transform_1(%arg0: i32, %arg1: i32, %arg2: i32) -> (i32, i32, i32, i32) {
    %c0_i32 = arith.constant 0 : i32
    %c0_i32_0 = arith.constant 0 : i32
    %c0_i32_1 = arith.constant 0 : i32
    return %arg0, %c0_i32, %arg2, %c0_i32_0 : i32, i32, i32, i32
  }
  func.func @transform_2(%arg0: i32, %arg1: i32, %arg2: i32) -> (i32, i32, i32, i32) {
    %c0_i32 = arith.constant 0 : i32
    %c0_i32_0 = arith.constant 0 : i32
    %c0_i32_1 = arith.constant 0 : i32
    return %arg0, %c0_i32, %arg2, %c0_i32_0 : i32, i32, i32, i32
  }
  func.func @transform_3(%arg0: i32, %arg1: i32, %arg2: i32) -> (i32, i32, i32) {
    %c0_i32 = arith.constant 0 : i32
    %c0_i32_0 = arith.constant 0 : i32
    return %arg0, %arg1, %c0_i32 : i32, i32, i32
  }
}

</mosaic_0001>

<llo_original>
// kernel: attention_forward.7
$region0: #{attention_forward.7}
  #allocation0 [shape = 'u32[]', space=smem, size = 0x4, offset = 0x4, fixed_abs, tag = 'smem constant byte address 0x4 - core index']
  #allocation1 [shape = 'u32[72,128]{1,0:T(1,128)}', space=vmem, size = 0x9000, scoped, tag = 'internal scratch']
  #allocation2 [shape = 'f32[128,128]{1,0:T(8,128)}', space=vmem, size = 0x10000, scoped, tag = 'scratch operand']
  %s0 = inlined_call_operand.vmem [shape: bf16[128,128], index: 0, kind: input, shape index: {}]
  %s1 = inlined_call_operand.vmem [shape: bf16[128,128], index: 1, kind: input, shape index: {}]
  %s2 = inlined_call_operand.vmem [shape: f32[1,128], index: 2, kind: input, shape index: {}]
  %s3 = inlined_call_operand.vmem [shape: f32[1,128], index: 3, kind: input, shape index: {}]
  %s4 = inlined_call_operand.vmem [shape: f32[1,128], index: 4, kind: input, shape index: {}]
  %s5 = inlined_call_operand.vmem [shape: f32[128,128], index: 5, kind: output, shape index: {}]
  %s6 = sld [smem:[#allocation0]]
  $region38: #{attention_forward.7} parent=0
    _
  %s8 = ssub.s32 1, %s6
  %s9 = scalar_select 0, %s8, %s6
  // Predicated region
  $region2: #{attention_forward.7} parent=0 // pred_check
    _
  $region3: #{attention_forward.7} parent=0 // pred_check_branch
    %11 = sbr.rel (0) target = $region5
  $region4: #{attention_forward.7} parent=0 // pred_region
    _
  $region5: #{attention_forward.7} parent=0 // pred_fallthru
    _
  // Predicated region
  $region6: #{attention_forward.7} parent=0 // pred_check
    _
  $region7: #{attention_forward.7} parent=0 // pred_check_branch
    %13 = sbr.rel (0) target = $region9
  $region8: #{attention_forward.7} parent=0 // pred_region
    _
  $region9: #{attention_forward.7} parent=0 // pred_fallthru
    _
  // Predicated region
  $region10: #{attention_forward.7} parent=0 // pred_check
    _
  $region11: #{attention_forward.7} parent=0 // pred_check_branch
    %15 = sbr.rel (0) target = $region13
  $region12: #{attention_forward.7} parent=0 // pred_region
    _
  $region13: #{attention_forward.7} parent=0 // pred_fallthru
    _
  // Predicated region
  $region14: #{attention_forward.7} parent=0 // pred_check
    _
  $region15: #{attention_forward.7} parent=0 // pred_check_branch
    %17 = sbr.rel (0) target = $region17
  $region16: #{attention_forward.7} parent=0 // pred_region
    _
  $region17: #{attention_forward.7} parent=0 // pred_fallthru
    _
  // Predicated region
  $region18: #{attention_forward.7} parent=0 // pred_check
    _
  $region19: #{attention_forward.7} parent=0 // pred_check_branch
    %19 = sbr.rel (0) target = $region21
  $region20: #{attention_forward.7} parent=0 // pred_region
    _
  $region21: #{attention_forward.7} parent=0 // pred_fallthru
    _
  %p20 = scmp.eq.s32.totalorder 0, 0
  // Predicated region
  $region22: #{attention_forward.7} parent=0 // pred_check
    %p21 = pneg %p20
  $region23: #{attention_forward.7} parent=0 // pred_check_branch
    %23 = sbr.rel (%p21) target = $region25
  $region24: #{attention_forward.7} parent=0 // pred_region
    %24 = vst [vmem:[#allocation2] sm:$0xff] 0.0
    %25 = vst [vmem:[#allocation2 + $0x8] sm:$0xff] 0.0
    %26 = vst [vmem:[#allocation2 + $0x10] sm:$0xff] 0.0
    %27 = vst [vmem:[#allocation2 + $0x18] sm:$0xff] 0.0
    %28 = vst [vmem:[#allocation2 + $0x20] sm:$0xff] 0.0
    %29 = vst [vmem:[#allocation2 + $0x28] sm:$0xff] 0.0
    %30 = vst [vmem:[#allocation2 + $0x30] sm:$0xff] 0.0
    %31 = vst [vmem:[#allocation2 + $0x38] sm:$0xff] 0.0
    %32 = vst [vmem:[#allocation2 + $0x40] sm:$0xff] 0.0
    %33 = vst [vmem:[#allocation2 + $0x48] sm:$0xff] 0.0
    %34 = vst [vmem:[#allocation2 + $0x50] sm:$0xff] 0.0
    %35 = vst [vmem:[#allocation2 + $0x58] sm:$0xff] 0.0
    %36 = vst [vmem:[#allocation2 + $0x60] sm:$0xff] 0.0
    %37 = vst [vmem:[#allocation2 + $0x68] sm:$0xff] 0.0
    %38 = vst [vmem:[#allocation2 + $0x70] sm:$0xff] 0.0
    %39 = vst [vmem:[#allocation2 + $0x78] sm:$0xff] 0.0
  $region25: #{attention_forward.7} parent=0 // pred_fallthru
    _
  %v40 = vld [vmem:[#allocation2] sm:$0xff]
  %v41 = vld [vmem:[#allocation2 + $0x8] sm:$0xff]
  %v42 = vld [vmem:[#allocation2 + $0x10] sm:$0xff]
  %v43 = vld [vmem:[#allocation2 + $0x18] sm:$0xff]
  %v44 = vld [vmem:[#allocation2 + $0x20] sm:$0xff]
  %v45 = vld [vmem:[#allocation2 + $0x28] sm:$0xff]
  %v46 = vld [vmem:[#allocation2 + $0x30] sm:$0xff]
  %v47 = vld [vmem:[#allocation2 + $0x38] sm:$0xff]
  %v48 = vld [vmem:[#allocation2 + $0x40] sm:$0xff]
  %v49 = vld [vmem:[#allocation2 + $0x48] sm:$0xff]
  %v50 = vld [vmem:[#allocation2 + $0x50] sm:$0xff]
  %v51 = vld [vmem:[#allocation2 + $0x58] sm:$0xff]
  %v52 = vld [vmem:[#allocation2 + $0x60] sm:$0xff]
  %v53 = vld [vmem:[#allocation2 + $0x68] sm:$0xff]
  %v54 = vld [vmem:[#allocation2 + $0x70] sm:$0xff]
  %v55 = vld [vmem:[#allocation2 + $0x78] sm:$0xff]
  %v56 = vld [vmem:[%s0] sm:$0xf]
  %v57 = vld [vmem:[%s0 + $0x4] sm:$0xf]
  %v58 = vld [vmem:[%s0 + $0x8] sm:$0xf]
  %v59 = vld [vmem:[%s0 + $0xc] sm:$0xf]
  %v60 = vld [vmem:[%s0 + $0x10] sm:$0xf]
  %v61 = vld [vmem:[%s0 + $0x14] sm:$0xf]
  %v62 = vld [vmem:[%s0 + $0x18] sm:$0xf]
  %v63 = vld [vmem:[%s0 + $0x1c] sm:$0xf]
  %v64 = vld [vmem:[%s0 + $0x20] sm:$0xf]
  %v65 = vld [vmem:[%s0 + $0x24] sm:$0xf]
  %v66 = vld [vmem:[%s0 + $0x28] sm:$0xf]
  %v67 = vld [vmem:[%s0 + $0x2c] sm:$0xf]
  %v68 = vld [vmem:[%s0 + $0x30] sm:$0xf]
  %v69 = vld [vmem:[%s0 + $0x34] sm:$0xf]
  %v70 = vld [vmem:[%s0 + $0x38] sm:$0xf]
  %v71 = vld [vmem:[%s0 + $0x3c] sm:$0xf]
  %v72 = vld [vmem:[%s1] sm:$0xf]
  %v73 = vld [vmem:[%s1 + $0x4] sm:$0xf]
  %v74 = vld [vmem:[%s1 + $0x8] sm:$0xf]
  %v75 = vld [vmem:[%s1 + $0xc] sm:$0xf]
  %v76 = vld [vmem:[%s1 + $0x10] sm:$0xf]
  %v77 = vld [vmem:[%s1 + $0x14] sm:$0xf]
  %v78 = vld [vmem:[%s1 + $0x18] sm:$0xf]
  %v79 = vld [vmem:[%s1 + $0x1c] sm:$0xf]
  %v80 = vld [vmem:[%s1 + $0x20] sm:$0xf]
  %v81 = vld [vmem:[%s1 + $0x24] sm:$0xf]
  %v82 = vld [vmem:[%s1 + $0x28] sm:$0xf]
  %v83 = vld [vmem:[%s1 + $0x2c] sm:$0xf]
  %v84 = vld [vmem:[%s1 + $0x30] sm:$0xf]
  %v85 = vld [vmem:[%s1 + $0x34] sm:$0xf]
  %v86 = vld [vmem:[%s1 + $0x38] sm:$0xf]
  %v87 = vld [vmem:[%s1 + $0x3c] sm:$0xf]
  %v104 = vunpack.c.l.b16 %v56
  %v105 = vunpack.c.l.b16 %v57
  %v106 = vunpack.c.l.b16 %v58
  %v107 = vunpack.c.l.b16 %v59
  %v108 = vunpack.c.l.b16 %v60
  %v109 = vunpack.c.l.b16 %v61
  %v110 = vunpack.c.l.b16 %v62
  %v111 = vunpack.c.l.b16 %v63
  %v112 = vunpack.c.l.b16 %v64
  %v113 = vunpack.c.l.b16 %v65
  %v114 = vunpack.c.l.b16 %v66
  %v115 = vunpack.c.l.b16 %v67
  %v116 = vunpack.c.l.b16 %v68
  %v117 = vunpack.c.l.b16 %v69
  %v118 = vunpack.c.l.b16 %v70
  %v119 = vunpack.c.l.b16 %v71
  %v120 = vpack.c.b16 %v105, %v104
  %v121 = vpack.c.b16 %v107, %v106
  %v122 = vpack.c.b16 %v109, %v108
  %v123 = vpack.c.b16 %v111, %v110
  %v124 = vpack.c.b16 %v113, %v112
  %v125 = vpack.c.b16 %v115, %v114
  %v126 = vpack.c.b16 %v117, %v116
  %v127 = vpack.c.b16 %v119, %v118
  %v152 = vunpack.c.l.b16 %v72
  %v153 = vunpack.c.l.b16 %v73
  %v154 = vunpack.c.l.b16 %v74
  %v155 = vunpack.c.l.b16 %v75
  %v156 = vunpack.c.l.b16 %v76
  %v157 = vunpack.c.l.b16 %v77
  %v158 = vunpack.c.l.b16 %v78
  %v159 = vunpack.c.l.b16 %v79
  %v160 = vunpack.c.l.b16 %v80
  %v161 = vunpack.c.l.b16 %v81
  %v162 = vunpack.c.l.b16 %v82
  %v163 = vunpack.c.l.b16 %v83
  %v164 = vunpack.c.l.b16 %v84
  %v165 = vunpack.c.l.b16 %v85
  %v166 = vunpack.c.l.b16 %v86
  %v167 = vunpack.c.l.b16 %v87
  %v168 = vpack.c.b16 %v153, %v152
  %v169 = vpack.c.b16 %v155, %v154
  %v170 = vpack.c.b16 %v157, %v156
  %v171 = vpack.c.b16 %v159, %v158
  %v172 = vpack.c.b16 %v161, %v160
  %v173 = vpack.c.b16 %v163, %v162
  %v174 = vpack.c.b16 %v165, %v164
  %v175 = vpack.c.b16 %v167, %v166
  %184 = vmatpush.bf16.msra.mxu0 %v175
  %185 = vmatpush.bf16.msra.mxu0 %v174
  %186 = vmatpush.bf16.msra.mxu0 %v173
  %187 = vmatpush.bf16.msra.mxu0 %v172
  %188 = vmatpush.bf16.msra.mxu0 %v171
  %189 = vmatpush.bf16.msra.mxu0 %v170
  %190 = vmatpush.bf16.msra.mxu0 %v169
  %191 = vmatpush.bf16.msra.mxu0 %v168
  %192 = vmatmul.bf16.gmra.mxu0 %v120
  %v193 = vpop.f32.mrf.mxu0
  %v194 = vadd.f32 0.0, %v193
  %v195 = vpop.f32.mrf.mxu0
  %v196 = vadd.f32 0.0, %v195
  %197 = vmatmul.bf16.gmra.mxu0 %v121
  %v198 = vpop.f32.mrf.mxu0
  %v199 = vadd.f32 0.0, %v198
  %v200 = vpop.f32.mrf.mxu0
  %v201 = vadd.f32 0.0, %v200
  %202 = vmatmul.bf16.gmra.mxu0 %v122
  %v203 = vpop.f32.mrf.mxu0
  %v204 = vadd.f32 0.0, %v203
  %v205 = vpop.f32.mrf.mxu0
  %v206 = vadd.f32 0.0, %v205
  %207 = vmatmul.bf16.gmra.mxu0 %v123
  %v208 = vpop.f32.mrf.mxu0
  %v209 = vadd.f32 0.0, %v208
  %v210 = vpop.f32.mrf.mxu0
  %v211 = vadd.f32 0.0, %v210
  %212 = vmatmul.bf16.gmra.mxu0 %v124
  %v213 = vpop.f32.mrf.mxu0
  %v214 = vadd.f32 0.0, %v213
  %v215 = vpop.f32.mrf.mxu0
  %v216 = vadd.f32 0.0, %v215
  %217 = vmatmul.bf16.gmra.mxu0 %v125
  %v218 = vpop.f32.mrf.mxu0
  %v219 = vadd.f32 0.0, %v218
  %v220 = vpop.f32.mrf.mxu0
  %v221 = vadd.f32 0.0, %v220
  %222 = vmatmul.bf16.gmra.mxu0 %v126
  %v223 = vpop.f32.mrf.mxu0
  %v224 = vadd.f32 0.0, %v223
  %v225 = vpop.f32.mrf.mxu0
  %v226 = vadd.f32 0.0, %v225
  %227 = vmatmul.bf16.gmra.mxu0 %v127
  %v228 = vpop.f32.mrf.mxu0
  %v229 = vadd.f32 0.0, %v228
  %v230 = vpop.f32.mrf.mxu0
  %v231 = vadd.f32 0.0, %v230
  %232 = vdwg.mxu0
  %v233 = vadd.f32 %v40, %v194
  %v234 = vadd.f32 %v41, %v196
  %v235 = vadd.f32 %v42, %v199
  %v236 = vadd.f32 %v43, %v201
  %v237 = vadd.f32 %v44, %v204
  %v238 = vadd.f32 %v45, %v206
  %v239 = vadd.f32 %v46, %v209
  %v240 = vadd.f32 %v47, %v211
  %v241 = vadd.f32 %v48, %v214
  %v242 = vadd.f32 %v49, %v216
  %v243 = vadd.f32 %v50, %v219
  %v244 = vadd.f32 %v51, %v221
  %v245 = vadd.f32 %v52, %v224
  %v246 = vadd.f32 %v53, %v226
  %v247 = vadd.f32 %v54, %v229
  %v248 = vadd.f32 %v55, %v231
  %249 = vst [vmem:[#allocation2] sm:$0xff] %v233
  %250 = vst [vmem:[#allocation2 + $0x8] sm:$0xff] %v234
  %251 = vst [vmem:[#allocation2 + $0x10] sm:$0xff] %v235
  %252 = vst [vmem:[#allocation2 + $0x18] sm:$0xff] %v236
  %253 = vst [vmem:[#allocation2 + $0x20] sm:$0xff] %v237
  %254 = vst [vmem:[#allocation2 + $0x28] sm:$0xff] %v238
  %255 = vst [vmem:[#allocation2 + $0x30] sm:$0xff] %v239
  %256 = vst [vmem:[#allocation2 + $0x38] sm:$0xff] %v240
  %257 = vst [vmem:[#allocation2 + $0x40] sm:$0xff] %v241
  %258 = vst [vmem:[#allocation2 + $0x48] sm:$0xff] %v242
  %259 = vst [vmem:[#allocation2 + $0x50] sm:$0xff] %v243
  %260 = vst [vmem:[#allocation2 + $0x58] sm:$0xff] %v244
  %261 = vst [vmem:[#allocation2 + $0x60] sm:$0xff] %v245
  %262 = vst [vmem:[#allocation2 + $0x68] sm:$0xff] %v246
  %263 = vst [vmem:[#allocation2 + $0x70] sm:$0xff] %v247
  %264 = vst [vmem:[#allocation2 + $0x78] sm:$0xff] %v248
  // Predicated region
  $region26: #{attention_forward.7} parent=0 // pred_check
    %p265 = pneg %p20
  $region27: #{attention_forward.7} parent=0 // pred_check_branch
    %267 = sbr.rel (%p265) target = $region29
  $region28: #{attention_forward.7} parent=0 // pred_region
    %v268 = vld [vmem:[#allocation2] sm:$0xff]
    %v269 = vld [vmem:[#allocation2 + $0x8] sm:$0xff]
    %v270 = vld [vmem:[#allocation2 + $0x10] sm:$0xff]
    %v271 = vld [vmem:[#allocation2 + $0x18] sm:$0xff]
    %v272 = vld [vmem:[#allocation2 + $0x20] sm:$0xff]
    %v273 = vld [vmem:[#allocation2 + $0x28] sm:$0xff]
    %v274 = vld [vmem:[#allocation2 + $0x30] sm:$0xff]
    %v275 = vld [vmem:[#allocation2 + $0x38] sm:$0xff]
    %v276 = vld [vmem:[#allocation2 + $0x40] sm:$0xff]
    %v277 = vld [vmem:[#allocation2 + $0x48] sm:$0xff]
    %v278 = vld [vmem:[#allocation2 + $0x50] sm:$0xff]
    %v279 = vld [vmem:[#allocation2 + $0x58] sm:$0xff]
    %v280 = vld [vmem:[#allocation2 + $0x60] sm:$0xff]
    %v281 = vld [vmem:[#allocation2 + $0x68] sm:$0xff]
    %v282 = vld [vmem:[#allocation2 + $0x70] sm:$0xff]
    %v283 = vld [vmem:[#allocation2 + $0x78] sm:$0xff]
    %v284 = vld [vmem:[%s2] sm:$0x1]
    %v286 = vperm.slane %v284, 0
    %v288 = vadd.f32 %v268, %v286
    %v289 = vadd.f32 %v269, %v286
    %v290 = vadd.f32 %v270, %v286
    %v291 = vadd.f32 %v271, %v286
    %v292 = vadd.f32 %v272, %v286
    %v293 = vadd.f32 %v273, %v286
    %v294 = vadd.f32 %v274, %v286
    %v295 = vadd.f32 %v275, %v286
    %v296 = vadd.f32 %v276, %v286
    %v297 = vadd.f32 %v277, %v286
    %v298 = vadd.f32 %v278, %v286
    %v299 = vadd.f32 %v279, %v286
    %v300 = vadd.f32 %v280, %v286
    %v301 = vadd.f32 %v281, %v286
    %v302 = vadd.f32 %v282, %v286
    %v303 = vadd.f32 %v283, %v286
    %304 = vst [vmem:[%s5] sm:$0xff] %v288
    %305 = vst [vmem:[%s5 + $0x8] sm:$0xff] %v289
    %306 = vst [vmem:[%s5 + $0x10] sm:$0xff] %v290
    %307 = vst [vmem:[%s5 + $0x18] sm:$0xff] %v291
    %308 = vst [vmem:[%s5 + $0x20] sm:$0xff] %v292
    %309 = vst [vmem:[%s5 + $0x28] sm:$0xff] %v293
    %310 = vst [vmem:[%s5 + $0x30] sm:$0xff] %v294
    %311 = vst [vmem:[%s5 + $0x38] sm:$0xff] %v295
    %312 = vst [vmem:[%s5 + $0x40] sm:$0xff] %v296
    %313 = vst [vmem:[%s5 + $0x48] sm:$0xff] %v297
    %314 = vst [vmem:[%s5 + $0x50] sm:$0xff] %v298
    %315 = vst [vmem:[%s5 + $0x58] sm:$0xff] %v299
    %316 = vst [vmem:[%s5 + $0x60] sm:$0xff] %v300
    %317 = vst [vmem:[%s5 + $0x68] sm:$0xff] %v301
    %318 = vst [vmem:[%s5 + $0x70] sm:$0xff] %v302
    %319 = vst [vmem:[%s5 + $0x78] sm:$0xff] %v303
  $region29: #{attention_forward.7} parent=0 // pred_fallthru
    _
  // Predicated region
  $region30: #{attention_forward.7} parent=0 // pred_check
    _
  $region31: #{attention_forward.7} parent=0 // pred_check_branch
    %321 = sbr.rel (0) target = $region33
  $region32: #{attention_forward.7} parent=0 // pred_region
    _
  $region33: #{attention_forward.7} parent=0 // pred_fallthru
    _
  // Predicated region
  $region34: #{attention_forward.7} parent=0 // pred_check
    _
  $region35: #{attention_forward.7} parent=0 // pred_check_branch
    %323 = sbr.rel (0) target = $region37
  $region36: #{attention_forward.7} parent=0 // pred_region
    _
  $region37: #{attention_forward.7} parent=0 // pred_fallthru
    _

// kernel: attention_forward.6
$region0: #{attention_forward.6}
  #allocation0 [shape = 'u32[]', space=smem, size = 0x4, offset = 0x4, fixed_abs, tag = 'smem constant byte address 0x4 - core index']
  #allocation1 [shape = 'u32[72,128]{1,0:T(1,128)}', space=vmem, size = 0x9000, scoped, tag = 'internal scratch']
  #allocation2 [shape = 'f32[128,64]{1,0:T(8,128)}', space=vmem, size = 0x10000, scoped, tag = 'scratch operand']
  %s0 = inlined_call_operand.vmem [shape: bf16[128,256], index: 0, kind: input, shape index: {}]
  %s1 = inlined_call_operand.vmem [shape: bf16[256,64], index: 1, kind: input, shape index: {}]
  %s2 = inlined_call_operand.vmem [shape: f32[1,64], index: 2, kind: input, shape index: {}]
  %s3 = inlined_call_operand.vmem [shape: f32[1,64], index: 3, kind: input, shape index: {}]
  %s4 = inlined_call_operand.vmem [shape: f32[1,64], index: 4, kind: input, shape index: {}]
  %s5 = inlined_call_operand.vmem [shape: f32[128,64], index: 5, kind: output, shape index: {}]
  %s6 = sld [smem:[#allocation0]]
  $region38: #{attention_forward.6} parent=0
    _
  %s8 = ssub.s32 1, %s6
  %s9 = scalar_select 0, %s8, %s6
  // Predicated region
  $region2: #{attention_forward.6} parent=0 // pred_check
    _
  $region3: #{attention_forward.6} parent=0 // pred_check_branch
    %11 = sbr.rel (0) target = $region5
  $region4: #{attention_forward.6} parent=0 // pred_region
    _
  $region5: #{attention_forward.6} parent=0 // pred_fallthru
    _
  // Predicated region
  $region6: #{attention_forward.6} parent=0 // pred_check
    _
  $region7: #{attention_forward.6} parent=0 // pred_check_branch
    %13 = sbr.rel (0) target = $region9
  $region8: #{attention_forward.6} parent=0 // pred_region
    _
  $region9: #{attention_forward.6} parent=0 // pred_fallthru
    _
  // Predicated region
  $region10: #{attention_forward.6} parent=0 // pred_check
    _
  $region11: #{attention_forward.6} parent=0 // pred_check_branch
    %15 = sbr.rel (0) target = $region13
  $region12: #{attention_forward.6} parent=0 // pred_region
    _
  $region13: #{attention_forward.6} parent=0 // pred_fallthru
    _
  // Predicated region
  $region14: #{attention_forward.6} parent=0 // pred_check
    _
  $region15: #{attention_forward.6} parent=0 // pred_check_branch
    %17 = sbr.rel (0) target = $region17
  $region16: #{attention_forward.6} parent=0 // pred_region
    _
  $region17: #{attention_forward.6} parent=0 // pred_fallthru
    _
  // Predicated region
  $region18: #{attention_forward.6} parent=0 // pred_check
    _
  $region19: #{attention_forward.6} parent=0 // pred_check_branch
    %19 = sbr.rel (0) target = $region21
  $region20: #{attention_forward.6} parent=0 // pred_region
    _
  $region21: #{attention_forward.6} parent=0 // pred_fallthru
    _
  %p20 = scmp.eq.s32.totalorder 0, 0
  // Predicated region
  $region22: #{attention_forward.6} parent=0 // pred_check
    %p21 = pneg %p20
  $region23: #{attention_forward.6} parent=0 // pred_check_branch
    %23 = sbr.rel (%p21) target = $region25
  $region24: #{attention_forward.6} parent=0 // pred_region
    %vm24 = vcmask 523264
    %25 = vst.msk [vmem:[#allocation2] sm:$0xff] %vm24, 0.0
    %26 = vst.msk [vmem:[#allocation2 + $0x8] sm:$0xff] %vm24, 0.0
    %27 = vst.msk [vmem:[#allocation2 + $0x10] sm:$0xff] %vm24, 0.0
    %28 = vst.msk [vmem:[#allocation2 + $0x18] sm:$0xff] %vm24, 0.0
    %29 = vst.msk [vmem:[#allocation2 + $0x20] sm:$0xff] %vm24, 0.0
    %30 = vst.msk [vmem:[#allocation2 + $0x28] sm:$0xff] %vm24, 0.0
    %31 = vst.msk [vmem:[#allocation2 + $0x30] sm:$0xff] %vm24, 0.0
    %32 = vst.msk [vmem:[#allocation2 + $0x38] sm:$0xff] %vm24, 0.0
    %33 = vst.msk [vmem:[#allocation2 + $0x40] sm:$0xff] %vm24, 0.0
    %34 = vst.msk [vmem:[#allocation2 + $0x48] sm:$0xff] %vm24, 0.0
    %35 = vst.msk [vmem:[#allocation2 + $0x50] sm:$0xff] %vm24, 0.0
    %36 = vst.msk [vmem:[#allocation2 + $0x58] sm:$0xff] %vm24, 0.0
    %37 = vst.msk [vmem:[#allocation2 + $0x60] sm:$0xff] %vm24, 0.0
    %38 = vst.msk [vmem:[#allocation2 + $0x68] sm:$0xff] %vm24, 0.0
    %39 = vst.msk [vmem:[#allocation2 + $0x70] sm:$0xff] %vm24, 0.0
    %40 = vst.msk [vmem:[#allocation2 + $0x78] sm:$0xff] %vm24, 0.0
  $region25: #{attention_forward.6} parent=0 // pred_fallthru
    _
  %v41 = vld [vmem:[#allocation2] sm:$0xff]
  %v42 = vld [vmem:[#allocation2 + $0x8] sm:$0xff]
  %v43 = vld [vmem:[#allocation2 + $0x10] sm:$0xff]
  %v44 = vld [vmem:[#allocation2 + $0x18] sm:$0xff]
  %v45 = vld [vmem:[#allocation2 + $0x20] sm:$0xff]
  %v46 = vld [vmem:[#allocation2 + $0x28] sm:$0xff]
  %v47 = vld [vmem:[#allocation2 + $0x30] sm:$0xff]
  %v48 = vld [vmem:[#allocation2 + $0x38] sm:$0xff]
  %v49 = vld [vmem:[#allocation2 + $0x40] sm:$0xff]
  %v50 = vld [vmem:[#allocation2 + $0x48] sm:$0xff]
  %v51 = vld [vmem:[#allocation2 + $0x50] sm:$0xff]
  %v52 = vld [vmem:[#allocation2 + $0x58] sm:$0xff]
  %v53 = vld [vmem:[#allocation2 + $0x60] sm:$0xff]
  %v54 = vld [vmem:[#allocation2 + $0x68] sm:$0xff]
  %v55 = vld [vmem:[#allocation2 + $0x70] sm:$0xff]
  %v56 = vld [vmem:[#allocation2 + $0x78] sm:$0xff]
  %v57 = vld [vmem:[%s0] sm:$0xff]
  %v58 = vld [vmem:[%s0 + $0x8] sm:$0xff]
  %v59 = vld [vmem:[%s0 + $0x10] sm:$0xff]
  %v60 = vld [vmem:[%s0 + $0x18] sm:$0xff]
  %v61 = vld [vmem:[%s0 + $0x20] sm:$0xff]
  %v62 = vld [vmem:[%s0 + $0x28] sm:$0xff]
  %v63 = vld [vmem:[%s0 + $0x30] sm:$0xff]
  %v64 = vld [vmem:[%s0 + $0x38] sm:$0xff]
  %v65 = vld [vmem:[%s0 + $0x40] sm:$0xff]
  %v66 = vld [vmem:[%s0 + $0x48] sm:$0xff]
  %v67 = vld [vmem:[%s0 + $0x50] sm:$0xff]
  %v68 = vld [vmem:[%s0 + $0x58] sm:$0xff]
  %v69 = vld [vmem:[%s0 + $0x60] sm:$0xff]
  %v70 = vld [vmem:[%s0 + $0x68] sm:$0xff]
  %v71 = vld [vmem:[%s0 + $0x70] sm:$0xff]
  %v72 = vld [vmem:[%s0 + $0x78] sm:$0xff]
  %v73 = vld [vmem:[%s1] sm:$0xf]
  %v74 = vld [vmem:[%s1 + $0x4] sm:$0xf]
  %v75 = vld [vmem:[%s1 + $0x8] sm:$0xf]
  %v76 = vld [vmem:[%s1 + $0xc] sm:$0xf]
  %v77 = vld [vmem:[%s1 + $0x10] sm:$0xf]
  %v78 = vld [vmem:[%s1 + $0x14] sm:$0xf]
  %v79 = vld [vmem:[%s1 + $0x18] sm:$0xf]
  %v80 = vld [vmem:[%s1 + $0x1c] sm:$0xf]
  %v81 = vld [vmem:[%s1 + $0x20] sm:$0xf]
  %v82 = vld [vmem:[%s1 + $0x24] sm:$0xf]
  %v83 = vld [vmem:[%s1 + $0x28] sm:$0xf]
  %v84 = vld [vmem:[%s1 + $0x2c] sm:$0xf]
  %v85 = vld [vmem:[%s1 + $0x30] sm:$0xf]
  %v86 = vld [vmem:[%s1 + $0x34] sm:$0xf]
  %v87 = vld [vmem:[%s1 + $0x38] sm:$0xf]
  %v88 = vld [vmem:[%s1 + $0x3c] sm:$0xf]
  %v89 = vld [vmem:[%s1 + $0x40] sm:$0xf]
  %v90 = vld [vmem:[%s1 + $0x44] sm:$0xf]
  %v91 = vld [vmem:[%s1 + $0x48] sm:$0xf]
  %v92 = vld [vmem:[%s1 + $0x4c] sm:$0xf]
  %v93 = vld [vmem:[%s1 + $0x50] sm:$0xf]
  %v94 = vld [vmem:[%s1 + $0x54] sm:$0xf]
  %v95 = vld [vmem:[%s1 + $0x58] sm:$0xf]
  %v96 = vld [vmem:[%s1 + $0x5c] sm:$0xf]
  %v97 = vld [vmem:[%s1 + $0x60] sm:$0xf]
  %v98 = vld [vmem:[%s1 + $0x64] sm:$0xf]
  %v99 = vld [vmem:[%s1 + $0x68] sm:$0xf]
  %v100 = vld [vmem:[%s1 + $0x6c] sm:$0xf]
  %v101 = vld [vmem:[%s1 + $0x70] sm:$0xf]
  %v102 = vld [vmem:[%s1 + $0x74] sm:$0xf]
  %v103 = vld [vmem:[%s1 + $0x78] sm:$0xf]
  %v104 = vld [vmem:[%s1 + $0x7c] sm:$0xf]
  %v121 = vunpack.c.l.b16 %v57
  %v122 = vunpack.c.h.b16 %v57
  %v123 = vunpack.c.l.b16 %v58
  %v124 = vunpack.c.h.b16 %v58
  %v125 = vunpack.c.l.b16 %v59
  %v126 = vunpack.c.h.b16 %v59
  %v127 = vunpack.c.l.b16 %v60
  %v128 = vunpack.c.h.b16 %v60
  %v129 = vunpack.c.l.b16 %v61
  %v130 = vunpack.c.h.b16 %v61
  %v131 = vunpack.c.l.b16 %v62
  %v132 = vunpack.c.h.b16 %v62
  %v133 = vunpack.c.l.b16 %v63
  %v134 = vunpack.c.h.b16 %v63
  %v135 = vunpack.c.l.b16 %v64
  %v136 = vunpack.c.h.b16 %v64
  %v137 = vunpack.c.l.b16 %v65
  %v138 = vunpack.c.h.b16 %v65
  %v139 = vunpack.c.l.b16 %v66
  %v140 = vunpack.c.h.b16 %v66
  %v141 = vunpack.c.l.b16 %v67
  %v142 = vunpack.c.h.b16 %v67
  %v143 = vunpack.c.l.b16 %v68
  %v144 = vunpack.c.h.b16 %v68
  %v145 = vunpack.c.l.b16 %v69
  %v146 = vunpack.c.h.b16 %v69
  %v147 = vunpack.c.l.b16 %v70
  %v148 = vunpack.c.h.b16 %v70
  %v149 = vunpack.c.l.b16 %v71
  %v150 = vunpack.c.h.b16 %v71
  %v151 = vunpack.c.l.b16 %v72
  %v152 = vunpack.c.h.b16 %v72
  %v153 = vpack.c.b16 %v123, %v121
  %v154 = vpack.c.b16 %v124, %v122
  %v155 = vpack.c.b16 %v127, %v125
  %v156 = vpack.c.b16 %v128, %v126
  %v157 = vpack.c.b16 %v131, %v129
  %v158 = vpack.c.b16 %v132, %v130
  %v159 = vpack.c.b16 %v135, %v133
  %v160 = vpack.c.b16 %v136, %v134
  %v161 = vpack.c.b16 %v139, %v137
  %v162 = vpack.c.b16 %v140, %v138
  %v163 = vpack.c.b16 %v143, %v141
  %v164 = vpack.c.b16 %v144, %v142
  %v165 = vpack.c.b16 %v147, %v145
  %v166 = vpack.c.b16 %v148, %v146
  %v167 = vpack.c.b16 %v151, %v149
  %v168 = vpack.c.b16 %v152, %v150
  %v217 = vunpack.c.l.b16 %v73
  %v218 = vunpack.c.l.b16 %v74
  %v219 = vunpack.c.l.b16 %v75
  %v220 = vunpack.c.l.b16 %v76
  %v221 = vunpack.c.l.b16 %v77
  %v222 = vunpack.c.l.b16 %v78
  %v223 = vunpack.c.l.b16 %v79
  %v224 = vunpack.c.l.b16 %v80
  %v225 = vunpack.c.l.b16 %v81
  %v226 = vunpack.c.l.b16 %v82
  %v227 = vunpack.c.l.b16 %v83
  %v228 = vunpack.c.l.b16 %v84
  %v229 = vunpack.c.l.b16 %v85
  %v230 = vunpack.c.l.b16 %v86
  %v231 = vunpack.c.l.b16 %v87
  %v232 = vunpack.c.l.b16 %v88
  %v233 = vunpack.c.l.b16 %v89
  %v234 = vunpack.c.l.b16 %v90
  %v235 = vunpack.c.l.b16 %v91
  %v236 = vunpack.c.l.b16 %v92
  %v237 = vunpack.c.l.b16 %v93
  %v238 = vunpack.c.l.b16 %v94
  %v239 = vunpack.c.l.b16 %v95
  %v240 = vunpack.c.l.b16 %v96
  %v241 = vunpack.c.l.b16 %v97
  %v242 = vunpack.c.l.b16 %v98
  %v243 = vunpack.c.l.b16 %v99
  %v244 = vunpack.c.l.b16 %v100
  %v245 = vunpack.c.l.b16 %v101
  %v246 = vunpack.c.l.b16 %v102
  %v247 = vunpack.c.l.b16 %v103
  %v248 = vunpack.c.l.b16 %v104
  %v249 = vpack.c.b16 %v218, %v217
  %v250 = vpack.c.b16 %v220, %v219
  %v251 = vpack.c.b16 %v222, %v221
  %v252 = vpack.c.b16 %v224, %v223
  %v253 = vpack.c.b16 %v226, %v225
  %v254 = vpack.c.b16 %v228, %v227
  %v255 = vpack.c.b16 %v230, %v229
  %v256 = vpack.c.b16 %v232, %v231
  %v257 = vpack.c.b16 %v234, %v233
  %v258 = vpack.c.b16 %v236, %v235
  %v259 = vpack.c.b16 %v238, %v237
  %v260 = vpack.c.b16 %v240, %v239
  %v261 = vpack.c.b16 %v242, %v241
  %v262 = vpack.c.b16 %v244, %v243
  %v263 = vpack.c.b16 %v246, %v245
  %v264 = vpack.c.b16 %v248, %v247
  %281 = vmatpush.bf16.msra.mxu0 %v256
  %282 = vmatpush.bf16.msra.mxu0 %v255
  %283 = vmatpush.bf16.msra.mxu0 %v254
  %284 = vmatpush.bf16.msra.mxu0 %v253
  %285 = vmatpush.bf16.msra.mxu0 %v252
  %286 = vmatpush.bf16.msra.mxu0 %v251
  %287 = vmatpush.bf16.msra.mxu0 %v250
  %288 = vmatpush.bf16.msra.mxu0 %v249
  %289 = vmatmul.bf16.gmra.mxu0 %v153
  %v290 = vpop.f32.mrf.mxu0
  %v291 = vadd.f32 0.0, %v290
  %v292 = vpop.f32.mrf.mxu0
  %v293 = vadd.f32 0.0, %v292
  %294 = vmatmul.bf16.gmra.mxu0 %v155
  %v295 = vpop.f32.mrf.mxu0
  %v296 = vadd.f32 0.0, %v295
  %v297 = vpop.f32.mrf.mxu0
  %v298 = vadd.f32 0.0, %v297
  %299 = vmatmul.bf16.gmra.mxu0 %v157
  %v300 = vpop.f32.mrf.mxu0
  %v301 = vadd.f32 0.0, %v300
  %v302 = vpop.f32.mrf.mxu0
  %v303 = vadd.f32 0.0, %v302
  %304 = vmatmul.bf16.gmra.mxu0 %v159
  %v305 = vpop.f32.mrf.mxu0
  %v306 = vadd.f32 0.0, %v305
  %v307 = vpop.f32.mrf.mxu0
  %v308 = vadd.f32 0.0, %v307
  %309 = vmatmul.bf16.gmra.mxu0 %v161
  %v310 = vpop.f32.mrf.mxu0
  %v311 = vadd.f32 0.0, %v310
  %v312 = vpop.f32.mrf.mxu0
  %v313 = vadd.f32 0.0, %v312
  %314 = vmatmul.bf16.gmra.mxu0 %v163
  %v315 = vpop.f32.mrf.mxu0
  %v316 = vadd.f32 0.0, %v315
  %v317 = vpop.f32.mrf.mxu0
  %v318 = vadd.f32 0.0, %v317
  %319 = vmatmul.bf16.gmra.mxu0 %v165
  %v320 = vpop.f32.mrf.mxu0
  %v321 = vadd.f32 0.0, %v320
  %v322 = vpop.f32.mrf.mxu0
  %v323 = vadd.f32 0.0, %v322
  %324 = vmatmul.bf16.gmra.mxu0 %v167
  %v325 = vpop.f32.mrf.mxu0
  %v326 = vadd.f32 0.0, %v325
  %v327 = vpop.f32.mrf.mxu0
  %v328 = vadd.f32 0.0, %v327
  %329 = vdwg.mxu0
  %330 = vmatpush.bf16.msra.mxu0 %v264
  %331 = vmatpush.bf16.msra.mxu0 %v263
  %332 = vmatpush.bf16.msra.mxu0 %v262
  %333 = vmatpush.bf16.msra.mxu0 %v261
  %334 = vmatpush.bf16.msra.mxu0 %v260
  %335 = vmatpush.bf16.msra.mxu0 %v259
  %336 = vmatpush.bf16.msra.mxu0 %v258
  %337 = vmatpush.bf16.msra.mxu0 %v257
  %338 = vmatmul.bf16.gmra.mxu0 %v154
  %v339 = vpop.f32.mrf.mxu0
  %v340 = vadd.f32 %v291, %v339
  %v341 = vpop.f32.mrf.mxu0
  %v342 = vadd.f32 %v293, %v341
  %343 = vmatmul.bf16.gmra.mxu0 %v156
  %v344 = vpop.f32.mrf.mxu0
  %v345 = vadd.f32 %v296, %v344
  %v346 = vpop.f32.mrf.mxu0
  %v347 = vadd.f32 %v298, %v346
  %348 = vmatmul.bf16.gmra.mxu0 %v158
  %v349 = vpop.f32.mrf.mxu0
  %v350 = vadd.f32 %v301, %v349
  %v351 = vpop.f32.mrf.mxu0
  %v352 = vadd.f32 %v303, %v351
  %353 = vmatmul.bf16.gmra.mxu0 %v160
  %v354 = vpop.f32.mrf.mxu0
  %v355 = vadd.f32 %v306, %v354
  %v356 = vpop.f32.mrf.mxu0
  %v357 = vadd.f32 %v308, %v356
  %358 = vmatmul.bf16.gmra.mxu0 %v162
  %v359 = vpop.f32.mrf.mxu0
  %v360 = vadd.f32 %v311, %v359
  %v361 = vpop.f32.mrf.mxu0
  %v362 = vadd.f32 %v313, %v361
  %363 = vmatmul.bf16.gmra.mxu0 %v164
  %v364 = vpop.f32.mrf.mxu0
  %v365 = vadd.f32 %v316, %v364
  %v366 = vpop.f32.mrf.mxu0
  %v367 = vadd.f32 %v318, %v366
  %368 = vmatmul.bf16.gmra.mxu0 %v166
  %v369 = vpop.f32.mrf.mxu0
  %v370 = vadd.f32 %v321, %v369
  %v371 = vpop.f32.mrf.mxu0
  %v372 = vadd.f32 %v323, %v371
  %373 = vmatmul.bf16.gmra.mxu0 %v168
  %v374 = vpop.f32.mrf.mxu0
  %v375 = vadd.f32 %v326, %v374
  %v376 = vpop.f32.mrf.mxu0
  %v377 = vadd.f32 %v328, %v376
  %378 = vdwg.mxu0
  %v379 = vadd.f32 %v41, %v340
  %v380 = vadd.f32 %v42, %v342
  %v381 = vadd.f32 %v43, %v345
  %v382 = vadd.f32 %v44, %v347
  %v383 = vadd.f32 %v45, %v350
  %v384 = vadd.f32 %v46, %v352
  %v385 = vadd.f32 %v47, %v355
  %v386 = vadd.f32 %v48, %v357
  %v387 = vadd.f32 %v49, %v360
  %v388 = vadd.f32 %v50, %v362
  %v389 = vadd.f32 %v51, %v365
  %v390 = vadd.f32 %v52, %v367
  %v391 = vadd.f32 %v53, %v370
  %v392 = vadd.f32 %v54, %v372
  %v393 = vadd.f32 %v55, %v375
  %v394 = vadd.f32 %v56, %v377
  %vm395 = vcmask 523264
  %396 = vst.msk [vmem:[#allocation2] sm:$0xff] %vm395, %v379
  %397 = vst.msk [vmem:[#allocation2 + $0x8] sm:$0xff] %vm395, %v380
  %398 = vst.msk [vmem:[#allocation2 + $0x10] sm:$0xff] %vm395, %v381
  %399 = vst.msk [vmem:[#allocation2 + $0x18] sm:$0xff] %vm395, %v382
  %400 = vst.msk [vmem:[#allocation2 + $0x20] sm:$0xff] %vm395, %v383
  %401 = vst.msk [vmem:[#allocation2 + $0x28] sm:$0xff] %vm395, %v384
  %402 = vst.msk [vmem:[#allocation2 + $0x30] sm:$0xff] %vm395, %v385
  %403 = vst.msk [vmem:[#allocation2 + $0x38] sm:$0xff] %vm395, %v386
  %404 = vst.msk [vmem:[#allocation2 + $0x40] sm:$0xff] %vm395, %v387
  %405 = vst.msk [vmem:[#allocation2 + $0x48] sm:$0xff] %vm395, %v388
  %406 = vst.msk [vmem:[#allocation2 + $0x50] sm:$0xff] %vm395, %v389
  %407 = vst.msk [vmem:[#allocation2 + $0x58] sm:$0xff] %vm395, %v390
  %408 = vst.msk [vmem:[#allocation2 + $0x60] sm:$0xff] %vm395, %v391
  %409 = vst.msk [vmem:[#allocation2 + $0x68] sm:$0xff] %vm395, %v392
  %410 = vst.msk [vmem:[#allocation2 + $0x70] sm:$0xff] %vm395, %v393
  %411 = vst.msk [vmem:[#allocation2 + $0x78] sm:$0xff] %vm395, %v394
  // Predicated region
  $region26: #{attention_forward.6} parent=0 // pred_check
    %p412 = pneg %p20
  $region27: #{attention_forward.6} parent=0 // pred_check_branch
    %414 = sbr.rel (%p412) target = $region29
  $region28: #{attention_forward.6} parent=0 // pred_region
    %v415 = vld [vmem:[#allocation2] sm:$0xff]
    %v416 = vld [vmem:[#allocation2 + $0x8] sm:$0xff]
    %v417 = vld [vmem:[#allocation2 + $0x10] sm:$0xff]
    %v418 = vld [vmem:[#allocation2 + $0x18] sm:$0xff]
    %v419 = vld [vmem:[#allocation2 + $0x20] sm:$0xff]
    %v420 = vld [vmem:[#allocation2 + $0x28] sm:$0xff]
    %v421 = vld [vmem:[#allocation2 + $0x30] sm:$0xff]
    %v422 = vld [vmem:[#allocation2 + $0x38] sm:$0xff]
    %v423 = vld [vmem:[#allocation2 + $0x40] sm:$0xff]
    %v424 = vld [vmem:[#allocation2 + $0x48] sm:$0xff]
    %v425 = vld [vmem:[#allocation2 + $0x50] sm:$0xff]
    %v426 = vld [vmem:[#allocation2 + $0x58] sm:$0xff]
    %v427 = vld [vmem:[#allocation2 + $0x60] sm:$0xff]
    %v428 = vld [vmem:[#allocation2 + $0x68] sm:$0xff]
    %v429 = vld [vmem:[#allocation2 + $0x70] sm:$0xff]
    %v430 = vld [vmem:[#allocation2 + $0x78] sm:$0xff]
    %v431 = vld [vmem:[%s2] sm:$0x1]
    %v433 = vperm.slane %v431, 0
    %v435 = vadd.f32 %v415, %v433
    %v436 = vadd.f32 %v416, %v433
    %v437 = vadd.f32 %v417, %v433
    %v438 = vadd.f32 %v418, %v433
    %v439 = vadd.f32 %v419, %v433
    %v440 = vadd.f32 %v420, %v433
    %v441 = vadd.f32 %v421, %v433
    %v442 = vadd.f32 %v422, %v433
    %v443 = vadd.f32 %v423, %v433
    %v444 = vadd.f32 %v424, %v433
    %v445 = vadd.f32 %v425, %v433
    %v446 = vadd.f32 %v426, %v433
    %v447 = vadd.f32 %v427, %v433
    %v448 = vadd.f32 %v428, %v433
    %v449 = vadd.f32 %v429, %v433
    %v450 = vadd.f32 %v430, %v433
    %v451 = vsel %vm395, %v435, 0.0
    %452 = vadd.xlane.f32.xlu0 %v451
    %v453 = vpop.xlane.xlu0 %452
    %v454 = vsel %vm395, %v436, 0.0
    %455 = vadd.xlane.f32.xlu0 %v454
    %v456 = vpop.xlane.xlu0 %455
    %v457 = vsel %vm395, %v437, 0.0
    %458 = vadd.xlane.f32.xlu0 %v457
    %v459 = vpop.xlane.xlu0 %458
    %v460 = vsel %vm395, %v438, 0.0
    %461 = vadd.xlane.f32.xlu0 %v460
    %v462 = vpop.xlane.xlu0 %461
    %v463 = vsel %vm395, %v439, 0.0
    %464 = vadd.xlane.f32.xlu0 %v463
    %v465 = vpop.xlane.xlu0 %464
    %v466 = vsel %vm395, %v440, 0.0
    %467 = vadd.xlane.f32.xlu0 %v466
    %v468 = vpop.xlane.xlu0 %467
    %v469 = vsel %vm395, %v441, 0.0
    %470 = vadd.xlane.f32.xlu0 %v469
    %v471 = vpop.xlane.xlu0 %470
    %v472 = vsel %vm395, %v442, 0.0
    %473 = vadd.xlane.f32.xlu0 %v472
    %v474 = vpop.xlane.xlu0 %473
    %v475 = vsel %vm395, %v443, 0.0
    %476 = vadd.xlane.f32.xlu0 %v475
    %v477 = vpop.xlane.xlu0 %476
    %v478 = vsel %vm395, %v444, 0.0
    %479 = vadd.xlane.f32.xlu0 %v478
    %v480 = vpop.xlane.xlu0 %479
    %v481 = vsel %vm395, %v445, 0.0
    %482 = vadd.xlane.f32.xlu0 %v481
    %v483 = vpop.xlane.xlu0 %482
    %v484 = vsel %vm395, %v446, 0.0
    %485 = vadd.xlane.f32.xlu0 %v484
    %v486 = vpop.xlane.xlu0 %485
    %v487 = vsel %vm395, %v447, 0.0
    %488 = vadd.xlane.f32.xlu0 %v487
    %v489 = vpop.xlane.xlu0 %488
    %v490 = vsel %vm395, %v448, 0.0
    %491 = vadd.xlane.f32.xlu0 %v490
    %v492 = vpop.xlane.xlu0 %491
    %v493 = vsel %vm395, %v449, 0.0
    %494 = vadd.xlane.f32.xlu0 %v493
    %v495 = vpop.xlane.xlu0 %494
    %v496 = vsel %vm395, %v450, 0.0
    %497 = vadd.xlane.f32.xlu0 %v496
    %v498 = vpop.xlane.xlu0 %497
    %v499 = vrcp.pop 64.0
    %v500 = vmul.f32 64.0, %v499
    %v501 = vsub.f32 1.0, %v500
    %v502 = vmul.f32 %v499, %v501
    %v503 = vadd.f32 %v499, %v502
    %vm504 = vweird.f32 %v499
    %v505 = vsel %vm504, %v499, %v503
    %v506 = vmul.f32 %v453, %v505
    %v507 = vmul.f32 %v456, %v505
    %v508 = vmul.f32 %v459, %v505
    %v509 = vmul.f32 %v462, %v505
    %v510 = vmul.f32 %v465, %v505
    %v511 = vmul.f32 %v468, %v505
    %v512 = vmul.f32 %v471, %v505
    %v513 = vmul.f32 %v474, %v505
    %v514 = vmul.f32 %v477, %v505
    %v515 = vmul.f32 %v480, %v505
    %v516 = vmul.f32 %v483, %v505
    %v517 = vmul.f32 %v486, %v505
    %v518 = vmul.f32 %v489, %v505
    %v519 = vmul.f32 %v492, %v505
    %v520 = vmul.f32 %v495, %v505
    %v521 = vmul.f32 %v498, %v505
    %v522 = vsub.f32 %v435, %v506
    %v523 = vsub.f32 %v436, %v507
    %v524 = vsub.f32 %v437, %v508
    %v525 = vsub.f32 %v438, %v509
    %v526 = vsub.f32 %v439, %v510
    %v527 = vsub.f32 %v440, %v511
    %v528 = vsub.f32 %v441, %v512
    %v529 = vsub.f32 %v442, %v513
    %v530 = vsub.f32 %v443, %v514
    %v531 = vsub.f32 %v444, %v515
    %v532 = vsub.f32 %v445, %v516
    %v533 = vsub.f32 %v446, %v517
    %v534 = vsub.f32 %v447, %v518
    %v535 = vsub.f32 %v448, %v519
    %v536 = vsub.f32 %v449, %v520
    %v537 = vsub.f32 %v450, %v521
    %v538 = vmul.f32 %v522, %v522
    %v539 = vmul.f32 %v523, %v523
    %v540 = vmul.f32 %v524, %v524
    %v541 = vmul.f32 %v525, %v525
    %v542 = vmul.f32 %v526, %v526
    %v543 = vmul.f32 %v527, %v527
    %v544 = vmul.f32 %v528, %v528
    %v545 = vmul.f32 %v529, %v529
    %v546 = vmul.f32 %v530, %v530
    %v547 = vmul.f32 %v531, %v531
    %v548 = vmul.f32 %v532, %v532
    %v549 = vmul.f32 %v533, %v533
    %v550 = vmul.f32 %v534, %v534
    %v551 = vmul.f32 %v535, %v535
    %v552 = vmul.f32 %v536, %v536
    %v553 = vmul.f32 %v537, %v537
    %v554 = vsel %vm395, %v538, 0.0
    %555 = vadd.xlane.f32.xlu0 %v554
    %v556 = vpop.xlane.xlu0 %555
    %v557 = vsel %vm395, %v539, 0.0
    %558 = vadd.xlane.f32.xlu0 %v557
    %v559 = vpop.xlane.xlu0 %558
    %v560 = vsel %vm395, %v540, 0.0
    %561 = vadd.xlane.f32.xlu0 %v560
    %v562 = vpop.xlane.xlu0 %561
    %v563 = vsel %vm395, %v541, 0.0
    %564 = vadd.xlane.f32.xlu0 %v563
    %v565 = vpop.xlane.xlu0 %564
    %v566 = vsel %vm395, %v542, 0.0
    %567 = vadd.xlane.f32.xlu0 %v566
    %v568 = vpop.xlane.xlu0 %567
    %v569 = vsel %vm395, %v543, 0.0
    %570 = vadd.xlane.f32.xlu0 %v569
    %v571 = vpop.xlane.xlu0 %570
    %v572 = vsel %vm395, %v544, 0.0
    %573 = vadd.xlane.f32.xlu0 %v572
    %v574 = vpop.xlane.xlu0 %573
    %v575 = vsel %vm395, %v545, 0.0
    %576 = vadd.xlane.f32.xlu0 %v575
    %v577 = vpop.xlane.xlu0 %576
    %v578 = vsel %vm395, %v546, 0.0
    %579 = vadd.xlane.f32.xlu0 %v578
    %v580 = vpop.xlane.xlu0 %579
    %v581 = vsel %vm395, %v547, 0.0
    %582 = vadd.xlane.f32.xlu0 %v581
    %v583 = vpop.xlane.xlu0 %582
    %v584 = vsel %vm395, %v548, 0.0
    %585 = vadd.xlane.f32.xlu0 %v584
    %v586 = vpop.xlane.xlu0 %585
    %v587 = vsel %vm395, %v549, 0.0
    %588 = vadd.xlane.f32.xlu0 %v587
    %v589 = vpop.xlane.xlu0 %588
    %v590 = vsel %vm395, %v550, 0.0
    %591 = vadd.xlane.f32.xlu0 %v590
    %v592 = vpop.xlane.xlu0 %591
    %v593 = vsel %vm395, %v551, 0.0
    %594 = vadd.xlane.f32.xlu0 %v593
    %v595 = vpop.xlane.xlu0 %594
    %v596 = vsel %vm395, %v552, 0.0
    %597 = vadd.xlane.f32.xlu0 %v596
    %v598 = vpop.xlane.xlu0 %597
    %v599 = vsel %vm395, %v553, 0.0
    %600 = vadd.xlane.f32.xlu0 %v599
    %v601 = vpop.xlane.xlu0 %600
    %v602 = vmul.f32 %v556, %v505
    %v603 = vmul.f32 %v559, %v505
    %v604 = vmul.f32 %v562, %v505
    %v605 = vmul.f32 %v565, %v505
    %v606 = vmul.f32 %v568, %v505
    %v607 = vmul.f32 %v571, %v505
    %v608 = vmul.f32 %v574, %v505
    %v609 = vmul.f32 %v577, %v505
    %v610 = vmul.f32 %v580, %v505
    %v611 = vmul.f32 %v583, %v505
    %v612 = vmul.f32 %v586, %v505
    %v613 = vmul.f32 %v589, %v505
    %v614 = vmul.f32 %v592, %v505
    %v615 = vmul.f32 %v595, %v505
    %v616 = vmul.f32 %v598, %v505
    %v617 = vmul.f32 %v601, %v505
    %v618 = vadd.f32 %v602, 1e-05
    %v619 = vadd.f32 %v603, 1e-05
    %v620 = vadd.f32 %v604, 1e-05
    %v621 = vadd.f32 %v605, 1e-05
    %v622 = vadd.f32 %v606, 1e-05
    %v623 = vadd.f32 %v607, 1e-05
    %v624 = vadd.f32 %v608, 1e-05
    %v625 = vadd.f32 %v609, 1e-05
    %v626 = vadd.f32 %v610, 1e-05
    %v627 = vadd.f32 %v611, 1e-05
    %v628 = vadd.f32 %v612, 1e-05
    %v629 = vadd.f32 %v613, 1e-05
    %v630 = vadd.f32 %v614, 1e-05
    %v631 = vadd.f32 %v615, 1e-05
    %v632 = vadd.f32 %v616, 1e-05
    %v633 = vadd.f32 %v617, 1e-05
    %v634 = vrsqrt.pop %v618
    %v635 = vmul.f32 %v634, %v618
    %v636 = vmul.f32 %v635, %v634
    %v637 = vmul.f32 0.5, %v636
    %v638 = vsub.f32 1.5, %v637
    %v639 = vmul.f32 %v634, %v638
    %vm640 = vweird.f32 %v618
    %vm641 = vweird.f32 %v634
    %vm642 = vmor %vm640, %vm641
    %v643 = vsel %vm642, %v634, %v639
    %v644 = vrsqrt.pop %v619
    %v645 = vmul.f32 %v644, %v619
    %v646 = vmul.f32 %v645, %v644
    %v647 = vmul.f32 0.5, %v646
    %v648 = vsub.f32 1.5, %v647
    %v649 = vmul.f32 %v644, %v648
    %vm650 = vweird.f32 %v619
    %vm651 = vweird.f32 %v644
    %vm652 = vmor %vm650, %vm651
    %v653 = vsel %vm652, %v644, %v649
    %v654 = vrsqrt.pop %v620
    %v655 = vmul.f32 %v654, %v620
    %v656 = vmul.f32 %v655, %v654
    %v657 = vmul.f32 0.5, %v656
    %v658 = vsub.f32 1.5, %v657
    %v659 = vmul.f32 %v654, %v658
    %vm660 = vweird.f32 %v620
    %vm661 = vweird.f32 %v654
    %vm662 = vmor %vm660, %vm661
    %v663 = vsel %vm662, %v654, %v659
    %v664 = vrsqrt.pop %v621
    %v665 = vmul.f32 %v664, %v621
    %v666 = vmul.f32 %v665, %v664
    %v667 = vmul.f32 0.5, %v666
    %v668 = vsub.f32 1.5, %v667
    %v669 = vmul.f32 %v664, %v668
    %vm670 = vweird.f32 %v621
    %vm671 = vweird.f32 %v664
    %vm672 = vmor %vm670, %vm671
    %v673 = vsel %vm672, %v664, %v669
    %v674 = vrsqrt.pop %v622
    %v675 = vmul.f32 %v674, %v622
    %v676 = vmul.f32 %v675, %v674
    %v677 = vmul.f32 0.5, %v676
    %v678 = vsub.f32 1.5, %v677
    %v679 = vmul.f32 %v674, %v678
    %vm680 = vweird.f32 %v622
    %vm681 = vweird.f32 %v674
    %vm682 = vmor %vm680, %vm681
    %v683 = vsel %vm682, %v674, %v679
    %v684 = vrsqrt.pop %v623
    %v685 = vmul.f32 %v684, %v623
    %v686 = vmul.f32 %v685, %v684
    %v687 = vmul.f32 0.5, %v686
    %v688 = vsub.f32 1.5, %v687
    %v689 = vmul.f32 %v684, %v688
    %vm690 = vweird.f32 %v623
    %vm691 = vweird.f32 %v684
    %vm692 = vmor %vm690, %vm691
    %v693 = vsel %vm692, %v684, %v689
    %v694 = vrsqrt.pop %v624
    %v695 = vmul.f32 %v694, %v624
    %v696 = vmul.f32 %v695, %v694
    %v697 = vmul.f32 0.5, %v696
    %v698 = vsub.f32 1.5, %v697
    %v699 = vmul.f32 %v694, %v698
    %vm700 = vweird.f32 %v624
    %vm701 = vweird.f32 %v694
    %vm702 = vmor %vm700, %vm701
    %v703 = vsel %vm702, %v694, %v699
    %v704 = vrsqrt.pop %v625
    %v705 = vmul.f32 %v704, %v625
    %v706 = vmul.f32 %v705, %v704
    %v707 = vmul.f32 0.5, %v706
    %v708 = vsub.f32 1.5, %v707
    %v709 = vmul.f32 %v704, %v708
    %vm710 = vweird.f32 %v625
    %vm711 = vweird.f32 %v704
    %vm712 = vmor %vm710, %vm711
    %v713 = vsel %vm712, %v704, %v709
    %v714 = vrsqrt.pop %v626
    %v715 = vmul.f32 %v714, %v626
    %v716 = vmul.f32 %v715, %v714
    %v717 = vmul.f32 0.5, %v716
    %v718 = vsub.f32 1.5, %v717
    %v719 = vmul.f32 %v714, %v718
    %vm720 = vweird.f32 %v626
    %vm721 = vweird.f32 %v714
    %vm722 = vmor %vm720, %vm721
    %v723 = vsel %vm722, %v714, %v719
    %v724 = vrsqrt.pop %v627
    %v725 = vmul.f32 %v724, %v627
    %v726 = vmul.f32 %v725, %v724
    %v727 = vmul.f32 0.5, %v726
    %v728 = vsub.f32 1.5, %v727
    %v729 = vmul.f32 %v724, %v728
    %vm730 = vweird.f32 %v627
    %vm731 = vweird.f32 %v724
    %vm732 = vmor %vm730, %vm731
    %v733 = vsel %vm732, %v724, %v729
    %v734 = vrsqrt.pop %v628
    %v735 = vmul.f32 %v734, %v628
    %v736 = vmul.f32 %v735, %v734
    %v737 = vmul.f32 0.5, %v736
    %v738 = vsub.f32 1.5, %v737
    %v739 = vmul.f32 %v734, %v738
    %vm740 = vweird.f32 %v628
    %vm741 = vweird.f32 %v734
    %vm742 = vmor %vm740, %vm741
    %v743 = vsel %vm742, %v734, %v739
    %v744 = vrsqrt.pop %v629
    %v745 = vmul.f32 %v744, %v629
    %v746 = vmul.f32 %v745, %v744
    %v747 = vmul.f32 0.5, %v746
    %v748 = vsub.f32 1.5, %v747
    %v749 = vmul.f32 %v744, %v748
    %vm750 = vweird.f32 %v629
    %vm751 = vweird.f32 %v744
    %vm752 = vmor %vm750, %vm751
    %v753 = vsel %vm752, %v744, %v749
    %v754 = vrsqrt.pop %v630
    %v755 = vmul.f32 %v754, %v630
    %v756 = vmul.f32 %v755, %v754
    %v757 = vmul.f32 0.5, %v756
    %v758 = vsub.f32 1.5, %v757
    %v759 = vmul.f32 %v754, %v758
    %vm760 = vweird.f32 %v630
    %vm761 = vweird.f32 %v754
    %vm762 = vmor %vm760, %vm761
    %v763 = vsel %vm762, %v754, %v759
    %v764 = vrsqrt.pop %v631
    %v765 = vmul.f32 %v764, %v631
    %v766 = vmul.f32 %v765, %v764
    %v767 = vmul.f32 0.5, %v766
    %v768 = vsub.f32 1.5, %v767
    %v769 = vmul.f32 %v764, %v768
    %vm770 = vweird.f32 %v631
    %vm771 = vweird.f32 %v764
    %vm772 = vmor %vm770, %vm771
    %v773 = vsel %vm772, %v764, %v769
    %v774 = vrsqrt.pop %v632
    %v775 = vmul.f32 %v774, %v632
    %v776 = vmul.f32 %v775, %v774
    %v777 = vmul.f32 0.5, %v776
    %v778 = vsub.f32 1.5, %v777
    %v779 = vmul.f32 %v774, %v778
    %vm780 = vweird.f32 %v632
    %vm781 = vweird.f32 %v774
    %vm782 = vmor %vm780, %vm781
    %v783 = vsel %vm782, %v774, %v779
    %v784 = vrsqrt.pop %v633
    %v785 = vmul.f32 %v784, %v633
    %v786 = vmul.f32 %v785, %v784
    %v787 = vmul.f32 0.5, %v786
    %v788 = vsub.f32 1.5, %v787
    %v789 = vmul.f32 %v784, %v788
    %vm790 = vweird.f32 %v633
    %vm791 = vweird.f32 %v784
    %vm792 = vmor %vm790, %vm791
    %v793 = vsel %vm792, %v784, %v789
    %v794 = vmul.f32 %v522, %v643
    %v795 = vmul.f32 %v523, %v653
    %v796 = vmul.f32 %v524, %v663
    %v797 = vmul.f32 %v525, %v673
    %v798 = vmul.f32 %v526, %v683
    %v799 = vmul.f32 %v527, %v693
    %v800 = vmul.f32 %v528, %v703
    %v801 = vmul.f32 %v529, %v713
    %v802 = vmul.f32 %v530, %v723
    %v803 = vmul.f32 %v531, %v733
    %v804 = vmul.f32 %v532, %v743
    %v805 = vmul.f32 %v533, %v753
    %v806 = vmul.f32 %v534, %v763
    %v807 = vmul.f32 %v535, %v773
    %v808 = vmul.f32 %v536, %v783
    %v809 = vmul.f32 %v537, %v793
    %v810 = vld [vmem:[%s3] sm:$0x1]
    %v812 = vperm.slane %v810, 0
    %v814 = vmul.f32 %v794, %v812
    %v815 = vmul.f32 %v795, %v812
    %v816 = vmul.f32 %v796, %v812
    %v817 = vmul.f32 %v797, %v812
    %v818 = vmul.f32 %v798, %v812
    %v819 = vmul.f32 %v799, %v812
    %v820 = vmul.f32 %v800, %v812
    %v821 = vmul.f32 %v801, %v812
    %v822 = vmul.f32 %v802, %v812
    %v823 = vmul.f32 %v803, %v812
    %v824 = vmul.f32 %v804, %v812
    %v825 = vmul.f32 %v805, %v812
    %v826 = vmul.f32 %v806, %v812
    %v827 = vmul.f32 %v807, %v812
    %v828 = vmul.f32 %v808, %v812
    %v829 = vmul.f32 %v809, %v812
    %v830 = vld [vmem:[%s4] sm:$0x1]
    %v832 = vperm.slane %v830, 0
    %v834 = vadd.f32 %v814, %v832
    %v835 = vadd.f32 %v815, %v832
    %v836 = vadd.f32 %v816, %v832
    %v837 = vadd.f32 %v817, %v832
    %v838 = vadd.f32 %v818, %v832
    %v839 = vadd.f32 %v819, %v832
    %v840 = vadd.f32 %v820, %v832
    %v841 = vadd.f32 %v821, %v832
    %v842 = vadd.f32 %v822, %v832
    %v843 = vadd.f32 %v823, %v832
    %v844 = vadd.f32 %v824, %v832
    %v845 = vadd.f32 %v825, %v832
    %v846 = vadd.f32 %v826, %v832
    %v847 = vadd.f32 %v827, %v832
    %v848 = vadd.f32 %v828, %v832
    %v849 = vadd.f32 %v829, %v832
    %850 = vst.msk [vmem:[%s5] sm:$0xff] %vm395, %v834
    %851 = vst.msk [vmem:[%s5 + $0x8] sm:$0xff] %vm395, %v835
    %852 = vst.msk [vmem:[%s5 + $0x10] sm:$0xff] %vm395, %v836
    %853 = vst.msk [vmem:[%s5 + $0x18] sm:$0xff] %vm395, %v837
    %854 = vst.msk [vmem:[%s5 + $0x20] sm:$0xff] %vm395, %v838
    %855 = vst.msk [vmem:[%s5 + $0x28] sm:$0xff] %vm395, %v839
    %856 = vst.msk [vmem:[%s5 + $0x30] sm:$0xff] %vm395, %v840
    %857 = vst.msk [vmem:[%s5 + $0x38] sm:$0xff] %vm395, %v841
    %858 = vst.msk [vmem:[%s5 + $0x40] sm:$0xff] %vm395, %v842
    %859 = vst.msk [vmem:[%s5 + $0x48] sm:$0xff] %vm395, %v843
    %860 = vst.msk [vmem:[%s5 + $0x50] sm:$0xff] %vm395, %v844
    %861 = vst.msk [vmem:[%s5 + $0x58] sm:$0xff] %vm395, %v845
    %862 = vst.msk [vmem:[%s5 + $0x60] sm:$0xff] %vm395, %v846
    %863 = vst.msk [vmem:[%s5 + $0x68] sm:$0xff] %vm395, %v847
    %864 = vst.msk [vmem:[%s5 + $0x70] sm:$0xff] %vm395, %v848
    %865 = vst.msk [vmem:[%s5 + $0x78] sm:$0xff] %vm395, %v849
  $region29: #{attention_forward.6} parent=0 // pred_fallthru
    _
  // Predicated region
  $region30: #{attention_forward.6} parent=0 // pred_check
    _
  $region31: #{attention_forward.6} parent=0 // pred_check_branch
    %867 = sbr.rel (0) target = $region33
  $region32: #{attention_forward.6} parent=0 // pred_region
    _
  $region33: #{attention_forward.6} parent=0 // pred_fallthru
    _
  // Predicated region
  $region34: #{attention_forward.6} parent=0 // pred_check
    _
  $region35: #{attention_forward.6} parent=0 // pred_check_branch
    %869 = sbr.rel (0) target = $region37
  $region36: #{attention_forward.6} parent=0 // pred_region
    _
  $region37: #{attention_forward.6} parent=0 // pred_fallthru
    _

// kernel: attention_forward.5
$region0: #{attention_forward.5}
  #allocation0 [shape = 'u32[]', space=smem, size = 0x4, offset = 0x4, fixed_abs, tag = 'smem constant byte address 0x4 - core index']
  #allocation1 [shape = 'u32[72,128]{1,0:T(1,128)}', space=vmem, size = 0x9000, scoped, tag = 'internal scratch']
  #allocation2 [shape = 'f32[256,128]{1,0:T(8,128)}', space=vmem, size = 0x20000, scoped, tag = 'scratch operand']
  %s0 = inlined_call_operand.vmem [shape: bf16[512,128], index: 0, kind: input, shape index: {}]
  %s1 = inlined_call_operand.vmem [shape: bf16[128,128], index: 1, kind: input, shape index: {}]
  %s2 = inlined_call_operand.vmem [shape: f32[1,128], index: 2, kind: input, shape index: {}]
  %s3 = inlined_call_operand.vmem [shape: f32[1,128], index: 3, kind: input, shape index: {}]
  %s4 = inlined_call_operand.vmem [shape: f32[1,128], index: 4, kind: input, shape index: {}]
  %s5 = inlined_call_operand.vmem [shape: f32[512,128], index: 5, kind: output, shape index: {}]
  %s6 = sld [smem:[#allocation0]]
  $region61: #{attention_forward.5} parent=0
    _
  %s8 = ssub.s32 1, %s6
  %s9 = scalar_select 0, %s8, %s6
  loop: start=0, step=1, limit=4
  $region2: #{attention_forward.5} parent=0 // loop_pre_header
    _
  $region3: #{attention_forward.5} parent=0 // loop_header
    %s11 = sphi 0, %s15
    %p12 = scmp.ge.s32.totalorder %s11, 4
    %s18 = sphi 0, %s37
    %s19 = sphi 0, %s33
    %s20 = sphi 0, %s29
    %s21 = sphi 0, %s18
    %s22 = sphi 0, %s19
    %s23 = sphi 0, %s20
    %s24 = sphi 0, %s21
    %s25 = sphi 0, %s22
    %s26 = sphi 0, %s23
    %s42 = sphi 0, %s44
    %s45 = sphi 0, %s42
    %s46 = sphi 0, %s45
    %s62 = sphi 0, %s46
    %s70 = sphi 0, %s72
    %s73 = sphi 0, %s70
    %s74 = sphi 0, %s73
    %s90 = sphi 0, %s74
    %s96 = sphi 0, %s98
    %s99 = sphi 0, %s96
    %s100 = sphi 0, %s99
    %s116 = sphi 0, %s100
    %s122 = sphi 0, %s124
    %s125 = sphi 0, %s122
    %s126 = sphi 0, %s125
    %s142 = sphi 0, %s126
    %s148 = sphi 0, %s150
    %s151 = sphi 0, %s148
    %s152 = sphi 0, %s151
    %s168 = sphi 0, %s152
    %s176 = sphi 0, %s178
    %s179 = sphi 0, %s176
    %s180 = sphi 0, %s179
    %s196 = sphi 0, %s180
  $region4: #{attention_forward.5} parent=0 // loop_header_branch
    %14 = sbr.rel (%p12) target = $region8
  $region5: #{attention_forward.5} parent=0 // loop_body
    %s16 = ssub.s32 %s11, 1
    %s17 = ssub.s32 %s11, 2
    %s27 = sadd.s32 1, %s20
    %p28 = scmp.ge.s32.totalorder %s27, 1
    %s29 = scalar_select %p28, 0, %s27
    %s30 = sadd.s32 1, %s19
    %s31 = scalar_select %p28, %s30, %s19
    %p32 = scmp.ge.s32.totalorder %s31, 1
    %s33 = scalar_select %p32, 0, %s31
    %s34 = sadd.s32 1, %s18
    %s35 = scalar_select %p32, %s34, %s18
    %p36 = scmp.ge.s32.totalorder %s35, 2
    %s37 = scalar_select %p36, 0, %s35
    %s38 = ssub.s32 %s18, %s37
    %s39 = ssub.s32 %s20, %s29
    %s40 = sor.u32 %s38, %s39
    %p41 = scmp.eq.s32.totalorder %s40, 0
    %s43 = sadd.s32 %s42, 1
    %s44 = scalar_select %p41, %s42, %s43
    %p47 = pneg %p41
    %p48 = scmp.eq.s32.totalorder %s11, 1
    %p49 = por %p47, %p48
    %p50 = scmp.ne.s32.totalorder %s42, %s45
    %p51 = scmp.eq.s32.totalorder %s11, 0
    %p52 = por %p50, %p51
    %p53 = scmp.ne.s32.totalorder %s42, %s45
    %p54 = scmp.eq.s32.totalorder %s16, 1
    %p55 = por %p53, %p54
    %p56 = scmp.ne.s32.totalorder %s45, %s46
    %p57 = scmp.eq.s32.totalorder %s16, 0
    %p58 = por %p56, %p57
    %p59 = scmp.ne.s32.totalorder %s45, %s46
    %p60 = scmp.eq.s32.totalorder %s17, 1
    %p61 = por %p59, %p60
    %p63 = scmp.ne.s32.totalorder %s46, %s62
    %p64 = scmp.eq.s32.totalorder %s17, 0
    %p65 = por %p63, %p64
    %s66 = ssub.s32 %s20, %s29
    %s67 = ssub.s32 %s19, %s33
    %s68 = sor.u32 %s66, %s67
    %p69 = scmp.eq.s32.totalorder %s68, 0
    %s71 = sadd.s32 %s70, 1
    %s72 = scalar_select %p69, %s70, %s71
    %p75 = pneg %p69
    %p76 = scmp.eq.s32.totalorder %s11, 1
    %p77 = por %p75, %p76
    %p78 = scmp.ne.s32.totalorder %s70, %s73
    %p79 = scmp.eq.s32.totalorder %s11, 0
    %p80 = por %p78, %p79
    %p81 = scmp.ne.s32.totalorder %s70, %s73
    %p82 = scmp.eq.s32.totalorder %s16, 1
    %p83 = por %p81, %p82
    %p84 = scmp.ne.s32.totalorder %s73, %s74
    %p85 = scmp.eq.s32.totalorder %s16, 0
    %p86 = por %p84, %p85
    %p87 = scmp.ne.s32.totalorder %s73, %s74
    %p88 = scmp.eq.s32.totalorder %s17, 1
    %p89 = por %p87, %p88
    %p91 = scmp.ne.s32.totalorder %s74, %s90
    %p92 = scmp.eq.s32.totalorder %s17, 0
    %p93 = por %p91, %p92
    %s94 = ssub.s32 %s19, %s33
    %p95 = scmp.eq.s32.totalorder %s94, 0
    %s97 = sadd.s32 %s96, 1
    %s98 = scalar_select %p95, %s96, %s97
    %p101 = pneg %p95
    %p102 = scmp.eq.s32.totalorder %s11, 1
    %p103 = por %p101, %p102
    %p104 = scmp.ne.s32.totalorder %s96, %s99
    %p105 = scmp.eq.s32.totalorder %s11, 0
    %p106 = por %p104, %p105
    %p107 = scmp.ne.s32.totalorder %s96, %s99
    %p108 = scmp.eq.s32.totalorder %s16, 1
    %p109 = por %p107, %p108
    %p110 = scmp.ne.s32.totalorder %s99, %s100
    %p111 = scmp.eq.s32.totalorder %s16, 0
    %p112 = por %p110, %p111
    %p113 = scmp.ne.s32.totalorder %s99, %s100
    %p114 = scmp.eq.s32.totalorder %s17, 1
    %p115 = por %p113, %p114
    %p117 = scmp.ne.s32.totalorder %s100, %s116
    %p118 = scmp.eq.s32.totalorder %s17, 0
    %p119 = por %p117, %p118
    %s120 = ssub.s32 %s19, %s33
    %p121 = scmp.eq.s32.totalorder %s120, 0
    %s123 = sadd.s32 %s122, 1
    %s124 = scalar_select %p121, %s122, %s123
    %p127 = pneg %p121
    %p128 = scmp.eq.s32.totalorder %s11, 1
    %p129 = por %p127, %p128
    %p130 = scmp.ne.s32.totalorder %s122, %s125
    %p131 = scmp.eq.s32.totalorder %s11, 0
    %p132 = por %p130, %p131
    %p133 = scmp.ne.s32.totalorder %s122, %s125
    %p134 = scmp.eq.s32.totalorder %s16, 1
    %p135 = por %p133, %p134
    %p136 = scmp.ne.s32.totalorder %s125, %s126
    %p137 = scmp.eq.s32.totalorder %s16, 0
    %p138 = por %p136, %p137
    %p139 = scmp.ne.s32.totalorder %s125, %s126
    %p140 = scmp.eq.s32.totalorder %s17, 1
    %p141 = por %p139, %p140
    %p143 = scmp.ne.s32.totalorder %s126, %s142
    %p144 = scmp.eq.s32.totalorder %s17, 0
    %p145 = por %p143, %p144
    %s146 = ssub.s32 %s19, %s33
    %p147 = scmp.eq.s32.totalorder %s146, 0
    %s149 = sadd.s32 %s148, 1
    %s150 = scalar_select %p147, %s148, %s149
    %p153 = pneg %p147
    %p154 = scmp.eq.s32.totalorder %s11, 1
    %p155 = por %p153, %p154
    %p156 = scmp.ne.s32.totalorder %s148, %s151
    %p157 = scmp.eq.s32.totalorder %s11, 0
    %p158 = por %p156, %p157
    %p159 = scmp.ne.s32.totalorder %s148, %s151
    %p160 = scmp.eq.s32.totalorder %s16, 1
    %p161 = por %p159, %p160
    %p162 = scmp.ne.s32.totalorder %s151, %s152
    %p163 = scmp.eq.s32.totalorder %s16, 0
    %p164 = por %p162, %p163
    %p165 = scmp.ne.s32.totalorder %s151, %s152
    %p166 = scmp.eq.s32.totalorder %s17, 1
    %p167 = por %p165, %p166
    %p169 = scmp.ne.s32.totalorder %s152, %s168
    %p170 = scmp.eq.s32.totalorder %s17, 0
    %p171 = por %p169, %p170
    %s172 = ssub.s32 %s18, %s37
    %s173 = ssub.s32 %s19, %s33
    %s174 = sor.u32 %s172, %s173
    %p175 = scmp.eq.s32.totalorder %s174, 0
    %s177 = sadd.s32 %s176, 1
    %s178 = scalar_select %p175, %s176, %s177
    %p181 = pneg %p175
    %p182 = scmp.eq.s32.totalorder %s11, 1
    %p183 = por %p181, %p182
    %p184 = scmp.ne.s32.totalorder %s176, %s179
    %p185 = scmp.eq.s32.totalorder %s11, 0
    %p186 = por %p184, %p185
    %p187 = scmp.ne.s32.totalorder %s176, %s179
    %p188 = scmp.eq.s32.totalorder %s16, 1
    %p189 = por %p187, %p188
    %p190 = scmp.ne.s32.totalorder %s179, %s180
    %p191 = scmp.eq.s32.totalorder %s16, 0
    %p192 = por %p190, %p191
    %p193 = scmp.ne.s32.totalorder %s179, %s180
    %p194 = scmp.eq.s32.totalorder %s17, 1
    %p195 = por %p193, %p194
    %p197 = scmp.ne.s32.totalorder %s180, %s196
    %p198 = scmp.eq.s32.totalorder %s17, 0
    %p199 = por %p197, %p198
    %p200 = scmp.le.s32.totalorder 1, %s11
    %p201 = scmp.lt.s32.totalorder %s11, 3
    %p202 = pnand %p200, %p201
    %p203 = pneg %p202
    // Predicated region
    $region9: #{attention_forward.5} parent=5 // pred_check
      _
    $region10: #{attention_forward.5} parent=5 // pred_check_branch
      %205 = sbr.rel (%p202) target = $region12
    $region11: #{attention_forward.5} parent=5 // pred_region
      %s206 = ssub.s32 %s11, 1
      // Predicated region
      $region13: #{attention_forward.5} parent=11 // pred_check
        %p207 = pneg %p86
      $region14: #{attention_forward.5} parent=11 // pred_check_branch
        %209 = sbr.rel (%p207) target = $region16
      $region15: #{attention_forward.5} parent=11 // pred_region
        %s210 = smul.u32 16, %s23
        %p211 = scmp.lt.s32.totalorder %s210, 15
        %s212 = scalar_select %p211, %s210, 15
        %p213 = scmp.lt.s32.totalorder %s22, 0
        %s214 = scalar_select %p213, %s22, 0
        %s215 = sadd.s32 %s214, %s212
        %s216 = smul.addr %s215, 4
        %s217 = scalar_lea.vmem %s1, %s216
        %s218 = smul.u32 16, %s23
      $region16: #{attention_forward.5} parent=11 // pred_fallthru
        _
      // Predicated region
      $region17: #{attention_forward.5} parent=11 // pred_check
        %p219 = pneg %p112
      $region18: #{attention_forward.5} parent=11 // pred_check_branch
        %221 = sbr.rel (%p219) target = $region20
      $region19: #{attention_forward.5} parent=11 // pred_region
        %p222 = scmp.lt.s32.totalorder %s22, 0
        %s223 = scalar_select %p222, %s22, 0
        %s224 = scalar_lea.vmem %s2, %s223
      $region20: #{attention_forward.5} parent=11 // pred_fallthru
        _
      // Predicated region
      $region21: #{attention_forward.5} parent=11 // pred_check
        %p225 = pneg %p138
      $region22: #{attention_forward.5} parent=11 // pred_check_branch
        %227 = sbr.rel (%p225) target = $region24
      $region23: #{attention_forward.5} parent=11 // pred_region
        %p228 = scmp.lt.s32.totalorder %s22, 0
        %s229 = scalar_select %p228, %s22, 0
        %s230 = scalar_lea.vmem %s3, %s229
      $region24: #{attention_forward.5} parent=11 // pred_fallthru
        _
      // Predicated region
      $region25: #{attention_forward.5} parent=11 // pred_check
        %p231 = pneg %p164
      $region26: #{attention_forward.5} parent=11 // pred_check_branch
        %233 = sbr.rel (%p231) target = $region28
      $region27: #{attention_forward.5} parent=11 // pred_region
        %p234 = scmp.lt.s32.totalorder %s22, 0
        %s235 = scalar_select %p234, %s22, 0
        %s236 = scalar_lea.vmem %s4, %s235
      $region28: #{attention_forward.5} parent=11 // pred_fallthru
        _
    $region12: #{attention_forward.5} parent=5 // pred_fallthru
      _
    %p237 = scmp.lt.s32.totalorder %s11, 2
    // Predicated region
    $region29: #{attention_forward.5} parent=5 // pred_check
      %p238 = pneg %p237
    $region30: #{attention_forward.5} parent=5 // pred_check_branch
      %240 = sbr.rel (%p238) target = $region32
    $region31: #{attention_forward.5} parent=5 // pred_region
      // Predicated region
      $region33: #{attention_forward.5} parent=31 // pred_check
        %p241 = pneg %p52
      $region34: #{attention_forward.5} parent=31 // pred_check_branch
        %243 = sbr.rel (%p241) target = $region36
      $region35: #{attention_forward.5} parent=31 // pred_region
        %s244 = smul.u32 32, %s18
        %p245 = scmp.lt.s32.totalorder %s244, 63
        %s246 = scalar_select %p245, %s244, 63
        %p247 = scmp.lt.s32.totalorder %s20, 0
        %s248 = scalar_select %p247, %s20, 0
        %s249 = sadd.s32 %s248, %s246
        %s250 = smul.addr %s249, 4
        %s251 = scalar_lea.vmem %s0, %s250
        %s252 = smul.u32 32, %s18
      $region36: #{attention_forward.5} parent=31 // pred_fallthru
        _
    $region32: #{attention_forward.5} parent=5 // pred_fallthru
      _
    %p253 = scmp.le.s32.totalorder 1, %s11
    %p254 = scmp.lt.s32.totalorder %s11, 3
    %p255 = pnand %p253, %p254
    %p256 = pneg %p255
    // Predicated region
    $region37: #{attention_forward.5} parent=5 // pred_check
      _
    $region38: #{attention_forward.5} parent=5 // pred_check_branch
      %258 = sbr.rel (%p255) target = $region40
    $region39: #{attention_forward.5} parent=5 // pred_region
      %s259 = ssub.s32 %s11, 1
      %s260 = smul.u32 32, %s21
      %p261 = scmp.lt.s32.totalorder %s260, 63
      %s262 = scalar_select %p261, %s260, 63
      %p263 = scmp.lt.s32.totalorder %s23, 0
      %s264 = scalar_select %p263, %s23, 0
      %s265 = sadd.s32 %s264, %s262
      %s266 = smul.addr %s265, 4
      %s267 = scalar_lea.vmem %s0, %s266
      %p268 = pneg %p58
      %p269 = pneg %p55
      %s270 = smul.u32 16, %s23
      %p271 = scmp.lt.s32.totalorder %s270, 15
      %s272 = scalar_select %p271, %s270, 15
      %p273 = scmp.lt.s32.totalorder %s22, 0
      %s274 = scalar_select %p273, %s22, 0
      %s275 = sadd.s32 %s274, %s272
      %s276 = smul.addr %s275, 4
      %s277 = scalar_lea.vmem %s1, %s276
      %p278 = pneg %p86
      %p279 = pneg %p83
      %p280 = scmp.lt.s32.totalorder %s22, 0
      %s281 = scalar_select %p280, %s22, 0
      %s282 = scalar_lea.vmem %s2, %s281
      %p283 = pneg %p112
      %p284 = pneg %p109
      %p285 = scmp.lt.s32.totalorder %s22, 0
      %s286 = scalar_select %p285, %s22, 0
      %s287 = scalar_lea.vmem %s3, %s286
      %p288 = pneg %p138
      %p289 = pneg %p135
      %p290 = scmp.lt.s32.totalorder %s22, 0
      %s291 = scalar_select %p290, %s22, 0
      %s292 = scalar_lea.vmem %s4, %s291
      %p293 = pneg %p164
      %p294 = pneg %p161
      %p295 = pneg %p192
      %p296 = pneg %p189
      %s297 = smul.u32 32, %s21
      %p298 = scmp.lt.s32.totalorder %s297, 63
      %s299 = scalar_select %p298, %s297, 63
      %p300 = scmp.lt.s32.totalorder %s22, 0
      %s301 = scalar_select %p300, %s22, 0
      %s302 = sadd.s32 %s301, %s299
      %s303 = smul.addr %s302, 8
      %s304 = scalar_lea.vmem %s5, %s303
      %s305 = smul.u32 32, %s21
      %p306 = scmp.lt.s32.totalorder %s305, 63
      %s307 = scalar_select %p306, %s305, 63
      %p308 = scmp.lt.s32.totalorder %s23, 0
      %s309 = scalar_select %p308, %s23, 0
      %s310 = sadd.s32 %s309, %s307
      %s311 = smul.addr %s310, 4
      %s312 = scalar_lea.vmem %s0, %s311
      %s313 = smul.u32 32, %s21
      %s314 = smul.u32 16, %s23
      %p315 = scmp.lt.s32.totalorder %s314, 15
      %s316 = scalar_select %p315, %s314, 15
      %p317 = scmp.lt.s32.totalorder %s22, 0
      %s318 = scalar_select %p317, %s22, 0
      %s319 = sadd.s32 %s318, %s316
      %s320 = smul.addr %s319, 4
      %s321 = scalar_lea.vmem %s1, %s320
      %s322 = smul.u32 16, %s23
      %p323 = scmp.lt.s32.totalorder %s22, 0
      %s324 = scalar_select %p323, %s22, 0
      %s325 = scalar_lea.vmem %s2, %s324
      %p326 = scmp.lt.s32.totalorder %s22, 0
      %s327 = scalar_select %p326, %s22, 0
      %s328 = scalar_lea.vmem %s3, %s327
      %p329 = scmp.lt.s32.totalorder %s22, 0
      %s330 = scalar_select %p329, %s22, 0
      %s331 = scalar_lea.vmem %s4, %s330
      %s332 = smul.u32 32, %s21
      %p333 = scmp.lt.s32.totalorder %s332, 63
      %s334 = scalar_select %p333, %s332, 63
      %p335 = scmp.lt.s32.totalorder %s22, 0
      %s336 = scalar_select %p335, %s22, 0
      %s337 = sadd.s32 %s336, %s334
      %s338 = smul.addr %s337, 8
      %s339 = scalar_lea.vmem %s5, %s338
      %s340 = smul.u32 32, %s21
      %p341 = scmp.eq.s32.totalorder %s23, 0
      // Predicated region
      $region41: #{attention_forward.5} parent=39 // pred_check
        %p342 = pneg %p341
      $region42: #{attention_forward.5} parent=39 // pred_check_branch
        %344 = sbr.rel (%p342) target = $region44
      $region43: #{attention_forward.5} parent=39 // pred_region
        %345 = vst [vmem:[#allocation2] sm:$0xff] 0.0
        %346 = vst [vmem:[#allocation2 + $0x8] sm:$0xff] 0.0
        %347 = vst [vmem:[#allocation2 + $0x10] sm:$0xff] 0.0
        %348 = vst [vmem:[#allocation2 + $0x18] sm:$0xff] 0.0
        %349 = vst [vmem:[#allocation2 + $0x20] sm:$0xff] 0.0
        %350 = vst [vmem:[#allocation2 + $0x28] sm:$0xff] 0.0
        %351 = vst [vmem:[#allocation2 + $0x30] sm:$0xff] 0.0
        %352 = vst [vmem:[#allocation2 + $0x38] sm:$0xff] 0.0
        %353 = vst [vmem:[#allocation2 + $0x40] sm:$0xff] 0.0
        %354 = vst [vmem:[#allocation2 + $0x48] sm:$0xff] 0.0
        %355 = vst [vmem:[#allocation2 + $0x50] sm:$0xff] 0.0
        %356 = vst [vmem:[#allocation2 + $0x58] sm:$0xff] 0.0
        %357 = vst [vmem:[#allocation2 + $0x60] sm:$0xff] 0.0
        %358 = vst [vmem:[#allocation2 + $0x68] sm:$0xff] 0.0
        %359 = vst [vmem:[#allocation2 + $0x70] sm:$0xff] 0.0
        %360 = vst [vmem:[#allocation2 + $0x78] sm:$0xff] 0.0
        %361 = vst [vmem:[#allocation2 + $0x80] sm:$0xff] 0.0
        %362 = vst [vmem:[#allocation2 + $0x88] sm:$0xff] 0.0
        %363 = vst [vmem:[#allocation2 + $0x90] sm:$0xff] 0.0
        %364 = vst [vmem:[#allocation2 + $0x98] sm:$0xff] 0.0
        %365 = vst [vmem:[#allocation2 + $0xa0] sm:$0xff] 0.0
        %366 = vst [vmem:[#allocation2 + $0xa8] sm:$0xff] 0.0
        %367 = vst [vmem:[#allocation2 + $0xb0] sm:$0xff] 0.0
        %368 = vst [vmem:[#allocation2 + $0xb8] sm:$0xff] 0.0
        %369 = vst [vmem:[#allocation2 + $0xc0] sm:$0xff] 0.0
        %370 = vst [vmem:[#allocation2 + $0xc8] sm:$0xff] 0.0
        %371 = vst [vmem:[#allocation2 + $0xd0] sm:$0xff] 0.0
        %372 = vst [vmem:[#allocation2 + $0xd8] sm:$0xff] 0.0
        %373 = vst [vmem:[#allocation2 + $0xe0] sm:$0xff] 0.0
        %374 = vst [vmem:[#allocation2 + $0xe8] sm:$0xff] 0.0
        %375 = vst [vmem:[#allocation2 + $0xf0] sm:$0xff] 0.0
        %376 = vst [vmem:[#allocation2 + $0xf8] sm:$0xff] 0.0
      $region44: #{attention_forward.5} parent=39 // pred_fallthru
        _
      %v377 = vld [vmem:[#allocation2] sm:$0xff]
      %v378 = vld [vmem:[#allocation2 + $0x8] sm:$0xff]
      %v379 = vld [vmem:[#allocation2 + $0x10] sm:$0xff]
      %v380 = vld [vmem:[#allocation2 + $0x18] sm:$0xff]
      %v381 = vld [vmem:[#allocation2 + $0x20] sm:$0xff]
      %v382 = vld [vmem:[#allocation2 + $0x28] sm:$0xff]
      %v383 = vld [vmem:[#allocation2 + $0x30] sm:$0xff]
      %v384 = vld [vmem:[#allocation2 + $0x38] sm:$0xff]
      %v385 = vld [vmem:[#allocation2 + $0x40] sm:$0xff]
      %v386 = vld [vmem:[#allocation2 + $0x48] sm:$0xff]
      %v387 = vld [vmem:[#allocation2 + $0x50] sm:$0xff]
      %v388 = vld [vmem:[#allocation2 + $0x58] sm:$0xff]
      %v389 = vld [vmem:[#allocation2 + $0x60] sm:$0xff]
      %v390 = vld [vmem:[#allocation2 + $0x68] sm:$0xff]
      %v391 = vld [vmem:[#allocation2 + $0x70] sm:$0xff]
      %v392 = vld [vmem:[#allocation2 + $0x78] sm:$0xff]
      %v393 = vld [vmem:[#allocation2 + $0x80] sm:$0xff]
      %v394 = vld [vmem:[#allocation2 + $0x88] sm:$0xff]
      %v395 = vld [vmem:[#allocation2 + $0x90] sm:$0xff]
      %v396 = vld [vmem:[#allocation2 + $0x98] sm:$0xff]
      %v397 = vld [vmem:[#allocation2 + $0xa0] sm:$0xff]
      %v398 = vld [vmem:[#allocation2 + $0xa8] sm:$0xff]
      %v399 = vld [vmem:[#allocation2 + $0xb0] sm:$0xff]
      %v400 = vld [vmem:[#allocation2 + $0xb8] sm:$0xff]
      %v401 = vld [vmem:[#allocation2 + $0xc0] sm:$0xff]
      %v402 = vld [vmem:[#allocation2 + $0xc8] sm:$0xff]
      %v403 = vld [vmem:[#allocation2 + $0xd0] sm:$0xff]
      %v404 = vld [vmem:[#allocation2 + $0xd8] sm:$0xff]
      %v405 = vld [vmem:[#allocation2 + $0xe0] sm:$0xff]
      %v406 = vld [vmem:[#allocation2 + $0xe8] sm:$0xff]
      %v407 = vld [vmem:[#allocation2 + $0xf0] sm:$0xff]
      %v408 = vld [vmem:[#allocation2 + $0xf8] sm:$0xff]
      %v409 = vld [vmem:[%s312] sm:$0xf]
      %v410 = vld [vmem:[%s312 + $0x4] sm:$0xf]
      %v411 = vld [vmem:[%s312 + $0x8] sm:$0xf]
      %v412 = vld [vmem:[%s312 + $0xc] sm:$0xf]
      %v413 = vld [vmem:[%s312 + $0x10] sm:$0xf]
      %v414 = vld [vmem:[%s312 + $0x14] sm:$0xf]
      %v415 = vld [vmem:[%s312 + $0x18] sm:$0xf]
      %v416 = vld [vmem:[%s312 + $0x1c] sm:$0xf]
      %v417 = vld [vmem:[%s312 + $0x20] sm:$0xf]
      %v418 = vld [vmem:[%s312 + $0x24] sm:$0xf]
      %v419 = vld [vmem:[%s312 + $0x28] sm:$0xf]
      %v420 = vld [vmem:[%s312 + $0x2c] sm:$0xf]
      %v421 = vld [vmem:[%s312 + $0x30] sm:$0xf]
      %v422 = vld [vmem:[%s312 + $0x34] sm:$0xf]
      %v423 = vld [vmem:[%s312 + $0x38] sm:$0xf]
      %v424 = vld [vmem:[%s312 + $0x3c] sm:$0xf]
      %v425 = vld [vmem:[%s312 + $0x40] sm:$0xf]
      %v426 = vld [vmem:[%s312 + $0x44] sm:$0xf]
      %v427 = vld [vmem:[%s312 + $0x48] sm:$0xf]
      %v428 = vld [vmem:[%s312 + $0x4c] sm:$0xf]
      %v429 = vld [vmem:[%s312 + $0x50] sm:$0xf]
      %v430 = vld [vmem:[%s312 + $0x54] sm:$0xf]
      %v431 = vld [vmem:[%s312 + $0x58] sm:$0xf]
      %v432 = vld [vmem:[%s312 + $0x5c] sm:$0xf]
      %v433 = vld [vmem:[%s312 + $0x60] sm:$0xf]
      %v434 = vld [vmem:[%s312 + $0x64] sm:$0xf]
      %v435 = vld [vmem:[%s312 + $0x68] sm:$0xf]
      %v436 = vld [vmem:[%s312 + $0x6c] sm:$0xf]
      %v437 = vld [vmem:[%s312 + $0x70] sm:$0xf]
      %v438 = vld [vmem:[%s312 + $0x74] sm:$0xf]
      %v439 = vld [vmem:[%s312 + $0x78] sm:$0xf]
      %v440 = vld [vmem:[%s312 + $0x7c] sm:$0xf]
      %v441 = vld [vmem:[%s321] sm:$0xf]
      %v442 = vld [vmem:[%s321 + $0x4] sm:$0xf]
      %v443 = vld [vmem:[%s321 + $0x8] sm:$0xf]
      %v444 = vld [vmem:[%s321 + $0xc] sm:$0xf]
      %v445 = vld [vmem:[%s321 + $0x10] sm:$0xf]
      %v446 = vld [vmem:[%s321 + $0x14] sm:$0xf]
      %v447 = vld [vmem:[%s321 + $0x18] sm:$0xf]
      %v448 = vld [vmem:[%s321 + $0x1c] sm:$0xf]
      %v449 = vld [vmem:[%s321 + $0x20] sm:$0xf]
      %v450 = vld [vmem:[%s321 + $0x24] sm:$0xf]
      %v451 = vld [vmem:[%s321 + $0x28] sm:$0xf]
      %v452 = vld [vmem:[%s321 + $0x2c] sm:$0xf]
      %v453 = vld [vmem:[%s321 + $0x30] sm:$0xf]
      %v454 = vld [vmem:[%s321 + $0x34] sm:$0xf]
      %v455 = vld [vmem:[%s321 + $0x38] sm:$0xf]
      %v456 = vld [vmem:[%s321 + $0x3c] sm:$0xf]
      %v489 = vunpack.c.l.b16 %v409
      %v490 = vunpack.c.l.b16 %v410
      %v491 = vunpack.c.l.b16 %v411
      %v492 = vunpack.c.l.b16 %v412
      %v493 = vunpack.c.l.b16 %v413
      %v494 = vunpack.c.l.b16 %v414
      %v495 = vunpack.c.l.b16 %v415
      %v496 = vunpack.c.l.b16 %v416
      %v497 = vunpack.c.l.b16 %v417
      %v498 = vunpack.c.l.b16 %v418
      %v499 = vunpack.c.l.b16 %v419
      %v500 = vunpack.c.l.b16 %v420
      %v501 = vunpack.c.l.b16 %v421
      %v502 = vunpack.c.l.b16 %v422
      %v503 = vunpack.c.l.b16 %v423
      %v504 = vunpack.c.l.b16 %v424
      %v505 = vunpack.c.l.b16 %v425
      %v506 = vunpack.c.l.b16 %v426
      %v507 = vunpack.c.l.b16 %v427
      %v508 = vunpack.c.l.b16 %v428
      %v509 = vunpack.c.l.b16 %v429
      %v510 = vunpack.c.l.b16 %v430
      %v511 = vunpack.c.l.b16 %v431
      %v512 = vunpack.c.l.b16 %v432
      %v513 = vunpack.c.l.b16 %v433
      %v514 = vunpack.c.l.b16 %v434
      %v515 = vunpack.c.l.b16 %v435
      %v516 = vunpack.c.l.b16 %v436
      %v517 = vunpack.c.l.b16 %v437
      %v518 = vunpack.c.l.b16 %v438
      %v519 = vunpack.c.l.b16 %v439
      %v520 = vunpack.c.l.b16 %v440
      %v521 = vpack.c.b16 %v490, %v489
      %v522 = vpack.c.b16 %v492, %v491
      %v523 = vpack.c.b16 %v494, %v493
      %v524 = vpack.c.b16 %v496, %v495
      %v525 = vpack.c.b16 %v498, %v497
      %v526 = vpack.c.b16 %v500, %v499
      %v527 = vpack.c.b16 %v502, %v501
      %v528 = vpack.c.b16 %v504, %v503
      %v529 = vpack.c.b16 %v506, %v505
      %v530 = vpack.c.b16 %v508, %v507
      %v531 = vpack.c.b16 %v510, %v509
      %v532 = vpack.c.b16 %v512, %v511
      %v533 = vpack.c.b16 %v514, %v513
      %v534 = vpack.c.b16 %v516, %v515
      %v535 = vpack.c.b16 %v518, %v517
      %v536 = vpack.c.b16 %v520, %v519
      %v569 = vunpack.c.l.b16 %v441
      %v570 = vunpack.c.l.b16 %v442
      %v571 = vunpack.c.l.b16 %v443
      %v572 = vunpack.c.l.b16 %v444
      %v573 = vunpack.c.l.b16 %v445
      %v574 = vunpack.c.l.b16 %v446
      %v575 = vunpack.c.l.b16 %v447
      %v576 = vunpack.c.l.b16 %v448
      %v577 = vunpack.c.l.b16 %v449
      %v578 = vunpack.c.l.b16 %v450
      %v579 = vunpack.c.l.b16 %v451
      %v580 = vunpack.c.l.b16 %v452
      %v581 = vunpack.c.l.b16 %v453
      %v582 = vunpack.c.l.b16 %v454
      %v583 = vunpack.c.l.b16 %v455
      %v584 = vunpack.c.l.b16 %v456
      %v585 = vpack.c.b16 %v570, %v569
      %v586 = vpack.c.b16 %v572, %v571
      %v587 = vpack.c.b16 %v574, %v573
      %v588 = vpack.c.b16 %v576, %v575
      %v589 = vpack.c.b16 %v578, %v577
      %v590 = vpack.c.b16 %v580, %v579
      %v591 = vpack.c.b16 %v582, %v581
      %v592 = vpack.c.b16 %v584, %v583
      %601 = vmatpush.bf16.msra.mxu0 %v592
      %602 = vmatpush.bf16.msra.mxu0 %v591
      %603 = vmatpush.bf16.msra.mxu0 %v590
      %604 = vmatpush.bf16.msra.mxu0 %v589
      %605 = vmatpush.bf16.msra.mxu0 %v588
      %606 = vmatpush.bf16.msra.mxu0 %v587
      %607 = vmatpush.bf16.msra.mxu0 %v586
      %608 = vmatpush.bf16.msra.mxu0 %v585
      %609 = vmatmul.bf16.gmra.mxu0 %v521
      %v610 = vpop.f32.mrf.mxu0
      %v611 = vadd.f32 0.0, %v610
      %v612 = vpop.f32.mrf.mxu0
      %v613 = vadd.f32 0.0, %v612
      %614 = vmatmul.bf16.gmra.mxu0 %v522
      %v615 = vpop.f32.mrf.mxu0
      %v616 = vadd.f32 0.0, %v615
      %v617 = vpop.f32.mrf.mxu0
      %v618 = vadd.f32 0.0, %v617
      %619 = vmatmul.bf16.gmra.mxu0 %v523
      %v620 = vpop.f32.mrf.mxu0
      %v621 = vadd.f32 0.0, %v620
      %v622 = vpop.f32.mrf.mxu0
      %v623 = vadd.f32 0.0, %v622
      %624 = vmatmul.bf16.gmra.mxu0 %v524
      %v625 = vpop.f32.mrf.mxu0
      %v626 = vadd.f32 0.0, %v625
      %v627 = vpop.f32.mrf.mxu0
      %v628 = vadd.f32 0.0, %v627
      %629 = vmatmul.bf16.gmra.mxu0 %v525
      %v630 = vpop.f32.mrf.mxu0
      %v631 = vadd.f32 0.0, %v630
      %v632 = vpop.f32.mrf.mxu0
      %v633 = vadd.f32 0.0, %v632
      %634 = vmatmul.bf16.gmra.mxu0 %v526
      %v635 = vpop.f32.mrf.mxu0
      %v636 = vadd.f32 0.0, %v635
      %v637 = vpop.f32.mrf.mxu0
      %v638 = vadd.f32 0.0, %v637
      %639 = vmatmul.bf16.gmra.mxu0 %v527
      %v640 = vpop.f32.mrf.mxu0
      %v641 = vadd.f32 0.0, %v640
      %v642 = vpop.f32.mrf.mxu0
      %v643 = vadd.f32 0.0, %v642
      %644 = vmatmul.bf16.gmra.mxu0 %v528
      %v645 = vpop.f32.mrf.mxu0
      %v646 = vadd.f32 0.0, %v645
      %v647 = vpop.f32.mrf.mxu0
      %v648 = vadd.f32 0.0, %v647
      %649 = vmatmul.bf16.gmra.mxu0 %v529
      %v650 = vpop.f32.mrf.mxu0
      %v651 = vadd.f32 0.0, %v650
      %v652 = vpop.f32.mrf.mxu0
      %v653 = vadd.f32 0.0, %v652
      %654 = vmatmul.bf16.gmra.mxu0 %v530
      %v655 = vpop.f32.mrf.mxu0
      %v656 = vadd.f32 0.0, %v655
      %v657 = vpop.f32.mrf.mxu0
      %v658 = vadd.f32 0.0, %v657
      %659 = vmatmul.bf16.gmra.mxu0 %v531
      %v660 = vpop.f32.mrf.mxu0
      %v661 = vadd.f32 0.0, %v660
      %v662 = vpop.f32.mrf.mxu0
      %v663 = vadd.f32 0.0, %v662
      %664 = vmatmul.bf16.gmra.mxu0 %v532
      %v665 = vpop.f32.mrf.mxu0
      %v666 = vadd.f32 0.0, %v665
      %v667 = vpop.f32.mrf.mxu0
      %v668 = vadd.f32 0.0, %v667
      %669 = vmatmul.bf16.gmra.mxu0 %v533
      %v670 = vpop.f32.mrf.mxu0
      %v671 = vadd.f32 0.0, %v670
      %v672 = vpop.f32.mrf.mxu0
      %v673 = vadd.f32 0.0, %v672
      %674 = vmatmul.bf16.gmra.mxu0 %v534
      %v675 = vpop.f32.mrf.mxu0
      %v676 = vadd.f32 0.0, %v675
      %v677 = vpop.f32.mrf.mxu0
      %v678 = vadd.f32 0.0, %v677
      %679 = vmatmul.bf16.gmra.mxu0 %v535
      %v680 = vpop.f32.mrf.mxu0
      %v681 = vadd.f32 0.0, %v680
      %v682 = vpop.f32.mrf.mxu0
      %v683 = vadd.f32 0.0, %v682
      %684 = vmatmul.bf16.gmra.mxu0 %v536
      %v685 = vpop.f32.mrf.mxu0
      %v686 = vadd.f32 0.0, %v685
      %v687 = vpop.f32.mrf.mxu0
      %v688 = vadd.f32 0.0, %v687
      %689 = vdwg.mxu0
      %v690 = vadd.f32 %v377, %v611
      %v691 = vadd.f32 %v378, %v613
      %v692 = vadd.f32 %v379, %v616
      %v693 = vadd.f32 %v380, %v618
      %v694 = vadd.f32 %v381, %v621
      %v695 = vadd.f32 %v382, %v623
      %v696 = vadd.f32 %v383, %v626
      %v697 = vadd.f32 %v384, %v628
      %v698 = vadd.f32 %v385, %v631
      %v699 = vadd.f32 %v386, %v633
      %v700 = vadd.f32 %v387, %v636
      %v701 = vadd.f32 %v388, %v638
      %v702 = vadd.f32 %v389, %v641
      %v703 = vadd.f32 %v390, %v643
      %v704 = vadd.f32 %v391, %v646
      %v705 = vadd.f32 %v392, %v648
      %v706 = vadd.f32 %v393, %v651
      %v707 = vadd.f32 %v394, %v653
      %v708 = vadd.f32 %v395, %v656
      %v709 = vadd.f32 %v396, %v658
      %v710 = vadd.f32 %v397, %v661
      %v711 = vadd.f32 %v398, %v663
      %v712 = vadd.f32 %v399, %v666
      %v713 = vadd.f32 %v400, %v668
      %v714 = vadd.f32 %v401, %v671
      %v715 = vadd.f32 %v402, %v673
      %v716 = vadd.f32 %v403, %v676
      %v717 = vadd.f32 %v404, %v678
      %v718 = vadd.f32 %v405, %v681
      %v719 = vadd.f32 %v406, %v683
      %v720 = vadd.f32 %v407, %v686
      %v721 = vadd.f32 %v408, %v688
      %722 = vst [vmem:[#allocation2] sm:$0xff] %v690
      %723 = vst [vmem:[#allocation2 + $0x8] sm:$0xff] %v691
      %724 = vst [vmem:[#allocation2 + $0x10] sm:$0xff] %v692
      %725 = vst [vmem:[#allocation2 + $0x18] sm:$0xff] %v693
      %726 = vst [vmem:[#allocation2 + $0x20] sm:$0xff] %v694
      %727 = vst [vmem:[#allocation2 + $0x28] sm:$0xff] %v695
      %728 = vst [vmem:[#allocation2 + $0x30] sm:$0xff] %v696
      %729 = vst [vmem:[#allocation2 + $0x38] sm:$0xff] %v697
      %730 = vst [vmem:[#allocation2 + $0x40] sm:$0xff] %v698
      %731 = vst [vmem:[#allocation2 + $0x48] sm:$0xff] %v699
      %732 = vst [vmem:[#allocation2 + $0x50] sm:$0xff] %v700
      %733 = vst [vmem:[#allocation2 + $0x58] sm:$0xff] %v701
      %734 = vst [vmem:[#allocation2 + $0x60] sm:$0xff] %v702
      %735 = vst [vmem:[#allocation2 + $0x68] sm:$0xff] %v703
      %736 = vst [vmem:[#allocation2 + $0x70] sm:$0xff] %v704
      %737 = vst [vmem:[#allocation2 + $0x78] sm:$0xff] %v705
      %738 = vst [vmem:[#allocation2 + $0x80] sm:$0xff] %v706
      %739 = vst [vmem:[#allocation2 + $0x88] sm:$0xff] %v707
      %740 = vst [vmem:[#allocation2 + $0x90] sm:$0xff] %v708
      %741 = vst [vmem:[#allocation2 + $0x98] sm:$0xff] %v709
      %742 = vst [vmem:[#allocation2 + $0xa0] sm:$0xff] %v710
      %743 = vst [vmem:[#allocation2 + $0xa8] sm:$0xff] %v711
      %744 = vst [vmem:[#allocation2 + $0xb0] sm:$0xff] %v712
      %745 = vst [vmem:[#allocation2 + $0xb8] sm:$0xff] %v713
      %746 = vst [vmem:[#allocation2 + $0xc0] sm:$0xff] %v714
      %747 = vst [vmem:[#allocation2 + $0xc8] sm:$0xff] %v715
      %748 = vst [vmem:[#allocation2 + $0xd0] sm:$0xff] %v716
      %749 = vst [vmem:[#allocation2 + $0xd8] sm:$0xff] %v717
      %750 = vst [vmem:[#allocation2 + $0xe0] sm:$0xff] %v718
      %751 = vst [vmem:[#allocation2 + $0xe8] sm:$0xff] %v719
      %752 = vst [vmem:[#allocation2 + $0xf0] sm:$0xff] %v720
      %753 = vst [vmem:[#allocation2 + $0xf8] sm:$0xff] %v721
      // Predicated region
      $region45: #{attention_forward.5} parent=39 // pred_check
        %p754 = pneg %p341
      $region46: #{attention_forward.5} parent=39 // pred_check_branch
        %756 = sbr.rel (%p754) target = $region48
      $region47: #{attention_forward.5} parent=39 // pred_region
        %v757 = vld [vmem:[#allocation2] sm:$0xff]
        %v758 = vld [vmem:[#allocation2 + $0x8] sm:$0xff]
        %v759 = vld [vmem:[#allocation2 + $0x10] sm:$0xff]
        %v760 = vld [vmem:[#allocation2 + $0x18] sm:$0xff]
        %v761 = vld [vmem:[#allocation2 + $0x20] sm:$0xff]
        %v762 = vld [vmem:[#allocation2 + $0x28] sm:$0xff]
        %v763 = vld [vmem:[#allocation2 + $0x30] sm:$0xff]
        %v764 = vld [vmem:[#allocation2 + $0x38] sm:$0xff]
        %v765 = vld [vmem:[#allocation2 + $0x40] sm:$0xff]
        %v766 = vld [vmem:[#allocation2 + $0x48] sm:$0xff]
        %v767 = vld [vmem:[#allocation2 + $0x50] sm:$0xff]
        %v768 = vld [vmem:[#allocation2 + $0x58] sm:$0xff]
        %v769 = vld [vmem:[#allocation2 + $0x60] sm:$0xff]
        %v770 = vld [vmem:[#allocation2 + $0x68] sm:$0xff]
        %v771 = vld [vmem:[#allocation2 + $0x70] sm:$0xff]
        %v772 = vld [vmem:[#allocation2 + $0x78] sm:$0xff]
        %v773 = vld [vmem:[#allocation2 + $0x80] sm:$0xff]
        %v774 = vld [vmem:[#allocation2 + $0x88] sm:$0xff]
        %v775 = vld [vmem:[#allocation2 + $0x90] sm:$0xff]
        %v776 = vld [vmem:[#allocation2 + $0x98] sm:$0xff]
        %v777 = vld [vmem:[#allocation2 + $0xa0] sm:$0xff]
        %v778 = vld [vmem:[#allocation2 + $0xa8] sm:$0xff]
        %v779 = vld [vmem:[#allocation2 + $0xb0] sm:$0xff]
        %v780 = vld [vmem:[#allocation2 + $0xb8] sm:$0xff]
        %v781 = vld [vmem:[#allocation2 + $0xc0] sm:$0xff]
        %v782 = vld [vmem:[#allocation2 + $0xc8] sm:$0xff]
        %v783 = vld [vmem:[#allocation2 + $0xd0] sm:$0xff]
        %v784 = vld [vmem:[#allocation2 + $0xd8] sm:$0xff]
        %v785 = vld [vmem:[#allocation2 + $0xe0] sm:$0xff]
        %v786 = vld [vmem:[#allocation2 + $0xe8] sm:$0xff]
        %v787 = vld [vmem:[#allocation2 + $0xf0] sm:$0xff]
        %v788 = vld [vmem:[#allocation2 + $0xf8] sm:$0xff]
        %v789 = vld [vmem:[%s325] sm:$0x1]
        %v791 = vperm.slane %v789, 0
        %v793 = vadd.f32 %v757, %v791
        %v794 = vadd.f32 %v758, %v791
        %v795 = vadd.f32 %v759, %v791
        %v796 = vadd.f32 %v760, %v791
        %v797 = vadd.f32 %v761, %v791
        %v798 = vadd.f32 %v762, %v791
        %v799 = vadd.f32 %v763, %v791
        %v800 = vadd.f32 %v764, %v791
        %v801 = vadd.f32 %v765, %v791
        %v802 = vadd.f32 %v766, %v791
        %v803 = vadd.f32 %v767, %v791
        %v804 = vadd.f32 %v768, %v791
        %v805 = vadd.f32 %v769, %v791
        %v806 = vadd.f32 %v770, %v791
        %v807 = vadd.f32 %v771, %v791
        %v808 = vadd.f32 %v772, %v791
        %v809 = vadd.f32 %v773, %v791
        %v810 = vadd.f32 %v774, %v791
        %v811 = vadd.f32 %v775, %v791
        %v812 = vadd.f32 %v776, %v791
        %v813 = vadd.f32 %v777, %v791
        %v814 = vadd.f32 %v778, %v791
        %v815 = vadd.f32 %v779, %v791
        %v816 = vadd.f32 %v780, %v791
        %v817 = vadd.f32 %v781, %v791
        %v818 = vadd.f32 %v782, %v791
        %v819 = vadd.f32 %v783, %v791
        %v820 = vadd.f32 %v784, %v791
        %v821 = vadd.f32 %v785, %v791
        %v822 = vadd.f32 %v786, %v791
        %v823 = vadd.f32 %v787, %v791
        %v824 = vadd.f32 %v788, %v791
        %825 = vst [vmem:[%s339] sm:$0xff] %v793
        %826 = vst [vmem:[%s339 + $0x8] sm:$0xff] %v794
        %827 = vst [vmem:[%s339 + $0x10] sm:$0xff] %v795
        %828 = vst [vmem:[%s339 + $0x18] sm:$0xff] %v796
        %829 = vst [vmem:[%s339 + $0x20] sm:$0xff] %v797
        %830 = vst [vmem:[%s339 + $0x28] sm:$0xff] %v798
        %831 = vst [vmem:[%s339 + $0x30] sm:$0xff] %v799
        %832 = vst [vmem:[%s339 + $0x38] sm:$0xff] %v800
        %833 = vst [vmem:[%s339 + $0x40] sm:$0xff] %v801
        %834 = vst [vmem:[%s339 + $0x48] sm:$0xff] %v802
        %835 = vst [vmem:[%s339 + $0x50] sm:$0xff] %v803
        %836 = vst [vmem:[%s339 + $0x58] sm:$0xff] %v804
        %837 = vst [vmem:[%s339 + $0x60] sm:$0xff] %v805
        %838 = vst [vmem:[%s339 + $0x68] sm:$0xff] %v806
        %839 = vst [vmem:[%s339 + $0x70] sm:$0xff] %v807
        %840 = vst [vmem:[%s339 + $0x78] sm:$0xff] %v808
        %841 = vst [vmem:[%s339 + $0x80] sm:$0xff] %v809
        %842 = vst [vmem:[%s339 + $0x88] sm:$0xff] %v810
        %843 = vst [vmem:[%s339 + $0x90] sm:$0xff] %v811
        %844 = vst [vmem:[%s339 + $0x98] sm:$0xff] %v812
        %845 = vst [vmem:[%s339 + $0xa0] sm:$0xff] %v813
        %846 = vst [vmem:[%s339 + $0xa8] sm:$0xff] %v814
        %847 = vst [vmem:[%s339 + $0xb0] sm:$0xff] %v815
        %848 = vst [vmem:[%s339 + $0xb8] sm:$0xff] %v816
        %849 = vst [vmem:[%s339 + $0xc0] sm:$0xff] %v817
        %850 = vst [vmem:[%s339 + $0xc8] sm:$0xff] %v818
        %851 = vst [vmem:[%s339 + $0xd0] sm:$0xff] %v819
        %852 = vst [vmem:[%s339 + $0xd8] sm:$0xff] %v820
        %853 = vst [vmem:[%s339 + $0xe0] sm:$0xff] %v821
        %854 = vst [vmem:[%s339 + $0xe8] sm:$0xff] %v822
        %855 = vst [vmem:[%s339 + $0xf0] sm:$0xff] %v823
        %856 = vst [vmem:[%s339 + $0xf8] sm:$0xff] %v824
      $region48: #{attention_forward.5} parent=39 // pred_fallthru
        _
      %s857 = smul.u32 32, %s21
      %p858 = scmp.lt.s32.totalorder %s857, 63
      %s859 = scalar_select %p858, %s857, 63
      %p860 = scmp.lt.s32.totalorder %s22, 0
      %s861 = scalar_select %p860, %s22, 0
      %s862 = sadd.s32 %s861, %s859
      %s863 = smul.addr %s862, 8
      %s864 = scalar_lea.vmem %s5, %s863
      // Predicated region
      $region49: #{attention_forward.5} parent=39 // pred_check
        %p865 = pneg %p189
      $region50: #{attention_forward.5} parent=39 // pred_check_branch
        %867 = sbr.rel (%p865) target = $region52
      $region51: #{attention_forward.5} parent=39 // pred_region
        %s868 = smul.u32 32, %s21
      $region52: #{attention_forward.5} parent=39 // pred_fallthru
        _
    $region40: #{attention_forward.5} parent=5 // pred_fallthru
      _
    %p869 = scmp.le.s32.totalorder 2, %s11
    // Predicated region
    $region53: #{attention_forward.5} parent=5 // pred_check
      %p870 = pneg %p869
    $region54: #{attention_forward.5} parent=5 // pred_check_branch
      %872 = sbr.rel (%p870) target = $region56
    $region55: #{attention_forward.5} parent=5 // pred_region
      %s873 = ssub.s32 %s11, 2
      // Predicated region
      $region57: #{attention_forward.5} parent=55 // pred_check
        %p874 = pneg %p195
      $region58: #{attention_forward.5} parent=55 // pred_check_branch
        %876 = sbr.rel (%p874) target = $region60
      $region59: #{attention_forward.5} parent=55 // pred_region
        %s877 = smul.u32 32, %s24
        %p878 = scmp.lt.s32.totalorder %s877, 63
        %s879 = scalar_select %p878, %s877, 63
        %p880 = scmp.lt.s32.totalorder %s25, 0
        %s881 = scalar_select %p880, %s25, 0
        %s882 = sadd.s32 %s881, %s879
        %s883 = smul.addr %s882, 8
        %s884 = scalar_lea.vmem %s5, %s883
      $region60: #{attention_forward.5} parent=55 // pred_fallthru
        _
    $region56: #{attention_forward.5} parent=5 // pred_fallthru
      _
  $region6: #{attention_forward.5} parent=0 // loop_footer
    %s15 = sadd.s32 1, %s11
  $region7: #{attention_forward.5} parent=0 // loop_footer_branch
    %10 = sbr.rel target = $region3
  $region8: #{attention_forward.5} parent=0 // loop_exit
    _

// kernel: attention_forward.8
$region0: #{attention_forward.8}
  #allocation0 [shape = 'u32[]', space=smem, size = 0x4, offset = 0x4, fixed_abs, tag = 'smem constant byte address 0x4 - core index']
  #allocation1 [shape = 'u32[72,128]{1,0:T(1,128)}', space=vmem, size = 0x9000, scoped, tag = 'internal scratch']
  #allocation2 [shape = 'f32[2,128,1]{2,1,0:T(8,128)}', space=vmem, size = 0x20000, scoped, tag = 'scratch operand']
  #allocation3 [shape = 'f32[2,128,1]{2,1,0:T(8,128)}', space=vmem, size = 0x20000, scoped, tag = 'scratch operand']
  #allocation4 [shape = 'f32[2,128,32]{2,1,0:T(8,128)}', space=vmem, size = 0x20000, scoped, tag = 'scratch operand']
  %s0 = inlined_call_operand.vmem [shape: bf16[2,2,256,32], index: 0, kind: input, shape index: {}]
  %s1 = inlined_call_operand.vmem [shape: bf16[2,2,64,32], index: 1, kind: input, shape index: {}]
  %s2 = inlined_call_operand.vmem [shape: bf16[2,2,64,32], index: 2, kind: input, shape index: {}]
  %s3 = inlined_call_operand.vmem [shape: f32[2,256,64], index: 3, kind: output, shape index: {}]
  %s4 = sld [smem:[#allocation0]]
  $region94: #{attention_forward.8} parent=0
    _
  %s6 = ssub.s32 1, %s4
  %s7 = scalar_select 0, %s6, %s4
  $region1: #{attention_forward.8} parent=0
    #allocation5 [shape = 'u8[131072]{0}', space=vmem, size = 0x20000, scoped, tag = 'input window, operand 0']
    loop: start=0, step=1, limit=6
    $region2: #{attention_forward.8} parent=1 // loop_pre_header
      _
    $region3: #{attention_forward.8} parent=1 // loop_header
      %s9 = sphi 0, %s13
      %p10 = scmp.ge.s32.totalorder %s9, 6
      %s16 = sphi 0, %s35
      %s17 = sphi 0, %s31
      %s18 = sphi 0, %s27
      %s19 = sphi 0, %s16
      %s20 = sphi 0, %s17
      %s21 = sphi 0, %s18
      %s22 = sphi 0, %s19
      %s23 = sphi 0, %s20
      %s24 = sphi 0, %s21
      %s40 = sphi 0, %s42
      %s43 = sphi 0, %s40
      %s44 = sphi 0, %s43
      %s60 = sphi 0, %s44
      %s68 = sphi 0, %s70
      %s71 = sphi 0, %s68
      %s72 = sphi 0, %s71
      %s88 = sphi 0, %s72
      %s96 = sphi 0, %s98
      %s99 = sphi 0, %s96
      %s100 = sphi 0, %s99
      %s116 = sphi 0, %s100
      %s124 = sphi 0, %s126
      %s127 = sphi 0, %s124
      %s128 = sphi 0, %s127
      %s144 = sphi 0, %s128
    $region4: #{attention_forward.8} parent=1 // loop_header_branch
      %12 = sbr.rel (%p10) target = $region8
    $region5: #{attention_forward.8} parent=1 // loop_body
      %s14 = ssub.s32 %s9, 1
      %s15 = ssub.s32 %s9, 2
      %s25 = sadd.s32 1, %s18
      %p26 = scmp.ge.s32.totalorder %s25, 1
      %s27 = scalar_select %p26, 0, %s25
      %s28 = sadd.s32 1, %s17
      %s29 = scalar_select %p26, %s28, %s17
      %p30 = scmp.ge.s32.totalorder %s29, 2
      %s31 = scalar_select %p30, 0, %s29
      %s32 = sadd.s32 1, %s16
      %s33 = scalar_select %p30, %s32, %s16
      %p34 = scmp.ge.s32.totalorder %s33, 2
      %s35 = scalar_select %p34, 0, %s33
      %s36 = ssub.s32 %s16, %s35
      %s37 = ssub.s32 %s17, %s31
      %s38 = sor.u32 %s36, %s37
      %p39 = scmp.eq.s32.totalorder %s38, 0
      %s41 = sadd.s32 %s40, 1
      %s42 = scalar_select %p39, %s40, %s41
      %p45 = pneg %p39
      %p46 = scmp.eq.s32.totalorder %s9, 3
      %p47 = por %p45, %p46
      %p48 = scmp.ne.s32.totalorder %s40, %s43
      %p49 = scmp.eq.s32.totalorder %s9, 0
      %p50 = por %p48, %p49
      %p51 = scmp.ne.s32.totalorder %s40, %s43
      %p52 = scmp.eq.s32.totalorder %s14, 3
      %p53 = por %p51, %p52
      %p54 = scmp.ne.s32.totalorder %s43, %s44
      %p55 = scmp.eq.s32.totalorder %s14, 0
      %p56 = por %p54, %p55
      %p57 = scmp.ne.s32.totalorder %s43, %s44
      %p58 = scmp.eq.s32.totalorder %s15, 3
      %p59 = por %p57, %p58
      %p61 = scmp.ne.s32.totalorder %s44, %s60
      %p62 = scmp.eq.s32.totalorder %s15, 0
      %p63 = por %p61, %p62
      %s64 = ssub.s32 %s16, %s35
      %s65 = ssub.s32 %s18, %s27
      %s66 = sor.u32 %s64, %s65
      %p67 = scmp.eq.s32.totalorder %s66, 0
      %s69 = sadd.s32 %s68, 1
      %s70 = scalar_select %p67, %s68, %s69
      %p73 = pneg %p67
      %p74 = scmp.eq.s32.totalorder %s9, 3
      %p75 = por %p73, %p74
      %p76 = scmp.ne.s32.totalorder %s68, %s71
      %p77 = scmp.eq.s32.totalorder %s9, 0
      %p78 = por %p76, %p77
      %p79 = scmp.ne.s32.totalorder %s68, %s71
      %p80 = scmp.eq.s32.totalorder %s14, 3
      %p81 = por %p79, %p80
      %p82 = scmp.ne.s32.totalorder %s71, %s72
      %p83 = scmp.eq.s32.totalorder %s14, 0
      %p84 = por %p82, %p83
      %p85 = scmp.ne.s32.totalorder %s71, %s72
      %p86 = scmp.eq.s32.totalorder %s15, 3
      %p87 = por %p85, %p86
      %p89 = scmp.ne.s32.totalorder %s72, %s88
      %p90 = scmp.eq.s32.totalorder %s15, 0
      %p91 = por %p89, %p90
      %s92 = ssub.s32 %s16, %s35
      %s93 = ssub.s32 %s18, %s27
      %s94 = sor.u32 %s92, %s93
      %p95 = scmp.eq.s32.totalorder %s94, 0
      %s97 = sadd.s32 %s96, 1
      %s98 = scalar_select %p95, %s96, %s97
      %p101 = pneg %p95
      %p102 = scmp.eq.s32.totalorder %s9, 3
      %p103 = por %p101, %p102
      %p104 = scmp.ne.s32.totalorder %s96, %s99
      %p105 = scmp.eq.s32.totalorder %s9, 0
      %p106 = por %p104, %p105
      %p107 = scmp.ne.s32.totalorder %s96, %s99
      %p108 = scmp.eq.s32.totalorder %s14, 3
      %p109 = por %p107, %p108
      %p110 = scmp.ne.s32.totalorder %s99, %s100
      %p111 = scmp.eq.s32.totalorder %s14, 0
      %p112 = por %p110, %p111
      %p113 = scmp.ne.s32.totalorder %s99, %s100
      %p114 = scmp.eq.s32.totalorder %s15, 3
      %p115 = por %p113, %p114
      %p117 = scmp.ne.s32.totalorder %s100, %s116
      %p118 = scmp.eq.s32.totalorder %s15, 0
      %p119 = por %p117, %p118
      %s120 = ssub.s32 %s16, %s35
      %s121 = ssub.s32 %s17, %s31
      %s122 = sor.u32 %s120, %s121
      %p123 = scmp.eq.s32.totalorder %s122, 0
      %s125 = sadd.s32 %s124, 1
      %s126 = scalar_select %p123, %s124, %s125
      %p129 = pneg %p123
      %p130 = scmp.eq.s32.totalorder %s9, 3
      %p131 = por %p129, %p130
      %p132 = scmp.ne.s32.totalorder %s124, %s127
      %p133 = scmp.eq.s32.totalorder %s9, 0
      %p134 = por %p132, %p133
      %p135 = scmp.ne.s32.totalorder %s124, %s127
      %p136 = scmp.eq.s32.totalorder %s14, 3
      %p137 = por %p135, %p136
      %p138 = scmp.ne.s32.totalorder %s127, %s128
      %p139 = scmp.eq.s32.totalorder %s14, 0
      %p140 = por %p138, %p139
      %p141 = scmp.ne.s32.totalorder %s127, %s128
      %p142 = scmp.eq.s32.totalorder %s15, 3
      %p143 = por %p141, %p142
      %p145 = scmp.ne.s32.totalorder %s128, %s144
      %p146 = scmp.eq.s32.totalorder %s15, 0
      %p147 = por %p145, %p146
      %p148 = scmp.le.s32.totalorder 1, %s9
      %p149 = scmp.lt.s32.totalorder %s9, 5
      %p150 = pnand %p148, %p149
      %p151 = pneg %p150
      // Predicated region
      $region9: #{attention_forward.8} parent=5 // pred_check
        _
      $region10: #{attention_forward.8} parent=5 // pred_check_branch
        %153 = sbr.rel (%p150) target = $region12
      $region11: #{attention_forward.8} parent=5 // pred_region
        %s154 = ssub.s32 %s9, 1
      $region12: #{attention_forward.8} parent=5 // pred_fallthru
        _
      %p155 = scmp.lt.s32.totalorder %s9, 4
      // Predicated region
      $region13: #{attention_forward.8} parent=5 // pred_check
        %p156 = pneg %p155
      $region14: #{attention_forward.8} parent=5 // pred_check_branch
        %158 = sbr.rel (%p156) target = $region16
      $region15: #{attention_forward.8} parent=5 // pred_region
        // Predicated region
        $region17: #{attention_forward.8} parent=15 // pred_check
          %p159 = pneg %p50
        $region18: #{attention_forward.8} parent=15 // pred_check_branch
          %161 = sbr.rel (%p159) target = $region20
        $region19: #{attention_forward.8} parent=15 // pred_region
          %s162 = sand.u32 %s40, 1
          %s163 = sand.u32 %s40, 1
          %s164 = smul.addr %s163, 128
          %s165 = scalar_lea.vmem [#allocation5], %s164
          %s166 = smul.u32 16, %s17
          %s167 = smul.addr %s16, 64
          %s168 = sadd.s32 %s166, %s167
          %s169 = smul.addr %s168, 4
          %s170 = scalar_lea.vmem %s0, %s169
          // Predicated region
          $region21: #{attention_forward.8} parent=19 // pred_check
            _
          $region22: #{attention_forward.8} parent=19 // pred_check_branch
            %172 = sbr.rel (0) target = $region24
          $region23: #{attention_forward.8} parent=19 // pred_region
            // Predicated region
            $region25: #{attention_forward.8} parent=23 // pred_check
              _
            $region26: #{attention_forward.8} parent=23 // pred_check_branch
              %174 = sbr.rel target = $region28
            $region27: #{attention_forward.8} parent=23 // pred_region
              // Predicated region
              $region40: #{attention_forward.8} parent=27 // pred_check
                _
              $region41: #{attention_forward.8} parent=27 // pred_check_branch
                %252 = sbr.rel (0) target = $region43
              $region42: #{attention_forward.8} parent=27 // pred_region
                loop: start=0, step=1, limit=1
                $region44: #{attention_forward.8} parent=42 // loop_pre_header
                  _
                $region45: #{attention_forward.8} parent=42 // loop_header
                  %s254 = sphi 0, %s258
                  %p255 = scmp.ge.s32.totalorder %s254, 1
                  %s259 = sphi %s170, %s170
                  %s260 = sphi %s165, %s165
                $region46: #{attention_forward.8} parent=42 // loop_header_branch
                  %257 = sbr.rel (%p255) target = $region50
                $region47: #{attention_forward.8} parent=42 // loop_body
                  _
                $region48: #{attention_forward.8} parent=42 // loop_footer
                  %s258 = sadd.s32 1, %s254
                $region49: #{attention_forward.8} parent=42 // loop_footer_branch
                  %253 = sbr.rel target = $region45
                $region50: #{attention_forward.8} parent=42 // loop_exit
                  _
                %s262 = ssub.s32 16, 1
                loop: start=0, step=1, limit=1
                $region51: #{attention_forward.8} parent=42 // loop_pre_header
                  _
                $region52: #{attention_forward.8} parent=42 // loop_header
                  %s264 = sphi 0, %s268
                  %p265 = scmp.ge.s32.totalorder %s264, 1
                  %s269 = sphi %s170, %s170
                  %s270 = sphi %s165, %s165
                $region53: #{attention_forward.8} parent=42 // loop_header_branch
                  %267 = sbr.rel (%p265) target = $region57
                $region54: #{attention_forward.8} parent=42 // loop_body
                  %v271 = vld [vmem:[%s269] sm:%s262]
                  %272 = vst [vmem:[%s270] sm:%s262] %v271
                  %v273 = vld [vmem:[%s269 + $0x4] sm:%s262]
                  %274 = vst [vmem:[%s270 + $0x4] sm:%s262] %v273
                  %v275 = vld [vmem:[%s269 + $0x8] sm:%s262]
                  %276 = vst [vmem:[%s270 + $0x8] sm:%s262] %v275
                  %v277 = vld [vmem:[%s269 + $0xc] sm:%s262]
                  %278 = vst [vmem:[%s270 + $0xc] sm:%s262] %v277
                  %v279 = vld [vmem:[%s269 + $0x10] sm:%s262]
                  %280 = vst [vmem:[%s270 + $0x10] sm:%s262] %v279
                  %v281 = vld [vmem:[%s269 + $0x14] sm:%s262]
                  %282 = vst [vmem:[%s270 + $0x14] sm:%s262] %v281
                  %v283 = vld [vmem:[%s269 + $0x18] sm:%s262]
                  %284 = vst [vmem:[%s270 + $0x18] sm:%s262] %v283
                  %v285 = vld [vmem:[%s269 + $0x1c] sm:%s262]
                  %286 = vst [vmem:[%s270 + $0x1c] sm:%s262] %v285
                  %v287 = vld [vmem:[%s269 + $0x20] sm:%s262]
                  %288 = vst [vmem:[%s270 + $0x20] sm:%s262] %v287
                  %v289 = vld [vmem:[%s269 + $0x24] sm:%s262]
                  %290 = vst [vmem:[%s270 + $0x24] sm:%s262] %v289
                  %v291 = vld [vmem:[%s269 + $0x28] sm:%s262]
                  %292 = vst [vmem:[%s270 + $0x28] sm:%s262] %v291
                  %v293 = vld [vmem:[%s269 + $0x2c] sm:%s262]
                  %294 = vst [vmem:[%s270 + $0x2c] sm:%s262] %v293
                  %v295 = vld [vmem:[%s269 + $0x30] sm:%s262]
                  %296 = vst [vmem:[%s270 + $0x30] sm:%s262] %v295
                  %v297 = vld [vmem:[%s269 + $0x34] sm:%s262]
                  %298 = vst [vmem:[%s270 + $0x34] sm:%s262] %v297
                  %v299 = vld [vmem:[%s269 + $0x38] sm:%s262]
                  %300 = vst [vmem:[%s270 + $0x38] sm:%s262] %v299
                  %v301 = vld [vmem:[%s269 + $0x3c] sm:%s262]
                  %302 = vst [vmem:[%s270 + $0x3c] sm:%s262] %v301
                  %v303 = vld [vmem:[%s269 + $0x80] sm:%s262]
                  %304 = vst [vmem:[%s270 + $0x40] sm:%s262] %v303
                  %v305 = vld [vmem:[%s269 + $0x84] sm:%s262]
                  %306 = vst [vmem:[%s270 + $0x44] sm:%s262] %v305
                  %v307 = vld [vmem:[%s269 + $0x88] sm:%s262]
                  %308 = vst [vmem:[%s270 + $0x48] sm:%s262] %v307
                  %v309 = vld [vmem:[%s269 + $0x8c] sm:%s262]
                  %310 = vst [vmem:[%s270 + $0x4c] sm:%s262] %v309
                  %v311 = vld [vmem:[%s269 + $0x90] sm:%s262]
                  %312 = vst [vmem:[%s270 + $0x50] sm:%s262] %v311
                  %v313 = vld [vmem:[%s269 + $0x94] sm:%s262]
                  %314 = vst [vmem:[%s270 + $0x54] sm:%s262] %v313
                  %v315 = vld [vmem:[%s269 + $0x98] sm:%s262]
                  %316 = vst [vmem:[%s270 + $0x58] sm:%s262] %v315
                  %v317 = vld [vmem:[%s269 + $0x9c] sm:%s262]
                  %318 = vst [vmem:[%s270 + $0x5c] sm:%s262] %v317
                  %v319 = vld [vmem:[%s269 + $0xa0] sm:%s262]
                  %320 = vst [vmem:[%s270 + $0x60] sm:%s262] %v319
                  %v321 = vld [vmem:[%s269 + $0xa4] sm:%s262]
                  %322 = vst [vmem:[%s270 + $0x64] sm:%s262] %v321
                  %v323 = vld [vmem:[%s269 + $0xa8] sm:%s262]
                  %324 = vst [vmem:[%s270 + $0x68] sm:%s262] %v323
                  %v325 = vld [vmem:[%s269 + $0xac] sm:%s262]
                  %326 = vst [vmem:[%s270 + $0x6c] sm:%s262] %v325
                  %v327 = vld [vmem:[%s269 + $0xb0] sm:%s262]
                  %328 = vst [vmem:[%s270 + $0x70] sm:%s262] %v327
                  %v329 = vld [vmem:[%s269 + $0xb4] sm:%s262]
                  %330 = vst [vmem:[%s270 + $0x74] sm:%s262] %v329
                  %v331 = vld [vmem:[%s269 + $0xb8] sm:%s262]
                  %332 = vst [vmem:[%s270 + $0x78] sm:%s262] %v331
                  %v333 = vld [vmem:[%s269 + $0xbc] sm:%s262]
                  %334 = vst [vmem:[%s270 + $0x7c] sm:%s262] %v333
                $region55: #{attention_forward.8} parent=42 // loop_footer
                  %s268 = sadd.s32 1, %s264
                $region56: #{attention_forward.8} parent=42 // loop_footer_branch
                  %263 = sbr.rel target = $region52
                $region57: #{attention_forward.8} parent=42 // loop_exit
                  _
              $region43: #{attention_forward.8} parent=27 // pred_fallthru
                _
            $region28: #{attention_forward.8} parent=23 // pred_fallthru
              _
            // Predicated region
            $region29: #{attention_forward.8} parent=23 // pred_check
              _
            $region30: #{attention_forward.8} parent=23 // pred_check_branch
              %176 = sbr.rel (0) target = $region32
            $region31: #{attention_forward.8} parent=23 // pred_region
              %s178 = ssub.s32 16, 1
              loop: start=0, step=1, limit=1
              $region33: #{attention_forward.8} parent=31 // loop_pre_header
                _
              $region34: #{attention_forward.8} parent=31 // loop_header
                %s180 = sphi 0, %s184
                %p181 = scmp.ge.s32.totalorder %s180, 1
                %s185 = sphi %s170, %s170
                %s186 = sphi %s165, %s165
              $region35: #{attention_forward.8} parent=31 // loop_header_branch
                %183 = sbr.rel (%p181) target = $region39
              $region36: #{attention_forward.8} parent=31 // loop_body
                %v187 = vld [vmem:[%s185] sm:%s178]
                %188 = vst [vmem:[%s186] sm:%s178] %v187
                %v189 = vld [vmem:[%s185 + $0x4] sm:%s178]
                %190 = vst [vmem:[%s186 + $0x4] sm:%s178] %v189
                %v191 = vld [vmem:[%s185 + $0x8] sm:%s178]
                %192 = vst [vmem:[%s186 + $0x8] sm:%s178] %v191
                %v193 = vld [vmem:[%s185 + $0xc] sm:%s178]
                %194 = vst [vmem:[%s186 + $0xc] sm:%s178] %v193
                %v195 = vld [vmem:[%s185 + $0x10] sm:%s178]
                %196 = vst [vmem:[%s186 + $0x10] sm:%s178] %v195
                %v197 = vld [vmem:[%s185 + $0x14] sm:%s178]
                %198 = vst [vmem:[%s186 + $0x14] sm:%s178] %v197
                %v199 = vld [vmem:[%s185 + $0x18] sm:%s178]
                %200 = vst [vmem:[%s186 + $0x18] sm:%s178] %v199
                %v201 = vld [vmem:[%s185 + $0x1c] sm:%s178]
                %202 = vst [vmem:[%s186 + $0x1c] sm:%s178] %v201
                %v203 = vld [vmem:[%s185 + $0x20] sm:%s178]
                %204 = vst [vmem:[%s186 + $0x20] sm:%s178] %v203
                %v205 = vld [vmem:[%s185 + $0x24] sm:%s178]
                %206 = vst [vmem:[%s186 + $0x24] sm:%s178] %v205
                %v207 = vld [vmem:[%s185 + $0x28] sm:%s178]
                %208 = vst [vmem:[%s186 + $0x28] sm:%s178] %v207
                %v209 = vld [vmem:[%s185 + $0x2c] sm:%s178]
                %210 = vst [vmem:[%s186 + $0x2c] sm:%s178] %v209
                %v211 = vld [vmem:[%s185 + $0x30] sm:%s178]
                %212 = vst [vmem:[%s186 + $0x30] sm:%s178] %v211
                %v213 = vld [vmem:[%s185 + $0x34] sm:%s178]
                %214 = vst [vmem:[%s186 + $0x34] sm:%s178] %v213
                %v215 = vld [vmem:[%s185 + $0x38] sm:%s178]
                %216 = vst [vmem:[%s186 + $0x38] sm:%s178] %v215
                %v217 = vld [vmem:[%s185 + $0x3c] sm:%s178]
                %218 = vst [vmem:[%s186 + $0x3c] sm:%s178] %v217
                %v219 = vld [vmem:[%s185 + $0x80] sm:%s178]
                %220 = vst [vmem:[%s186 + $0x40] sm:%s178] %v219
                %v221 = vld [vmem:[%s185 + $0x84] sm:%s178]
                %222 = vst [vmem:[%s186 + $0x44] sm:%s178] %v221
                %v223 = vld [vmem:[%s185 + $0x88] sm:%s178]
                %224 = vst [vmem:[%s186 + $0x48] sm:%s178] %v223
                %v225 = vld [vmem:[%s185 + $0x8c] sm:%s178]
                %226 = vst [vmem:[%s186 + $0x4c] sm:%s178] %v225
                %v227 = vld [vmem:[%s185 + $0x90] sm:%s178]
                %228 = vst [vmem:[%s186 + $0x50] sm:%s178] %v227
                %v229 = vld [vmem:[%s185 + $0x94] sm:%s178]
                %230 = vst [vmem:[%s186 + $0x54] sm:%s178] %v229
                %v231 = vld [vmem:[%s185 + $0x98] sm:%s178]
                %232 = vst [vmem:[%s186 + $0x58] sm:%s178] %v231
                %v233 = vld [vmem:[%s185 + $0x9c] sm:%s178]
                %234 = vst [vmem:[%s186 + $0x5c] sm:%s178] %v233
                %v235 = vld [vmem:[%s185 + $0xa0] sm:%s178]
                %236 = vst [vmem:[%s186 + $0x60] sm:%s178] %v235
                %v237 = vld [vmem:[%s185 + $0xa4] sm:%s178]
                %238 = vst [vmem:[%s186 + $0x64] sm:%s178] %v237
                %v239 = vld [vmem:[%s185 + $0xa8] sm:%s178]
                %240 = vst [vmem:[%s186 + $0x68] sm:%s178] %v239
                %v241 = vld [vmem:[%s185 + $0xac] sm:%s178]
                %242 = vst [vmem:[%s186 + $0x6c] sm:%s178] %v241
                %v243 = vld [vmem:[%s185 + $0xb0] sm:%s178]
                %244 = vst [vmem:[%s186 + $0x70] sm:%s178] %v243
                %v245 = vld [vmem:[%s185 + $0xb4] sm:%s178]
                %246 = vst [vmem:[%s186 + $0x74] sm:%s178] %v245
                %v247 = vld [vmem:[%s185 + $0xb8] sm:%s178]
                %248 = vst [vmem:[%s186 + $0x78] sm:%s178] %v247
                %v249 = vld [vmem:[%s185 + $0xbc] sm:%s178]
                %250 = vst [vmem:[%s186 + $0x7c] sm:%s178] %v249
              $region37: #{attention_forward.8} parent=31 // loop_footer
                %s184 = sadd.s32 1, %s180
              $region38: #{attention_forward.8} parent=31 // loop_footer_branch
                %179 = sbr.rel target = $region34
              $region39: #{attention_forward.8} parent=31 // loop_exit
                _
            $region32: #{attention_forward.8} parent=23 // pred_fallthru
              _
          $region24: #{attention_forward.8} parent=19 // pred_fallthru
            _
          %335 = vnop
        $region20: #{attention_forward.8} parent=15 // pred_fallthru
          _
        // Predicated region
        $region58: #{attention_forward.8} parent=15 // pred_check
          %p336 = pneg %p78
        $region59: #{attention_forward.8} parent=15 // pred_check_branch
          %338 = sbr.rel (%p336) target = $region61
        $region60: #{attention_forward.8} parent=15 // pred_region
          %s339 = smul.u32 8, %s18
          %p340 = scmp.lt.s32.totalorder %s16, 1
          %s341 = scalar_select %p340, %s16, 1
          %p342 = scmp.lt.s32.totalorder %s339, 7
          %s343 = scalar_select %p342, %s339, 7
          %s344 = smul.addr %s341, 16
          %s345 = sadd.s32 %s343, %s344
          %s346 = smul.addr %s345, 4
          %s347 = scalar_lea.vmem %s1, %s346
          %s348 = smul.u32 8, %s18
        $region61: #{attention_forward.8} parent=15 // pred_fallthru
          _
        // Predicated region
        $region62: #{attention_forward.8} parent=15 // pred_check
          %p349 = pneg %p106
        $region63: #{attention_forward.8} parent=15 // pred_check_branch
          %351 = sbr.rel (%p349) target = $region65
        $region64: #{attention_forward.8} parent=15 // pred_region
          %s352 = smul.u32 8, %s18
          %p353 = scmp.lt.s32.totalorder %s16, 1
          %s354 = scalar_select %p353, %s16, 1
          %p355 = scmp.lt.s32.totalorder %s352, 7
          %s356 = scalar_select %p355, %s352, 7
          %s357 = smul.addr %s354, 16
          %s358 = sadd.s32 %s356, %s357
          %s359 = smul.addr %s358, 4
          %s360 = scalar_lea.vmem %s2, %s359
          %s361 = smul.u32 8, %s18
        $region65: #{attention_forward.8} parent=15 // pred_fallthru
          _
      $region16: #{attention_forward.8} parent=5 // pred_fallthru
        _
      %p362 = scmp.le.s32.totalorder 1, %s9
      %p363 = scmp.lt.s32.totalorder %s9, 5
      %p364 = pnand %p362, %p363
      %p365 = pneg %p364
      // Predicated region
      $region66: #{attention_forward.8} parent=5 // pred_check
        _
      $region67: #{attention_forward.8} parent=5 // pred_check_branch
        %367 = sbr.rel (%p364) target = $region69
      $region68: #{attention_forward.8} parent=5 // pred_region
        %s368 = ssub.s32 %s9, 1
        %s369 = sand.u32 %s43, 1
        %s370 = sand.u32 %s43, 1
        %s371 = smul.addr %s370, 128
        %s372 = scalar_lea.vmem [#allocation5], %s371
        // Predicated region
        $region70: #{attention_forward.8} parent=68 // pred_check
          %p373 = pneg %p56
        $region71: #{attention_forward.8} parent=68 // pred_check_branch
          %375 = sbr.rel (%p373) target = $region73
        $region72: #{attention_forward.8} parent=68 // pred_region
          _
        $region73: #{attention_forward.8} parent=68 // pred_fallthru
          _
        %s376 = sand.u32 %s43, 1
        %s377 = sand.u32 %s43, 1
        %s378 = smul.addr %s377, 128
        %s379 = scalar_lea.vmem [#allocation5], %s378
        %p380 = pneg %p56
        %p381 = pneg %p53
        %s382 = smul.u32 8, %s21
        %p383 = scmp.lt.s32.totalorder %s19, 1
        %s384 = scalar_select %p383, %s19, 1
        %p385 = scmp.lt.s32.totalorder %s382, 7
        %s386 = scalar_select %p385, %s382, 7
        %s387 = smul.addr %s384, 16
        %s388 = sadd.s32 %s386, %s387
        %s389 = smul.addr %s388, 4
        %s390 = scalar_lea.vmem %s1, %s389
        %p391 = pneg %p84
        %p392 = pneg %p81
        %s393 = smul.u32 8, %s21
        %p394 = scmp.lt.s32.totalorder %s19, 1
        %s395 = scalar_select %p394, %s19, 1
        %p396 = scmp.lt.s32.totalorder %s393, 7
        %s397 = scalar_select %p396, %s393, 7
        %s398 = smul.addr %s395, 16
        %s399 = sadd.s32 %s397, %s398
        %s400 = smul.addr %s399, 4
        %s401 = scalar_lea.vmem %s2, %s400
        %p402 = pneg %p112
        %p403 = pneg %p109
        %p404 = pneg %p140
        %p405 = pneg %p137
        %s406 = smul.u32 16, %s20
        %p407 = scmp.lt.s32.totalorder %s19, 1
        %s408 = scalar_select %p407, %s19, 1
        %p409 = scmp.lt.s32.totalorder %s406, 31
        %s410 = scalar_select %p409, %s406, 31
        %s411 = smul.addr %s408, 32
        %s412 = sadd.s32 %s410, %s411
        %s413 = smul.addr %s412, 8
        %s414 = scalar_lea.vmem %s3, %s413
        %s415 = smul.u32 16, %s20
        %s416 = smul.u32 8, %s21
        %p417 = scmp.lt.s32.totalorder %s19, 1
        %s418 = scalar_select %p417, %s19, 1
        %p419 = scmp.lt.s32.totalorder %s416, 7
        %s420 = scalar_select %p419, %s416, 7
        %s421 = smul.addr %s418, 16
        %s422 = sadd.s32 %s420, %s421
        %s423 = smul.addr %s422, 4
        %s424 = scalar_lea.vmem %s1, %s423
        %s425 = smul.u32 8, %s21
        %s426 = smul.u32 8, %s21
        %p427 = scmp.lt.s32.totalorder %s19, 1
        %s428 = scalar_select %p427, %s19, 1
        %p429 = scmp.lt.s32.totalorder %s426, 7
        %s430 = scalar_select %p429, %s426, 7
        %s431 = smul.addr %s428, 16
        %s432 = sadd.s32 %s430, %s431
        %s433 = smul.addr %s432, 4
        %s434 = scalar_lea.vmem %s2, %s433
        %s435 = smul.u32 8, %s21
        %s436 = smul.u32 16, %s20
        %p437 = scmp.lt.s32.totalorder %s19, 1
        %s438 = scalar_select %p437, %s19, 1
        %p439 = scmp.lt.s32.totalorder %s436, 31
        %s440 = scalar_select %p439, %s436, 31
        %s441 = smul.addr %s438, 32
        %s442 = sadd.s32 %s440, %s441
        %s443 = smul.addr %s442, 8
        %s444 = scalar_lea.vmem %s3, %s443
        %s445 = smul.u32 16, %s20
        %p447 = scmp.eq.s32.totalorder %s21, 0
        // Predicated region
        $region74: #{attention_forward.8} parent=68 // pred_check
          %p448 = pneg %p447
        $region75: #{attention_forward.8} parent=68 // pred_check_branch
          %450 = sbr.rel (%p448) target = $region77
        $region76: #{attention_forward.8} parent=68 // pred_region
          %vm451 = vcmask 7168
          %452 = vst.msk [vmem:[#allocation2] sm:$0xff] %vm451, -inf
          %453 = vst.msk [vmem:[#allocation2 + $0x8] sm:$0xff] %vm451, -inf
          %454 = vst.msk [vmem:[#allocation2 + $0x10] sm:$0xff] %vm451, -inf
          %455 = vst.msk [vmem:[#allocation2 + $0x18] sm:$0xff] %vm451, -inf
          %456 = vst.msk [vmem:[#allocation2 + $0x20] sm:$0xff] %vm451, -inf
          %457 = vst.msk [vmem:[#allocation2 + $0x28] sm:$0xff] %vm451, -inf
          %458 = vst.msk [vmem:[#allocation2 + $0x30] sm:$0xff] %vm451, -inf
          %459 = vst.msk [vmem:[#allocation2 + $0x38] sm:$0xff] %vm451, -inf
          %460 = vst.msk [vmem:[#allocation2 + $0x40] sm:$0xff] %vm451, -inf
          %461 = vst.msk [vmem:[#allocation2 + $0x48] sm:$0xff] %vm451, -inf
          %462 = vst.msk [vmem:[#allocation2 + $0x50] sm:$0xff] %vm451, -inf
          %463 = vst.msk [vmem:[#allocation2 + $0x58] sm:$0xff] %vm451, -inf
          %464 = vst.msk [vmem:[#allocation2 + $0x60] sm:$0xff] %vm451, -inf
          %465 = vst.msk [vmem:[#allocation2 + $0x68] sm:$0xff] %vm451, -inf
          %466 = vst.msk [vmem:[#allocation2 + $0x70] sm:$0xff] %vm451, -inf
          %467 = vst.msk [vmem:[#allocation2 + $0x78] sm:$0xff] %vm451, -inf
          %468 = vst.msk [vmem:[#allocation2 + $0x80] sm:$0xff] %vm451, -inf
          %469 = vst.msk [vmem:[#allocation2 + $0x88] sm:$0xff] %vm451, -inf
          %470 = vst.msk [vmem:[#allocation2 + $0x90] sm:$0xff] %vm451, -inf
          %471 = vst.msk [vmem:[#allocation2 + $0x98] sm:$0xff] %vm451, -inf
          %472 = vst.msk [vmem:[#allocation2 + $0xa0] sm:$0xff] %vm451, -inf
          %473 = vst.msk [vmem:[#allocation2 + $0xa8] sm:$0xff] %vm451, -inf
          %474 = vst.msk [vmem:[#allocation2 + $0xb0] sm:$0xff] %vm451, -inf
          %475 = vst.msk [vmem:[#allocation2 + $0xb8] sm:$0xff] %vm451, -inf
          %476 = vst.msk [vmem:[#allocation2 + $0xc0] sm:$0xff] %vm451, -inf
          %477 = vst.msk [vmem:[#allocation2 + $0xc8] sm:$0xff] %vm451, -inf
          %478 = vst.msk [vmem:[#allocation2 + $0xd0] sm:$0xff] %vm451, -inf
          %479 = vst.msk [vmem:[#allocation2 + $0xd8] sm:$0xff] %vm451, -inf
          %480 = vst.msk [vmem:[#allocation2 + $0xe0] sm:$0xff] %vm451, -inf
          %481 = vst.msk [vmem:[#allocation2 + $0xe8] sm:$0xff] %vm451, -inf
          %482 = vst.msk [vmem:[#allocation2 + $0xf0] sm:$0xff] %vm451, -inf
          %483 = vst.msk [vmem:[#allocation2 + $0xf8] sm:$0xff] %vm451, -inf
          %484 = vst.msk [vmem:[#allocation3] sm:$0xff] %vm451, 0.0
          %485 = vst.msk [vmem:[#allocation3 + $0x8] sm:$0xff] %vm451, 0.0
          %486 = vst.msk [vmem:[#allocation3 + $0x10] sm:$0xff] %vm451, 0.0
          %487 = vst.msk [vmem:[#allocation3 + $0x18] sm:$0xff] %vm451, 0.0
          %488 = vst.msk [vmem:[#allocation3 + $0x20] sm:$0xff] %vm451, 0.0
          %489 = vst.msk [vmem:[#allocation3 + $0x28] sm:$0xff] %vm451, 0.0
          %490 = vst.msk [vmem:[#allocation3 + $0x30] sm:$0xff] %vm451, 0.0
          %491 = vst.msk [vmem:[#allocation3 + $0x38] sm:$0xff] %vm451, 0.0
          %492 = vst.msk [vmem:[#allocation3 + $0x40] sm:$0xff] %vm451, 0.0
          %493 = vst.msk [vmem:[#allocation3 + $0x48] sm:$0xff] %vm451, 0.0
          %494 = vst.msk [vmem:[#allocation3 + $0x50] sm:$0xff] %vm451, 0.0
          %495 = vst.msk [vmem:[#allocation3 + $0x58] sm:$0xff] %vm451, 0.0
          %496 = vst.msk [vmem:[#allocation3 + $0x60] sm:$0xff] %vm451, 0.0
          %497 = vst.msk [vmem:[#allocation3 + $0x68] sm:$0xff] %vm451, 0.0
          %498 = vst.msk [vmem:[#allocation3 + $0x70] sm:$0xff] %vm451, 0.0
          %499 = vst.msk [vmem:[#allocation3 + $0x78] sm:$0xff] %vm451, 0.0
          %500 = vst.msk [vmem:[#allocation3 + $0x80] sm:$0xff] %vm451, 0.0
          %501 = vst.msk [vmem:[#allocation3 + $0x88] sm:$0xff] %vm451, 0.0
          %502 = vst.msk [vmem:[#allocation3 + $0x90] sm:$0xff] %vm451, 0.0
          %503 = vst.msk [vmem:[#allocation3 + $0x98] sm:$0xff] %vm451, 0.0
          %504 = vst.msk [vmem:[#allocation3 + $0xa0] sm:$0xff] %vm451, 0.0
          %505 = vst.msk [vmem:[#allocation3 + $0xa8] sm:$0xff] %vm451, 0.0
          %506 = vst.msk [vmem:[#allocation3 + $0xb0] sm:$0xff] %vm451, 0.0
          %507 = vst.msk [vmem:[#allocation3 + $0xb8] sm:$0xff] %vm451, 0.0
          %508 = vst.msk [vmem:[#allocation3 + $0xc0] sm:$0xff] %vm451, 0.0
          %509 = vst.msk [vmem:[#allocation3 + $0xc8] sm:$0xff] %vm451, 0.0
          %510 = vst.msk [vmem:[#allocation3 + $0xd0] sm:$0xff] %vm451, 0.0
          %511 = vst.msk [vmem:[#allocation3 + $0xd8] sm:$0xff] %vm451, 0.0
          %512 = vst.msk [vmem:[#allocation3 + $0xe0] sm:$0xff] %vm451, 0.0
          %513 = vst.msk [vmem:[#allocation3 + $0xe8] sm:$0xff] %vm451, 0.0
          %514 = vst.msk [vmem:[#allocation3 + $0xf0] sm:$0xff] %vm451, 0.0
          %515 = vst.msk [vmem:[#allocation3 + $0xf8] sm:$0xff] %vm451, 0.0
          %vm516 = vcmask 261120
          %517 = vst.msk [vmem:[#allocation4] sm:$0xff] %vm516, 0.0
          %518 = vst.msk [vmem:[#allocation4 + $0x8] sm:$0xff] %vm516, 0.0
          %519 = vst.msk [vmem:[#allocation4 + $0x10] sm:$0xff] %vm516, 0.0
          %520 = vst.msk [vmem:[#allocation4 + $0x18] sm:$0xff] %vm516, 0.0
          %521 = vst.msk [vmem:[#allocation4 + $0x20] sm:$0xff] %vm516, 0.0
          %522 = vst.msk [vmem:[#allocation4 + $0x28] sm:$0xff] %vm516, 0.0
          %523 = vst.msk [vmem:[#allocation4 + $0x30] sm:$0xff] %vm516, 0.0
          %524 = vst.msk [vmem:[#allocation4 + $0x38] sm:$0xff] %vm516, 0.0
          %525 = vst.msk [vmem:[#allocation4 + $0x40] sm:$0xff] %vm516, 0.0
          %526 = vst.msk [vmem:[#allocation4 + $0x48] sm:$0xff] %vm516, 0.0
          %527 = vst.msk [vmem:[#allocation4 + $0x50] sm:$0xff] %vm516, 0.0
          %528 = vst.msk [vmem:[#allocation4 + $0x58] sm:$0xff] %vm516, 0.0
          %529 = vst.msk [vmem:[#allocation4 + $0x60] sm:$0xff] %vm516, 0.0
          %530 = vst.msk [vmem:[#allocation4 + $0x68] sm:$0xff] %vm516, 0.0
          %531 = vst.msk [vmem:[#allocation4 + $0x70] sm:$0xff] %vm516, 0.0
          %532 = vst.msk [vmem:[#allocation4 + $0x78] sm:$0xff] %vm516, 0.0
          %533 = vst.msk [vmem:[#allocation4 + $0x80] sm:$0xff] %vm516, 0.0
          %534 = vst.msk [vmem:[#allocation4 + $0x88] sm:$0xff] %vm516, 0.0
          %535 = vst.msk [vmem:[#allocation4 + $0x90] sm:$0xff] %vm516, 0.0
          %536 = vst.msk [vmem:[#allocation4 + $0x98] sm:$0xff] %vm516, 0.0
          %537 = vst.msk [vmem:[#allocation4 + $0xa0] sm:$0xff] %vm516, 0.0
          %538 = vst.msk [vmem:[#allocation4 + $0xa8] sm:$0xff] %vm516, 0.0
          %539 = vst.msk [vmem:[#allocation4 + $0xb0] sm:$0xff] %vm516, 0.0
          %540 = vst.msk [vmem:[#allocation4 + $0xb8] sm:$0xff] %vm516, 0.0
          %541 = vst.msk [vmem:[#allocation4 + $0xc0] sm:$0xff] %vm516, 0.0
          %542 = vst.msk [vmem:[#allocation4 + $0xc8] sm:$0xff] %vm516, 0.0
          %543 = vst.msk [vmem:[#allocation4 + $0xd0] sm:$0xff] %vm516, 0.0
          %544 = vst.msk [vmem:[#allocation4 + $0xd8] sm:$0xff] %vm516, 0.0
          %545 = vst.msk [vmem:[#allocation4 + $0xe0] sm:$0xff] %vm516, 0.0
          %546 = vst.msk [vmem:[#allocation4 + $0xe8] sm:$0xff] %vm516, 0.0
          %547 = vst.msk [vmem:[#allocation4 + $0xf0] sm:$0xff] %vm516, 0.0
          %548 = vst.msk [vmem:[#allocation4 + $0xf8] sm:$0xff] %vm516, 0.0
        $region77: #{attention_forward.8} parent=68 // pred_fallthru
          _
        %v549 = vld [vmem:[%s372] sm:$0xf]
        %v550 = vld [vmem:[%s372 + $0x4] sm:$0xf]
        %v551 = vld [vmem:[%s372 + $0x8] sm:$0xf]
        %v552 = vld [vmem:[%s372 + $0xc] sm:$0xf]
        %v553 = vld [vmem:[%s372 + $0x10] sm:$0xf]
        %v554 = vld [vmem:[%s372 + $0x14] sm:$0xf]
        %v555 = vld [vmem:[%s372 + $0x18] sm:$0xf]
        %v556 = vld [vmem:[%s372 + $0x1c] sm:$0xf]
        %v557 = vld [vmem:[%s372 + $0x20] sm:$0xf]
        %v558 = vld [vmem:[%s372 + $0x24] sm:$0xf]
        %v559 = vld [vmem:[%s372 + $0x28] sm:$0xf]
        %v560 = vld [vmem:[%s372 + $0x2c] sm:$0xf]
        %v561 = vld [vmem:[%s372 + $0x30] sm:$0xf]
        %v562 = vld [vmem:[%s372 + $0x34] sm:$0xf]
        %v563 = vld [vmem:[%s372 + $0x38] sm:$0xf]
        %v564 = vld [vmem:[%s372 + $0x3c] sm:$0xf]
        %v565 = vld [vmem:[%s372 + $0x40] sm:$0xf]
        %v566 = vld [vmem:[%s372 + $0x44] sm:$0xf]
        %v567 = vld [vmem:[%s372 + $0x48] sm:$0xf]
        %v568 = vld [vmem:[%s372 + $0x4c] sm:$0xf]
        %v569 = vld [vmem:[%s372 + $0x50] sm:$0xf]
        %v570 = vld [vmem:[%s372 + $0x54] sm:$0xf]
        %v571 = vld [vmem:[%s372 + $0x58] sm:$0xf]
        %v572 = vld [vmem:[%s372 + $0x5c] sm:$0xf]
        %v573 = vld [vmem:[%s372 + $0x60] sm:$0xf]
        %v574 = vld [vmem:[%s372 + $0x64] sm:$0xf]
        %v575 = vld [vmem:[%s372 + $0x68] sm:$0xf]
        %v576 = vld [vmem:[%s372 + $0x6c] sm:$0xf]
        %v577 = vld [vmem:[%s372 + $0x70] sm:$0xf]
        %v578 = vld [vmem:[%s372 + $0x74] sm:$0xf]
        %v579 = vld [vmem:[%s372 + $0x78] sm:$0xf]
        %v580 = vld [vmem:[%s372 + $0x7c] sm:$0xf]
        %v581 = vld [vmem:[%s424] sm:$0xf]
        %v582 = vld [vmem:[%s424 + $0x4] sm:$0xf]
        %v583 = vld [vmem:[%s424 + $0x8] sm:$0xf]
        %v584 = vld [vmem:[%s424 + $0xc] sm:$0xf]
        %v585 = vld [vmem:[%s424 + $0x10] sm:$0xf]
        %v586 = vld [vmem:[%s424 + $0x14] sm:$0xf]
        %v587 = vld [vmem:[%s424 + $0x18] sm:$0xf]
        %v588 = vld [vmem:[%s424 + $0x1c] sm:$0xf]
        %v589 = vld [vmem:[%s424 + $0x20] sm:$0xf]
        %v590 = vld [vmem:[%s424 + $0x24] sm:$0xf]
        %v591 = vld [vmem:[%s424 + $0x28] sm:$0xf]
        %v592 = vld [vmem:[%s424 + $0x2c] sm:$0xf]
        %v593 = vld [vmem:[%s424 + $0x30] sm:$0xf]
        %v594 = vld [vmem:[%s424 + $0x34] sm:$0xf]
        %v595 = vld [vmem:[%s424 + $0x38] sm:$0xf]
        %v596 = vld [vmem:[%s424 + $0x3c] sm:$0xf]
        %v597 = vld [vmem:[%s434] sm:$0xf]
        %v598 = vld [vmem:[%s434 + $0x4] sm:$0xf]
        %v599 = vld [vmem:[%s434 + $0x8] sm:$0xf]
        %v600 = vld [vmem:[%s434 + $0xc] sm:$0xf]
        %v601 = vld [vmem:[%s434 + $0x10] sm:$0xf]
        %v602 = vld [vmem:[%s434 + $0x14] sm:$0xf]
        %v603 = vld [vmem:[%s434 + $0x18] sm:$0xf]
        %v604 = vld [vmem:[%s434 + $0x1c] sm:$0xf]
        %v605 = vld [vmem:[%s434 + $0x20] sm:$0xf]
        %v606 = vld [vmem:[%s434 + $0x24] sm:$0xf]
        %v607 = vld [vmem:[%s434 + $0x28] sm:$0xf]
        %v608 = vld [vmem:[%s434 + $0x2c] sm:$0xf]
        %v609 = vld [vmem:[%s434 + $0x30] sm:$0xf]
        %v610 = vld [vmem:[%s434 + $0x34] sm:$0xf]
        %v611 = vld [vmem:[%s434 + $0x38] sm:$0xf]
        %v612 = vld [vmem:[%s434 + $0x3c] sm:$0xf]
        %v629 = vunpack.c.l.b16 %v549
        %v630 = vunpack.c.l.b16 %v550
        %v631 = vunpack.c.l.b16 %v551
        %v632 = vunpack.c.l.b16 %v552
        %v633 = vunpack.c.l.b16 %v553
        %v634 = vunpack.c.l.b16 %v554
        %v635 = vunpack.c.l.b16 %v555
        %v636 = vunpack.c.l.b16 %v556
        %v637 = vunpack.c.l.b16 %v557
        %v638 = vunpack.c.l.b16 %v558
        %v639 = vunpack.c.l.b16 %v559
        %v640 = vunpack.c.l.b16 %v560
        %v641 = vunpack.c.l.b16 %v561
        %v642 = vunpack.c.l.b16 %v562
        %v643 = vunpack.c.l.b16 %v563
        %v644 = vunpack.c.l.b16 %v564
        %v645 = vpack.c.b16 %v630, %v629
        %v646 = vpack.c.b16 %v632, %v631
        %v647 = vpack.c.b16 %v634, %v633
        %v648 = vpack.c.b16 %v636, %v635
        %v649 = vpack.c.b16 %v638, %v637
        %v650 = vpack.c.b16 %v640, %v639
        %v651 = vpack.c.b16 %v642, %v641
        %v652 = vpack.c.b16 %v644, %v643
        %v661 = vunpack.c.l.b16 %v581
        %v662 = vunpack.c.l.b16 %v582
        %v663 = vunpack.c.l.b16 %v583
        %v664 = vunpack.c.l.b16 %v584
        %v665 = vunpack.c.l.b16 %v585
        %v666 = vunpack.c.l.b16 %v586
        %v667 = vunpack.c.l.b16 %v587
        %v668 = vunpack.c.l.b16 %v588
        %v669 = vpack.c.b16 %v662, %v661
        %v670 = vpack.c.b16 %v664, %v663
        %v671 = vpack.c.b16 %v666, %v665
        %v672 = vpack.c.b16 %v668, %v667
        %vm673 = vcmask 261120
        %v675 = vsel %vm673, %v645, 0
        %v678 = vsel %vm673, %v646, 0
        %v681 = vsel %vm673, %v647, 0
        %v684 = vsel %vm673, %v648, 0
        %v687 = vsel %vm673, %v649, 0
        %v690 = vsel %vm673, %v650, 0
        %v693 = vsel %vm673, %v651, 0
        %v696 = vsel %vm673, %v652, 0
        %v699 = vsel %vm673, %v669, 0
        %v702 = vsel %vm673, %v670, 0
        %v705 = vsel %vm673, %v671, 0
        %v708 = vsel %vm673, %v672, 0
        %710 = vmatpush.bf16.xpose.msra.mxu0 0
        %711 = vmatpush.bf16.xpose.msra.mxu0 0
        %712 = vmatpush.bf16.xpose.msra.mxu0 0
        %713 = vmatpush.bf16.xpose.msra.mxu0 0
        %714 = vmatpush.bf16.xpose.msra.mxu0 %v708
        %715 = vmatpush.bf16.xpose.msra.mxu0 %v705
        %716 = vmatpush.bf16.xpose.msra.mxu0 %v702
        %717 = vmatpush.bf16.xpose.msra.mxu0 %v699
        %718 = vmatmul.bf16.gmra.mxu0 %v675
        %v719 = vpop.f32.mrf.mxu0
        %v720 = vadd.f32 0.0, %v719
        %v721 = vpop.f32.mrf.mxu0
        %v722 = vadd.f32 0.0, %v721
        %723 = vmatmul.bf16.gmra.mxu0 %v678
        %v724 = vpop.f32.mrf.mxu0
        %v725 = vadd.f32 0.0, %v724
        %v726 = vpop.f32.mrf.mxu0
        %v727 = vadd.f32 0.0, %v726
        %728 = vmatmul.bf16.gmra.mxu0 %v681
        %v729 = vpop.f32.mrf.mxu0
        %v730 = vadd.f32 0.0, %v729
        %v731 = vpop.f32.mrf.mxu0
        %v732 = vadd.f32 0.0, %v731
        %733 = vmatmul.bf16.gmra.mxu0 %v684
        %v734 = vpop.f32.mrf.mxu0
        %v735 = vadd.f32 0.0, %v734
        %v736 = vpop.f32.mrf.mxu0
        %v737 = vadd.f32 0.0, %v736
        %738 = vmatmul.bf16.gmra.mxu0 %v687
        %v739 = vpop.f32.mrf.mxu0
        %v740 = vadd.f32 0.0, %v739
        %v741 = vpop.f32.mrf.mxu0
        %v742 = vadd.f32 0.0, %v741
        %743 = vmatmul.bf16.gmra.mxu0 %v690
        %v744 = vpop.f32.mrf.mxu0
        %v745 = vadd.f32 0.0, %v744
        %v746 = vpop.f32.mrf.mxu0
        %v747 = vadd.f32 0.0, %v746
        %748 = vmatmul.bf16.gmra.mxu0 %v693
        %v749 = vpop.f32.mrf.mxu0
        %v750 = vadd.f32 0.0, %v749
        %v751 = vpop.f32.mrf.mxu0
        %v752 = vadd.f32 0.0, %v751
        %753 = vmatmul.bf16.gmra.mxu0 %v696
        %v754 = vpop.f32.mrf.mxu0
        %v755 = vadd.f32 0.0, %v754
        %v756 = vpop.f32.mrf.mxu0
        %v757 = vadd.f32 0.0, %v756
        %758 = vdwg.mxu0
        %v775 = vunpack.c.l.b16 %v565
        %v776 = vunpack.c.l.b16 %v566
        %v777 = vunpack.c.l.b16 %v567
        %v778 = vunpack.c.l.b16 %v568
        %v779 = vunpack.c.l.b16 %v569
        %v780 = vunpack.c.l.b16 %v570
        %v781 = vunpack.c.l.b16 %v571
        %v782 = vunpack.c.l.b16 %v572
        %v783 = vunpack.c.l.b16 %v573
        %v784 = vunpack.c.l.b16 %v574
        %v785 = vunpack.c.l.b16 %v575
        %v786 = vunpack.c.l.b16 %v576
        %v787 = vunpack.c.l.b16 %v577
        %v788 = vunpack.c.l.b16 %v578
        %v789 = vunpack.c.l.b16 %v579
        %v790 = vunpack.c.l.b16 %v580
        %v791 = vpack.c.b16 %v776, %v775
        %v792 = vpack.c.b16 %v778, %v777
        %v793 = vpack.c.b16 %v780, %v779
        %v794 = vpack.c.b16 %v782, %v781
        %v795 = vpack.c.b16 %v784, %v783
        %v796 = vpack.c.b16 %v786, %v785
        %v797 = vpack.c.b16 %v788, %v787
        %v798 = vpack.c.b16 %v790, %v789
        %v807 = vunpack.c.l.b16 %v589
        %v808 = vunpack.c.l.b16 %v590
        %v809 = vunpack.c.l.b16 %v591
        %v810 = vunpack.c.l.b16 %v592
        %v811 = vunpack.c.l.b16 %v593
        %v812 = vunpack.c.l.b16 %v594
        %v813 = vunpack.c.l.b16 %v595
        %v814 = vunpack.c.l.b16 %v596
        %v815 = vpack.c.b16 %v808, %v807
        %v816 = vpack.c.b16 %v810, %v809
        %v817 = vpack.c.b16 %v812, %v811
        %v818 = vpack.c.b16 %v814, %v813
        %v820 = vsel %vm673, %v791, 0
        %v823 = vsel %vm673, %v792, 0
        %v826 = vsel %vm673, %v793, 0
        %v829 = vsel %vm673, %v794, 0
        %v832 = vsel %vm673, %v795, 0
        %v835 = vsel %vm673, %v796, 0
        %v838 = vsel %vm673, %v797, 0
        %v841 = vsel %vm673, %v798, 0
        %v844 = vsel %vm673, %v815, 0
        %v847 = vsel %vm673, %v816, 0
        %v850 = vsel %vm673, %v817, 0
        %v853 = vsel %vm673, %v818, 0
        %855 = vmatpush.bf16.xpose.msra.mxu0 0
        %856 = vmatpush.bf16.xpose.msra.mxu0 0
        %857 = vmatpush.bf16.xpose.msra.mxu0 0
        %858 = vmatpush.bf16.xpose.msra.mxu0 0
        %859 = vmatpush.bf16.xpose.msra.mxu0 %v853
        %860 = vmatpush.bf16.xpose.msra.mxu0 %v850
        %861 = vmatpush.bf16.xpose.msra.mxu0 %v847
        %862 = vmatpush.bf16.xpose.msra.mxu0 %v844
        %863 = vmatmul.bf16.gmra.mxu0 %v820
        %v864 = vpop.f32.mrf.mxu0
        %v865 = vadd.f32 0.0, %v864
        %v866 = vpop.f32.mrf.mxu0
        %v867 = vadd.f32 0.0, %v866
        %868 = vmatmul.bf16.gmra.mxu0 %v823
        %v869 = vpop.f32.mrf.mxu0
        %v870 = vadd.f32 0.0, %v869
        %v871 = vpop.f32.mrf.mxu0
        %v872 = vadd.f32 0.0, %v871
        %873 = vmatmul.bf16.gmra.mxu0 %v826
        %v874 = vpop.f32.mrf.mxu0
        %v875 = vadd.f32 0.0, %v874
        %v876 = vpop.f32.mrf.mxu0
        %v877 = vadd.f32 0.0, %v876
        %878 = vmatmul.bf16.gmra.mxu0 %v829
        %v879 = vpop.f32.mrf.mxu0
        %v880 = vadd.f32 0.0, %v879
        %v881 = vpop.f32.mrf.mxu0
        %v882 = vadd.f32 0.0, %v881
        %883 = vmatmul.bf16.gmra.mxu0 %v832
        %v884 = vpop.f32.mrf.mxu0
        %v885 = vadd.f32 0.0, %v884
        %v886 = vpop.f32.mrf.mxu0
        %v887 = vadd.f32 0.0, %v886
        %888 = vmatmul.bf16.gmra.mxu0 %v835
        %v889 = vpop.f32.mrf.mxu0
        %v890 = vadd.f32 0.0, %v889
        %v891 = vpop.f32.mrf.mxu0
        %v892 = vadd.f32 0.0, %v891
        %893 = vmatmul.bf16.gmra.mxu0 %v838
        %v894 = vpop.f32.mrf.mxu0
        %v895 = vadd.f32 0.0, %v894
        %v896 = vpop.f32.mrf.mxu0
        %v897 = vadd.f32 0.0, %v896
        %898 = vmatmul.bf16.gmra.mxu0 %v841
        %v899 = vpop.f32.mrf.mxu0
        %v900 = vadd.f32 0.0, %v899
        %v901 = vpop.f32.mrf.mxu0
        %v902 = vadd.f32 0.0, %v901
        %903 = vdwg.mxu0
        %v904 = vmul.f32 %v720, 0.17677669
        %v905 = vmul.f32 %v722, 0.17677669
        %v906 = vmul.f32 %v725, 0.17677669
        %v907 = vmul.f32 %v727, 0.17677669
        %v908 = vmul.f32 %v730, 0.17677669
        %v909 = vmul.f32 %v732, 0.17677669
        %v910 = vmul.f32 %v735, 0.17677669
        %v911 = vmul.f32 %v737, 0.17677669
        %v912 = vmul.f32 %v740, 0.17677669
        %v913 = vmul.f32 %v742, 0.17677669
        %v914 = vmul.f32 %v745, 0.17677669
        %v915 = vmul.f32 %v747, 0.17677669
        %v916 = vmul.f32 %v750, 0.17677669
        %v917 = vmul.f32 %v752, 0.17677669
        %v918 = vmul.f32 %v755, 0.17677669
        %v919 = vmul.f32 %v757, 0.17677669
        %v920 = vmul.f32 %v865, 0.17677669
        %v921 = vmul.f32 %v867, 0.17677669
        %v922 = vmul.f32 %v870, 0.17677669
        %v923 = vmul.f32 %v872, 0.17677669
        %v924 = vmul.f32 %v875, 0.17677669
        %v925 = vmul.f32 %v877, 0.17677669
        %v926 = vmul.f32 %v880, 0.17677669
        %v927 = vmul.f32 %v882, 0.17677669
        %v928 = vmul.f32 %v885, 0.17677669
        %v929 = vmul.f32 %v887, 0.17677669
        %v930 = vmul.f32 %v890, 0.17677669
        %v931 = vmul.f32 %v892, 0.17677669
        %v932 = vmul.f32 %v895, 0.17677669
        %v933 = vmul.f32 %v897, 0.17677669
        %v934 = vmul.f32 %v900, 0.17677669
        %v935 = vmul.f32 %v902, 0.17677669
        %v936 = vld [vmem:[#allocation2] sm:$0xff]
        %v937 = vld [vmem:[#allocation2 + $0x8] sm:$0xff]
        %v938 = vld [vmem:[#allocation2 + $0x10] sm:$0xff]
        %v939 = vld [vmem:[#allocation2 + $0x18] sm:$0xff]
        %v940 = vld [vmem:[#allocation2 + $0x20] sm:$0xff]
        %v941 = vld [vmem:[#allocation2 + $0x28] sm:$0xff]
        %v942 = vld [vmem:[#allocation2 + $0x30] sm:$0xff]
        %v943 = vld [vmem:[#allocation2 + $0x38] sm:$0xff]
        %v944 = vld [vmem:[#allocation2 + $0x40] sm:$0xff]
        %v945 = vld [vmem:[#allocation2 + $0x48] sm:$0xff]
        %v946 = vld [vmem:[#allocation2 + $0x50] sm:$0xff]
        %v947 = vld [vmem:[#allocation2 + $0x58] sm:$0xff]
        %v948 = vld [vmem:[#allocation2 + $0x60] sm:$0xff]
        %v949 = vld [vmem:[#allocation2 + $0x68] sm:$0xff]
        %v950 = vld [vmem:[#allocation2 + $0x70] sm:$0xff]
        %v951 = vld [vmem:[#allocation2 + $0x78] sm:$0xff]
        %v952 = vld [vmem:[#allocation2 + $0x80] sm:$0xff]
        %v953 = vld [vmem:[#allocation2 + $0x88] sm:$0xff]
        %v954 = vld [vmem:[#allocation2 + $0x90] sm:$0xff]
        %v955 = vld [vmem:[#allocation2 + $0x98] sm:$0xff]
        %v956 = vld [vmem:[#allocation2 + $0xa0] sm:$0xff]
        %v957 = vld [vmem:[#allocation2 + $0xa8] sm:$0xff]
        %v958 = vld [vmem:[#allocation2 + $0xb0] sm:$0xff]
        %v959 = vld [vmem:[#allocation2 + $0xb8] sm:$0xff]
        %v960 = vld [vmem:[#allocation2 + $0xc0] sm:$0xff]
        %v961 = vld [vmem:[#allocation2 + $0xc8] sm:$0xff]
        %v962 = vld [vmem:[#allocation2 + $0xd0] sm:$0xff]
        %v963 = vld [vmem:[#allocation2 + $0xd8] sm:$0xff]
        %v964 = vld [vmem:[#allocation2 + $0xe0] sm:$0xff]
        %v965 = vld [vmem:[#allocation2 + $0xe8] sm:$0xff]
        %v966 = vld [vmem:[#allocation2 + $0xf0] sm:$0xff]
        %v967 = vld [vmem:[#allocation2 + $0xf8] sm:$0xff]
        %vm968 = vcmask 523264
        %v969 = vsel %vm968, %v904, -inf
        %970 = vmax.xlane.f32.xlu0 %v969
        %v971 = vpop.xlane.xlu0 %970
        %v972 = vsel %vm968, %v905, -inf
        %973 = vmax.xlane.f32.xlu0 %v972
        %v974 = vpop.xlane.xlu0 %973
        %v975 = vsel %vm968, %v906, -inf
        %976 = vmax.xlane.f32.xlu0 %v975
        %v977 = vpop.xlane.xlu0 %976
        %v978 = vsel %vm968, %v907, -inf
        %979 = vmax.xlane.f32.xlu0 %v978
        %v980 = vpop.xlane.xlu0 %979
        %v981 = vsel %vm968, %v908, -inf
        %982 = vmax.xlane.f32.xlu0 %v981
        %v983 = vpop.xlane.xlu0 %982
        %v984 = vsel %vm968, %v909, -inf
        %985 = vmax.xlane.f32.xlu0 %v984
        %v986 = vpop.xlane.xlu0 %985
        %v987 = vsel %vm968, %v910, -inf
        %988 = vmax.xlane.f32.xlu0 %v987
        %v989 = vpop.xlane.xlu0 %988
        %v990 = vsel %vm968, %v911, -inf
        %991 = vmax.xlane.f32.xlu0 %v990
        %v992 = vpop.xlane.xlu0 %991
        %v993 = vsel %vm968, %v912, -inf
        %994 = vmax.xlane.f32.xlu0 %v993
        %v995 = vpop.xlane.xlu0 %994
        %v996 = vsel %vm968, %v913, -inf
        %997 = vmax.xlane.f32.xlu0 %v996
        %v998 = vpop.xlane.xlu0 %997
        %v999 = vsel %vm968, %v914, -inf
        %1000 = vmax.xlane.f32.xlu0 %v999
        %v1001 = vpop.xlane.xlu0 %1000
        %v1002 = vsel %vm968, %v915, -inf
        %1003 = vmax.xlane.f32.xlu0 %v1002
        %v1004 = vpop.xlane.xlu0 %1003
        %v1005 = vsel %vm968, %v916, -inf
        %1006 = vmax.xlane.f32.xlu0 %v1005
        %v1007 = vpop.xlane.xlu0 %1006
        %v1008 = vsel %vm968, %v917, -inf
        %1009 = vmax.xlane.f32.xlu0 %v1008
        %v1010 = vpop.xlane.xlu0 %1009
        %v1011 = vsel %vm968, %v918, -inf
        %1012 = vmax.xlane.f32.xlu0 %v1011
        %v1013 = vpop.xlane.xlu0 %1012
        %v1014 = vsel %vm968, %v919, -inf
        %1015 = vmax.xlane.f32.xlu0 %v1014
        %v1016 = vpop.xlane.xlu0 %1015
        %v1017 = vsel %vm968, %v920, -inf
        %1018 = vmax.xlane.f32.xlu0 %v1017
        %v1019 = vpop.xlane.xlu0 %1018
        %v1020 = vsel %vm968, %v921, -inf
        %1021 = vmax.xlane.f32.xlu0 %v1020
        %v1022 = vpop.xlane.xlu0 %1021
        %v1023 = vsel %vm968, %v922, -inf
        %1024 = vmax.xlane.f32.xlu0 %v1023
        %v1025 = vpop.xlane.xlu0 %1024
        %v1026 = vsel %vm968, %v923, -inf
        %1027 = vmax.xlane.f32.xlu0 %v1026
        %v1028 = vpop.xlane.xlu0 %1027
        %v1029 = vsel %vm968, %v924, -inf
        %1030 = vmax.xlane.f32.xlu0 %v1029
        %v1031 = vpop.xlane.xlu0 %1030
        %v1032 = vsel %vm968, %v925, -inf
        %1033 = vmax.xlane.f32.xlu0 %v1032
        %v1034 = vpop.xlane.xlu0 %1033
        %v1035 = vsel %vm968, %v926, -inf
        %1036 = vmax.xlane.f32.xlu0 %v1035
        %v1037 = vpop.xlane.xlu0 %1036
        %v1038 = vsel %vm968, %v927, -inf
        %1039 = vmax.xlane.f32.xlu0 %v1038
        %v1040 = vpop.xlane.xlu0 %1039
        %v1041 = vsel %vm968, %v928, -inf
        %1042 = vmax.xlane.f32.xlu0 %v1041
        %v1043 = vpop.xlane.xlu0 %1042
        %v1044 = vsel %vm968, %v929, -inf
        %1045 = vmax.xlane.f32.xlu0 %v1044
        %v1046 = vpop.xlane.xlu0 %1045
        %v1047 = vsel %vm968, %v930, -inf
        %1048 = vmax.xlane.f32.xlu0 %v1047
        %v1049 = vpop.xlane.xlu0 %1048
        %v1050 = vsel %vm968, %v931, -inf
        %1051 = vmax.xlane.f32.xlu0 %v1050
        %v1052 = vpop.xlane.xlu0 %1051
        %v1053 = vsel %vm968, %v932, -inf
        %1054 = vmax.xlane.f32.xlu0 %v1053
        %v1055 = vpop.xlane.xlu0 %1054
        %v1056 = vsel %vm968, %v933, -inf
        %1057 = vmax.xlane.f32.xlu0 %v1056
        %v1058 = vpop.xlane.xlu0 %1057
        %v1059 = vsel %vm968, %v934, -inf
        %1060 = vmax.xlane.f32.xlu0 %v1059
        %v1061 = vpop.xlane.xlu0 %1060
        %v1062 = vsel %vm968, %v935, -inf
        %1063 = vmax.xlane.f32.xlu0 %v1062
        %v1064 = vpop.xlane.xlu0 %1063
        %v1065 = vmax.f32 %v936, %v971
        %v1066 = vmax.f32 %v937, %v974
        %v1067 = vmax.f32 %v938, %v977
        %v1068 = vmax.f32 %v939, %v980
        %v1069 = vmax.f32 %v940, %v983
        %v1070 = vmax.f32 %v941, %v986
        %v1071 = vmax.f32 %v942, %v989
        %v1072 = vmax.f32 %v943, %v992
        %v1073 = vmax.f32 %v944, %v995
        %v1074 = vmax.f32 %v945, %v998
        %v1075 = vmax.f32 %v946, %v1001
        %v1076 = vmax.f32 %v947, %v1004
        %v1077 = vmax.f32 %v948, %v1007
        %v1078 = vmax.f32 %v949, %v1010
        %v1079 = vmax.f32 %v950, %v1013
        %v1080 = vmax.f32 %v951, %v1016
        %v1081 = vmax.f32 %v952, %v1019
        %v1082 = vmax.f32 %v953, %v1022
        %v1083 = vmax.f32 %v954, %v1025
        %v1084 = vmax.f32 %v955, %v1028
        %v1085 = vmax.f32 %v956, %v1031
        %v1086 = vmax.f32 %v957, %v1034
        %v1087 = vmax.f32 %v958, %v1037
        %v1088 = vmax.f32 %v959, %v1040
        %v1089 = vmax.f32 %v960, %v1043
        %v1090 = vmax.f32 %v961, %v1046
        %v1091 = vmax.f32 %v962, %v1049
        %v1092 = vmax.f32 %v963, %v1052
        %v1093 = vmax.f32 %v964, %v1055
        %v1094 = vmax.f32 %v965, %v1058
        %v1095 = vmax.f32 %v966, %v1061
        %v1096 = vmax.f32 %v967, %v1064
        %v1097 = vsub.f32 %v936, %v1065
        %v1098 = vsub.f32 %v937, %v1066
        %v1099 = vsub.f32 %v938, %v1067
        %v1100 = vsub.f32 %v939, %v1068
        %v1101 = vsub.f32 %v940, %v1069
        %v1102 = vsub.f32 %v941, %v1070
        %v1103 = vsub.f32 %v942, %v1071
        %v1104 = vsub.f32 %v943, %v1072
        %v1105 = vsub.f32 %v944, %v1073
        %v1106 = vsub.f32 %v945, %v1074
        %v1107 = vsub.f32 %v946, %v1075
        %v1108 = vsub.f32 %v947, %v1076
        %v1109 = vsub.f32 %v948, %v1077
        %v1110 = vsub.f32 %v949, %v1078
        %v1111 = vsub.f32 %v950, %v1079
        %v1112 = vsub.f32 %v951, %v1080
        %v1113 = vsub.f32 %v952, %v1081
        %v1114 = vsub.f32 %v953, %v1082
        %v1115 = vsub.f32 %v954, %v1083
        %v1116 = vsub.f32 %v955, %v1084
        %v1117 = vsub.f32 %v956, %v1085
        %v1118 = vsub.f32 %v957, %v1086
        %v1119 = vsub.f32 %v958, %v1087
        %v1120 = vsub.f32 %v959, %v1088
        %v1121 = vsub.f32 %v960, %v1089
        %v1122 = vsub.f32 %v961, %v1090
        %v1123 = vsub.f32 %v962, %v1091
        %v1124 = vsub.f32 %v963, %v1092
        %v1125 = vsub.f32 %v964, %v1093
        %v1126 = vsub.f32 %v965, %v1094
        %v1127 = vsub.f32 %v966, %v1095
        %v1128 = vsub.f32 %v967, %v1096
        %v1129 = vmul.f32 %v1097, 1.442695
        %v1130 = vpow.pop %v1129
        %v1131 = vmul.f32 %v1098, 1.442695
        %v1132 = vpow.pop %v1131
        %v1133 = vmul.f32 %v1099, 1.442695
        %v1134 = vpow.pop %v1133
        %v1135 = vmul.f32 %v1100, 1.442695
        %v1136 = vpow.pop %v1135
        %v1137 = vmul.f32 %v1101, 1.442695
        %v1138 = vpow.pop %v1137
        %v1139 = vmul.f32 %v1102, 1.442695
        %v1140 = vpow.pop %v1139
        %v1141 = vmul.f32 %v1103, 1.442695
        %v1142 = vpow.pop %v1141
        %v1143 = vmul.f32 %v1104, 1.442695
        %v1144 = vpow.pop %v1143
        %v1145 = vmul.f32 %v1105, 1.442695
        %v1146 = vpow.pop %v1145
        %v1147 = vmul.f32 %v1106, 1.442695
        %v1148 = vpow.pop %v1147
        %v1149 = vmul.f32 %v1107, 1.442695
        %v1150 = vpow.pop %v1149
        %v1151 = vmul.f32 %v1108, 1.442695
        %v1152 = vpow.pop %v1151
        %v1153 = vmul.f32 %v1109, 1.442695
        %v1154 = vpow.pop %v1153
        %v1155 = vmul.f32 %v1110, 1.442695
        %v1156 = vpow.pop %v1155
        %v1157 = vmul.f32 %v1111, 1.442695
        %v1158 = vpow.pop %v1157
        %v1159 = vmul.f32 %v1112, 1.442695
        %v1160 = vpow.pop %v1159
        %v1161 = vmul.f32 %v1113, 1.442695
        %v1162 = vpow.pop %v1161
        %v1163 = vmul.f32 %v1114, 1.442695
        %v1164 = vpow.pop %v1163
        %v1165 = vmul.f32 %v1115, 1.442695
        %v1166 = vpow.pop %v1165
        %v1167 = vmul.f32 %v1116, 1.442695
        %v1168 = vpow.pop %v1167
        %v1169 = vmul.f32 %v1117, 1.442695
        %v1170 = vpow.pop %v1169
        %v1171 = vmul.f32 %v1118, 1.442695
        %v1172 = vpow.pop %v1171
        %v1173 = vmul.f32 %v1119, 1.442695
        %v1174 = vpow.pop %v1173
        %v1175 = vmul.f32 %v1120, 1.442695
        %v1176 = vpow.pop %v1175
        %v1177 = vmul.f32 %v1121, 1.442695
        %v1178 = vpow.pop %v1177
        %v1179 = vmul.f32 %v1122, 1.442695
        %v1180 = vpow.pop %v1179
        %v1181 = vmul.f32 %v1123, 1.442695
        %v1182 = vpow.pop %v1181
        %v1183 = vmul.f32 %v1124, 1.442695
        %v1184 = vpow.pop %v1183
        %v1185 = vmul.f32 %v1125, 1.442695
        %v1186 = vpow.pop %v1185
        %v1187 = vmul.f32 %v1126, 1.442695
        %v1188 = vpow.pop %v1187
        %v1189 = vmul.f32 %v1127, 1.442695
        %v1190 = vpow.pop %v1189
        %v1191 = vmul.f32 %v1128, 1.442695
        %v1192 = vpow.pop %v1191
        %1194 = vset.pattern.permute.xlu0 0
        %1195 = vperm.xlu0 %1194, %v1065
        %v1196 = vpop.permute.xlu0 %1195
        %1199 = vset.pattern.permute.xlu0 0
        %1200 = vperm.xlu0 %1199, %v1066
        %v1201 = vpop.permute.xlu0 %1200
        %1204 = vset.pattern.permute.xlu0 0
        %1205 = vperm.xlu0 %1204, %v1067
        %v1206 = vpop.permute.xlu0 %1205
        %1209 = vset.pattern.permute.xlu0 0
        %1210 = vperm.xlu0 %1209, %v1068
        %v1211 = vpop.permute.xlu0 %1210
        %1214 = vset.pattern.permute.xlu0 0
        %1215 = vperm.xlu0 %1214, %v1069
        %v1216 = vpop.permute.xlu0 %1215
        %1219 = vset.pattern.permute.xlu0 0
        %1220 = vperm.xlu0 %1219, %v1070
        %v1221 = vpop.permute.xlu0 %1220
        %1224 = vset.pattern.permute.xlu0 0
        %1225 = vperm.xlu0 %1224, %v1071
        %v1226 = vpop.permute.xlu0 %1225
        %1229 = vset.pattern.permute.xlu0 0
        %1230 = vperm.xlu0 %1229, %v1072
        %v1231 = vpop.permute.xlu0 %1230
        %1234 = vset.pattern.permute.xlu0 0
        %1235 = vperm.xlu0 %1234, %v1073
        %v1236 = vpop.permute.xlu0 %1235
        %1239 = vset.pattern.permute.xlu0 0
        %1240 = vperm.xlu0 %1239, %v1074
        %v1241 = vpop.permute.xlu0 %1240
        %1244 = vset.pattern.permute.xlu0 0
        %1245 = vperm.xlu0 %1244, %v1075
        %v1246 = vpop.permute.xlu0 %1245
        %1249 = vset.pattern.permute.xlu0 0
        %1250 = vperm.xlu0 %1249, %v1076
        %v1251 = vpop.permute.xlu0 %1250
        %1254 = vset.pattern.permute.xlu0 0
        %1255 = vperm.xlu0 %1254, %v1077
        %v1256 = vpop.permute.xlu0 %1255
        %1259 = vset.pattern.permute.xlu0 0
        %1260 = vperm.xlu0 %1259, %v1078
        %v1261 = vpop.permute.xlu0 %1260
        %1264 = vset.pattern.permute.xlu0 0
        %1265 = vperm.xlu0 %1264, %v1079
        %v1266 = vpop.permute.xlu0 %1265
        %1269 = vset.pattern.permute.xlu0 0
        %1270 = vperm.xlu0 %1269, %v1080
        %v1271 = vpop.permute.xlu0 %1270
        %1274 = vset.pattern.permute.xlu0 0
        %1275 = vperm.xlu0 %1274, %v1081
        %v1276 = vpop.permute.xlu0 %1275
        %1279 = vset.pattern.permute.xlu0 0
        %1280 = vperm.xlu0 %1279, %v1082
        %v1281 = vpop.permute.xlu0 %1280
        %1284 = vset.pattern.permute.xlu0 0
        %1285 = vperm.xlu0 %1284, %v1083
        %v1286 = vpop.permute.xlu0 %1285
        %1289 = vset.pattern.permute.xlu0 0
        %1290 = vperm.xlu0 %1289, %v1084
        %v1291 = vpop.permute.xlu0 %1290
        %1294 = vset.pattern.permute.xlu0 0
        %1295 = vperm.xlu0 %1294, %v1085
        %v1296 = vpop.permute.xlu0 %1295
        %1299 = vset.pattern.permute.xlu0 0
        %1300 = vperm.xlu0 %1299, %v1086
        %v1301 = vpop.permute.xlu0 %1300
        %1304 = vset.pattern.permute.xlu0 0
        %1305 = vperm.xlu0 %1304, %v1087
        %v1306 = vpop.permute.xlu0 %1305
        %1309 = vset.pattern.permute.xlu0 0
        %1310 = vperm.xlu0 %1309, %v1088
        %v1311 = vpop.permute.xlu0 %1310
        %1314 = vset.pattern.permute.xlu0 0
        %1315 = vperm.xlu0 %1314, %v1089
        %v1316 = vpop.permute.xlu0 %1315
        %1319 = vset.pattern.permute.xlu0 0
        %1320 = vperm.xlu0 %1319, %v1090
        %v1321 = vpop.permute.xlu0 %1320
        %1324 = vset.pattern.permute.xlu0 0
        %1325 = vperm.xlu0 %1324, %v1091
        %v1326 = vpop.permute.xlu0 %1325
        %1329 = vset.pattern.permute.xlu0 0
        %1330 = vperm.xlu0 %1329, %v1092
        %v1331 = vpop.permute.xlu0 %1330
        %1334 = vset.pattern.permute.xlu0 0
        %1335 = vperm.xlu0 %1334, %v1093
        %v1336 = vpop.permute.xlu0 %1335
        %1339 = vset.pattern.permute.xlu0 0
        %1340 = vperm.xlu0 %1339, %v1094
        %v1341 = vpop.permute.xlu0 %1340
        %1344 = vset.pattern.permute.xlu0 0
        %1345 = vperm.xlu0 %1344, %v1095
        %v1346 = vpop.permute.xlu0 %1345
        %1349 = vset.pattern.permute.xlu0 0
        %1350 = vperm.xlu0 %1349, %v1096
        %v1351 = vpop.permute.xlu0 %1350
        %v1353 = vsub.f32 %v904, %v1196
        %v1354 = vsub.f32 %v905, %v1201
        %v1355 = vsub.f32 %v906, %v1206
        %v1356 = vsub.f32 %v907, %v1211
        %v1357 = vsub.f32 %v908, %v1216
        %v1358 = vsub.f32 %v909, %v1221
        %v1359 = vsub.f32 %v910, %v1226
        %v1360 = vsub.f32 %v911, %v1231
        %v1361 = vsub.f32 %v912, %v1236
        %v1362 = vsub.f32 %v913, %v1241
        %v1363 = vsub.f32 %v914, %v1246
        %v1364 = vsub.f32 %v915, %v1251
        %v1365 = vsub.f32 %v916, %v1256
        %v1366 = vsub.f32 %v917, %v1261
        %v1367 = vsub.f32 %v918, %v1266
        %v1368 = vsub.f32 %v919, %v1271
        %v1369 = vsub.f32 %v920, %v1276
        %v1370 = vsub.f32 %v921, %v1281
        %v1371 = vsub.f32 %v922, %v1286
        %v1372 = vsub.f32 %v923, %v1291
        %v1373 = vsub.f32 %v924, %v1296
        %v1374 = vsub.f32 %v925, %v1301
        %v1375 = vsub.f32 %v926, %v1306
        %v1376 = vsub.f32 %v927, %v1311
        %v1377 = vsub.f32 %v928, %v1316
        %v1378 = vsub.f32 %v929, %v1321
        %v1379 = vsub.f32 %v930, %v1326
        %v1380 = vsub.f32 %v931, %v1331
        %v1381 = vsub.f32 %v932, %v1336
        %v1382 = vsub.f32 %v933, %v1341
        %v1383 = vsub.f32 %v934, %v1346
        %v1384 = vsub.f32 %v935, %v1351
        %v1385 = vmul.f32 %v1353, 1.442695
        %v1386 = vpow.pop %v1385
        %v1387 = vmul.f32 %v1354, 1.442695
        %v1388 = vpow.pop %v1387
        %v1389 = vmul.f32 %v1355, 1.442695
        %v1390 = vpow.pop %v1389
        %v1391 = vmul.f32 %v1356, 1.442695
        %v1392 = vpow.pop %v1391
        %v1393 = vmul.f32 %v1357, 1.442695
        %v1394 = vpow.pop %v1393
        %v1395 = vmul.f32 %v1358, 1.442695
        %v1396 = vpow.pop %v1395
        %v1397 = vmul.f32 %v1359, 1.442695
        %v1398 = vpow.pop %v1397
        %v1399 = vmul.f32 %v1360, 1.442695
        %v1400 = vpow.pop %v1399
        %v1401 = vmul.f32 %v1361, 1.442695
        %v1402 = vpow.pop %v1401
        %v1403 = vmul.f32 %v1362, 1.442695
        %v1404 = vpow.pop %v1403
        %v1405 = vmul.f32 %v1363, 1.442695
        %v1406 = vpow.pop %v1405
        %v1407 = vmul.f32 %v1364, 1.442695
        %v1408 = vpow.pop %v1407
        %v1409 = vmul.f32 %v1365, 1.442695
        %v1410 = vpow.pop %v1409
        %v1411 = vmul.f32 %v1366, 1.442695
        %v1412 = vpow.pop %v1411
        %v1413 = vmul.f32 %v1367, 1.442695
        %v1414 = vpow.pop %v1413
        %v1415 = vmul.f32 %v1368, 1.442695
        %v1416 = vpow.pop %v1415
        %v1417 = vmul.f32 %v1369, 1.442695
        %v1418 = vpow.pop %v1417
        %v1419 = vmul.f32 %v1370, 1.442695
        %v1420 = vpow.pop %v1419
        %v1421 = vmul.f32 %v1371, 1.442695
        %v1422 = vpow.pop %v1421
        %v1423 = vmul.f32 %v1372, 1.442695
        %v1424 = vpow.pop %v1423
        %v1425 = vmul.f32 %v1373, 1.442695
        %v1426 = vpow.pop %v1425
        %v1427 = vmul.f32 %v1374, 1.442695
        %v1428 = vpow.pop %v1427
        %v1429 = vmul.f32 %v1375, 1.442695
        %v1430 = vpow.pop %v1429
        %v1431 = vmul.f32 %v1376, 1.442695
        %v1432 = vpow.pop %v1431
        %v1433 = vmul.f32 %v1377, 1.442695
        %v1434 = vpow.pop %v1433
        %v1435 = vmul.f32 %v1378, 1.442695
        %v1436 = vpow.pop %v1435
        %v1437 = vmul.f32 %v1379, 1.442695
        %v1438 = vpow.pop %v1437
        %v1439 = vmul.f32 %v1380, 1.442695
        %v1440 = vpow.pop %v1439
        %v1441 = vmul.f32 %v1381, 1.442695
        %v1442 = vpow.pop %v1441
        %v1443 = vmul.f32 %v1382, 1.442695
        %v1444 = vpow.pop %v1443
        %v1445 = vmul.f32 %v1383, 1.442695
        %v1446 = vpow.pop %v1445
        %v1447 = vmul.f32 %v1384, 1.442695
        %v1448 = vpow.pop %v1447
        %v1449 = vld [vmem:[#allocation3] sm:$0xff]
        %v1450 = vld [vmem:[#allocation3 + $0x8] sm:$0xff]
        %v1451 = vld [vmem:[#allocation3 + $0x10] sm:$0xff]
        %v1452 = vld [vmem:[#allocation3 + $0x18] sm:$0xff]
        %v1453 = vld [vmem:[#allocation3 + $0x20] sm:$0xff]
        %v1454 = vld [vmem:[#allocation3 + $0x28] sm:$0xff]
        %v1455 = vld [vmem:[#allocation3 + $0x30] sm:$0xff]
        %v1456 = vld [vmem:[#allocation3 + $0x38] sm:$0xff]
        %v1457 = vld [vmem:[#allocation3 + $0x40] sm:$0xff]
        %v1458 = vld [vmem:[#allocation3 + $0x48] sm:$0xff]
        %v1459 = vld [vmem:[#allocation3 + $0x50] sm:$0xff]
        %v1460 = vld [vmem:[#allocation3 + $0x58] sm:$0xff]
        %v1461 = vld [vmem:[#allocation3 + $0x60] sm:$0xff]
        %v1462 = vld [vmem:[#allocation3 + $0x68] sm:$0xff]
        %v1463 = vld [vmem:[#allocation3 + $0x70] sm:$0xff]
        %v1464 = vld [vmem:[#allocation3 + $0x78] sm:$0xff]
        %v1465 = vld [vmem:[#allocation3 + $0x80] sm:$0xff]
        %v1466 = vld [vmem:[#allocation3 + $0x88] sm:$0xff]
        %v1467 = vld [vmem:[#allocation3 + $0x90] sm:$0xff]
        %v1468 = vld [vmem:[#allocation3 + $0x98] sm:$0xff]
        %v1469 = vld [vmem:[#allocation3 + $0xa0] sm:$0xff]
        %v1470 = vld [vmem:[#allocation3 + $0xa8] sm:$0xff]
        %v1471 = vld [vmem:[#allocation3 + $0xb0] sm:$0xff]
        %v1472 = vld [vmem:[#allocation3 + $0xb8] sm:$0xff]
        %v1473 = vld [vmem:[#allocation3 + $0xc0] sm:$0xff]
        %v1474 = vld [vmem:[#allocation3 + $0xc8] sm:$0xff]
        %v1475 = vld [vmem:[#allocation3 + $0xd0] sm:$0xff]
        %v1476 = vld [vmem:[#allocation3 + $0xd8] sm:$0xff]
        %v1477 = vld [vmem:[#allocation3 + $0xe0] sm:$0xff]
        %v1478 = vld [vmem:[#allocation3 + $0xe8] sm:$0xff]
        %v1479 = vld [vmem:[#allocation3 + $0xf0] sm:$0xff]
        %v1480 = vld [vmem:[#allocation3 + $0xf8] sm:$0xff]
        %v1481 = vmul.f32 %v1130, %v1449
        %v1482 = vmul.f32 %v1132, %v1450
        %v1483 = vmul.f32 %v1134, %v1451
        %v1484 = vmul.f32 %v1136, %v1452
        %v1485 = vmul.f32 %v1138, %v1453
        %v1486 = vmul.f32 %v1140, %v1454
        %v1487 = vmul.f32 %v1142, %v1455
        %v1488 = vmul.f32 %v1144, %v1456
        %v1489 = vmul.f32 %v1146, %v1457
        %v1490 = vmul.f32 %v1148, %v1458
        %v1491 = vmul.f32 %v1150, %v1459
        %v1492 = vmul.f32 %v1152, %v1460
        %v1493 = vmul.f32 %v1154, %v1461
        %v1494 = vmul.f32 %v1156, %v1462
        %v1495 = vmul.f32 %v1158, %v1463
        %v1496 = vmul.f32 %v1160, %v1464
        %v1497 = vmul.f32 %v1162, %v1465
        %v1498 = vmul.f32 %v1164, %v1466
        %v1499 = vmul.f32 %v1166, %v1467
        %v1500 = vmul.f32 %v1168, %v1468
        %v1501 = vmul.f32 %v1170, %v1469
        %v1502 = vmul.f32 %v1172, %v1470
        %v1503 = vmul.f32 %v1174, %v1471
        %v1504 = vmul.f32 %v1176, %v1472
        %v1505 = vmul.f32 %v1178, %v1473
        %v1506 = vmul.f32 %v1180, %v1474
        %v1507 = vmul.f32 %v1182, %v1475
        %v1508 = vmul.f32 %v1184, %v1476
        %v1509 = vmul.f32 %v1186, %v1477
        %v1510 = vmul.f32 %v1188, %v1478
        %v1511 = vmul.f32 %v1190, %v1479
        %v1512 = vmul.f32 %v1192, %v1480
        %v1513 = vsel %vm968, %v1386, 0.0
        %1514 = vadd.xlane.f32.xlu0 %v1513
        %v1515 = vpop.xlane.xlu0 %1514
        %v1516 = vsel %vm968, %v1388, 0.0
        %1517 = vadd.xlane.f32.xlu0 %v1516
        %v1518 = vpop.xlane.xlu0 %1517
        %v1519 = vsel %vm968, %v1390, 0.0
        %1520 = vadd.xlane.f32.xlu0 %v1519
        %v1521 = vpop.xlane.xlu0 %1520
        %v1522 = vsel %vm968, %v1392, 0.0
        %1523 = vadd.xlane.f32.xlu0 %v1522
        %v1524 = vpop.xlane.xlu0 %1523
        %v1525 = vsel %vm968, %v1394, 0.0
        %1526 = vadd.xlane.f32.xlu0 %v1525
        %v1527 = vpop.xlane.xlu0 %1526
        %v1528 = vsel %vm968, %v1396, 0.0
        %1529 = vadd.xlane.f32.xlu0 %v1528
        %v1530 = vpop.xlane.xlu0 %1529
        %v1531 = vsel %vm968, %v1398, 0.0
        %1532 = vadd.xlane.f32.xlu0 %v1531
        %v1533 = vpop.xlane.xlu0 %1532
        %v1534 = vsel %vm968, %v1400, 0.0
        %1535 = vadd.xlane.f32.xlu0 %v1534
        %v1536 = vpop.xlane.xlu0 %1535
        %v1537 = vsel %vm968, %v1402, 0.0
        %1538 = vadd.xlane.f32.xlu0 %v1537
        %v1539 = vpop.xlane.xlu0 %1538
        %v1540 = vsel %vm968, %v1404, 0.0
        %1541 = vadd.xlane.f32.xlu0 %v1540
        %v1542 = vpop.xlane.xlu0 %1541
        %v1543 = vsel %vm968, %v1406, 0.0
        %1544 = vadd.xlane.f32.xlu0 %v1543
        %v1545 = vpop.xlane.xlu0 %1544
        %v1546 = vsel %vm968, %v1408, 0.0
        %1547 = vadd.xlane.f32.xlu0 %v1546
        %v1548 = vpop.xlane.xlu0 %1547
        %v1549 = vsel %vm968, %v1410, 0.0
        %1550 = vadd.xlane.f32.xlu0 %v1549
        %v1551 = vpop.xlane.xlu0 %1550
        %v1552 = vsel %vm968, %v1412, 0.0
        %1553 = vadd.xlane.f32.xlu0 %v1552
        %v1554 = vpop.xlane.xlu0 %1553
        %v1555 = vsel %vm968, %v1414, 0.0
        %1556 = vadd.xlane.f32.xlu0 %v1555
        %v1557 = vpop.xlane.xlu0 %1556
        %v1558 = vsel %vm968, %v1416, 0.0
        %1559 = vadd.xlane.f32.xlu0 %v1558
        %v1560 = vpop.xlane.xlu0 %1559
        %v1561 = vsel %vm968, %v1418, 0.0
        %1562 = vadd.xlane.f32.xlu0 %v1561
        %v1563 = vpop.xlane.xlu0 %1562
        %v1564 = vsel %vm968, %v1420, 0.0
        %1565 = vadd.xlane.f32.xlu0 %v1564
        %v1566 = vpop.xlane.xlu0 %1565
        %v1567 = vsel %vm968, %v1422, 0.0
        %1568 = vadd.xlane.f32.xlu0 %v1567
        %v1569 = vpop.xlane.xlu0 %1568
        %v1570 = vsel %vm968, %v1424, 0.0
        %1571 = vadd.xlane.f32.xlu0 %v1570
        %v1572 = vpop.xlane.xlu0 %1571
        %v1573 = vsel %vm968, %v1426, 0.0
        %1574 = vadd.xlane.f32.xlu0 %v1573
        %v1575 = vpop.xlane.xlu0 %1574
        %v1576 = vsel %vm968, %v1428, 0.0
        %1577 = vadd.xlane.f32.xlu0 %v1576
        %v1578 = vpop.xlane.xlu0 %1577
        %v1579 = vsel %vm968, %v1430, 0.0
        %1580 = vadd.xlane.f32.xlu0 %v1579
        %v1581 = vpop.xlane.xlu0 %1580
        %v1582 = vsel %vm968, %v1432, 0.0
        %1583 = vadd.xlane.f32.xlu0 %v1582
        %v1584 = vpop.xlane.xlu0 %1583
        %v1585 = vsel %vm968, %v1434, 0.0
        %1586 = vadd.xlane.f32.xlu0 %v1585
        %v1587 = vpop.xlane.xlu0 %1586
        %v1588 = vsel %vm968, %v1436, 0.0
        %1589 = vadd.xlane.f32.xlu0 %v1588
        %v1590 = vpop.xlane.xlu0 %1589
        %v1591 = vsel %vm968, %v1438, 0.0
        %1592 = vadd.xlane.f32.xlu0 %v1591
        %v1593 = vpop.xlane.xlu0 %1592
        %v1594 = vsel %vm968, %v1440, 0.0
        %1595 = vadd.xlane.f32.xlu0 %v1594
        %v1596 = vpop.xlane.xlu0 %1595
        %v1597 = vsel %vm968, %v1442, 0.0
        %1598 = vadd.xlane.f32.xlu0 %v1597
        %v1599 = vpop.xlane.xlu0 %1598
        %v1600 = vsel %vm968, %v1444, 0.0
        %1601 = vadd.xlane.f32.xlu0 %v1600
        %v1602 = vpop.xlane.xlu0 %1601
        %v1603 = vsel %vm968, %v1446, 0.0
        %1604 = vadd.xlane.f32.xlu0 %v1603
        %v1605 = vpop.xlane.xlu0 %1604
        %v1606 = vsel %vm968, %v1448, 0.0
        %1607 = vadd.xlane.f32.xlu0 %v1606
        %v1608 = vpop.xlane.xlu0 %1607
        %v1609 = vadd.f32 %v1481, %v1515
        %v1610 = vadd.f32 %v1482, %v1518
        %v1611 = vadd.f32 %v1483, %v1521
        %v1612 = vadd.f32 %v1484, %v1524
        %v1613 = vadd.f32 %v1485, %v1527
        %v1614 = vadd.f32 %v1486, %v1530
        %v1615 = vadd.f32 %v1487, %v1533
        %v1616 = vadd.f32 %v1488, %v1536
        %v1617 = vadd.f32 %v1489, %v1539
        %v1618 = vadd.f32 %v1490, %v1542
        %v1619 = vadd.f32 %v1491, %v1545
        %v1620 = vadd.f32 %v1492, %v1548
        %v1621 = vadd.f32 %v1493, %v1551
        %v1622 = vadd.f32 %v1494, %v1554
        %v1623 = vadd.f32 %v1495, %v1557
        %v1624 = vadd.f32 %v1496, %v1560
        %v1625 = vadd.f32 %v1497, %v1563
        %v1626 = vadd.f32 %v1498, %v1566
        %v1627 = vadd.f32 %v1499, %v1569
        %v1628 = vadd.f32 %v1500, %v1572
        %v1629 = vadd.f32 %v1501, %v1575
        %v1630 = vadd.f32 %v1502, %v1578
        %v1631 = vadd.f32 %v1503, %v1581
        %v1632 = vadd.f32 %v1504, %v1584
        %v1633 = vadd.f32 %v1505, %v1587
        %v1634 = vadd.f32 %v1506, %v1590
        %v1635 = vadd.f32 %v1507, %v1593
        %v1636 = vadd.f32 %v1508, %v1596
        %v1637 = vadd.f32 %v1509, %v1599
        %v1638 = vadd.f32 %v1510, %v1602
        %v1639 = vadd.f32 %v1511, %v1605
        %v1640 = vadd.f32 %v1512, %v1608
        %vm1641 = vcmask 7168
        %1642 = vst.msk [vmem:[#allocation3] sm:$0xff] %vm1641, %v1609
        %1643 = vst.msk [vmem:[#allocation3 + $0x8] sm:$0xff] %vm1641, %v1610
        %1644 = vst.msk [vmem:[#allocation3 + $0x10] sm:$0xff] %vm1641, %v1611
        %1645 = vst.msk [vmem:[#allocation3 + $0x18] sm:$0xff] %vm1641, %v1612
        %1646 = vst.msk [vmem:[#allocation3 + $0x20] sm:$0xff] %vm1641, %v1613
        %1647 = vst.msk [vmem:[#allocation3 + $0x28] sm:$0xff] %vm1641, %v1614
        %1648 = vst.msk [vmem:[#allocation3 + $0x30] sm:$0xff] %vm1641, %v1615
        %1649 = vst.msk [vmem:[#allocation3 + $0x38] sm:$0xff] %vm1641, %v1616
        %1650 = vst.msk [vmem:[#allocation3 + $0x40] sm:$0xff] %vm1641, %v1617
        %1651 = vst.msk [vmem:[#allocation3 + $0x48] sm:$0xff] %vm1641, %v1618
        %1652 = vst.msk [vmem:[#allocation3 + $0x50] sm:$0xff] %vm1641, %v1619
        %1653 = vst.msk [vmem:[#allocation3 + $0x58] sm:$0xff] %vm1641, %v1620
        %1654 = vst.msk [vmem:[#allocation3 + $0x60] sm:$0xff] %vm1641, %v1621
        %1655 = vst.msk [vmem:[#allocation3 + $0x68] sm:$0xff] %vm1641, %v1622
        %1656 = vst.msk [vmem:[#allocation3 + $0x70] sm:$0xff] %vm1641, %v1623
        %1657 = vst.msk [vmem:[#allocation3 + $0x78] sm:$0xff] %vm1641, %v1624
        %1658 = vst.msk [vmem:[#allocation3 + $0x80] sm:$0xff] %vm1641, %v1625
        %1659 = vst.msk [vmem:[#allocation3 + $0x88] sm:$0xff] %vm1641, %v1626
        %1660 = vst.msk [vmem:[#allocation3 + $0x90] sm:$0xff] %vm1641, %v1627
        %1661 = vst.msk [vmem:[#allocation3 + $0x98] sm:$0xff] %vm1641, %v1628
        %1662 = vst.msk [vmem:[#allocation3 + $0xa0] sm:$0xff] %vm1641, %v1629
        %1663 = vst.msk [vmem:[#allocation3 + $0xa8] sm:$0xff] %vm1641, %v1630
        %1664 = vst.msk [vmem:[#allocation3 + $0xb0] sm:$0xff] %vm1641, %v1631
        %1665 = vst.msk [vmem:[#allocation3 + $0xb8] sm:$0xff] %vm1641, %v1632
        %1666 = vst.msk [vmem:[#allocation3 + $0xc0] sm:$0xff] %vm1641, %v1633
        %1667 = vst.msk [vmem:[#allocation3 + $0xc8] sm:$0xff] %vm1641, %v1634
        %1668 = vst.msk [vmem:[#allocation3 + $0xd0] sm:$0xff] %vm1641, %v1635
        %1669 = vst.msk [vmem:[#allocation3 + $0xd8] sm:$0xff] %vm1641, %v1636
        %1670 = vst.msk [vmem:[#allocation3 + $0xe0] sm:$0xff] %vm1641, %v1637
        %1671 = vst.msk [vmem:[#allocation3 + $0xe8] sm:$0xff] %vm1641, %v1638
        %1672 = vst.msk [vmem:[#allocation3 + $0xf0] sm:$0xff] %vm1641, %v1639
        %1673 = vst.msk [vmem:[#allocation3 + $0xf8] sm:$0xff] %vm1641, %v1640
        %v1674 = vld [vmem:[#allocation4] sm:$0xff]
        %v1675 = vld [vmem:[#allocation4 + $0x8] sm:$0xff]
        %v1676 = vld [vmem:[#allocation4 + $0x10] sm:$0xff]
        %v1677 = vld [vmem:[#allocation4 + $0x18] sm:$0xff]
        %v1678 = vld [vmem:[#allocation4 + $0x20] sm:$0xff]
        %v1679 = vld [vmem:[#allocation4 + $0x28] sm:$0xff]
        %v1680 = vld [vmem:[#allocation4 + $0x30] sm:$0xff]
        %v1681 = vld [vmem:[#allocation4 + $0x38] sm:$0xff]
        %v1682 = vld [vmem:[#allocation4 + $0x40] sm:$0xff]
        %v1683 = vld [vmem:[#allocation4 + $0x48] sm:$0xff]
        %v1684 = vld [vmem:[#allocation4 + $0x50] sm:$0xff]
        %v1685 = vld [vmem:[#allocation4 + $0x58] sm:$0xff]
        %v1686 = vld [vmem:[#allocation4 + $0x60] sm:$0xff]
        %v1687 = vld [vmem:[#allocation4 + $0x68] sm:$0xff]
        %v1688 = vld [vmem:[#allocation4 + $0x70] sm:$0xff]
        %v1689 = vld [vmem:[#allocation4 + $0x78] sm:$0xff]
        %v1690 = vld [vmem:[#allocation4 + $0x80] sm:$0xff]
        %v1691 = vld [vmem:[#allocation4 + $0x88] sm:$0xff]
        %v1692 = vld [vmem:[#allocation4 + $0x90] sm:$0xff]
        %v1693 = vld [vmem:[#allocation4 + $0x98] sm:$0xff]
        %v1694 = vld [vmem:[#allocation4 + $0xa0] sm:$0xff]
        %v1695 = vld [vmem:[#allocation4 + $0xa8] sm:$0xff]
        %v1696 = vld [vmem:[#allocation4 + $0xb0] sm:$0xff]
        %v1697 = vld [vmem:[#allocation4 + $0xb8] sm:$0xff]
        %v1698 = vld [vmem:[#allocation4 + $0xc0] sm:$0xff]
        %v1699 = vld [vmem:[#allocation4 + $0xc8] sm:$0xff]
        %v1700 = vld [vmem:[#allocation4 + $0xd0] sm:$0xff]
        %v1701 = vld [vmem:[#allocation4 + $0xd8] sm:$0xff]
        %v1702 = vld [vmem:[#allocation4 + $0xe0] sm:$0xff]
        %v1703 = vld [vmem:[#allocation4 + $0xe8] sm:$0xff]
        %v1704 = vld [vmem:[#allocation4 + $0xf0] sm:$0xff]
        %v1705 = vld [vmem:[#allocation4 + $0xf8] sm:$0xff]
        %1707 = vset.pattern.permute.xlu0 0
        %1708 = vperm.xlu0 %1707, %v1130
        %v1709 = vpop.permute.xlu0 %1708
        %1712 = vset.pattern.permute.xlu0 0
        %1713 = vperm.xlu0 %1712, %v1132
        %v1714 = vpop.permute.xlu0 %1713
        %1717 = vset.pattern.permute.xlu0 0
        %1718 = vperm.xlu0 %1717, %v1134
        %v1719 = vpop.permute.xlu0 %1718
        %1722 = vset.pattern.permute.xlu0 0
        %1723 = vperm.xlu0 %1722, %v1136
        %v1724 = vpop.permute.xlu0 %1723
        %1727 = vset.pattern.permute.xlu0 0
        %1728 = vperm.xlu0 %1727, %v1138
        %v1729 = vpop.permute.xlu0 %1728
        %1732 = vset.pattern.permute.xlu0 0
        %1733 = vperm.xlu0 %1732, %v1140
        %v1734 = vpop.permute.xlu0 %1733
        %1737 = vset.pattern.permute.xlu0 0
        %1738 = vperm.xlu0 %1737, %v1142
        %v1739 = vpop.permute.xlu0 %1738
        %1742 = vset.pattern.permute.xlu0 0
        %1743 = vperm.xlu0 %1742, %v1144
        %v1744 = vpop.permute.xlu0 %1743
        %1747 = vset.pattern.permute.xlu0 0
        %1748 = vperm.xlu0 %1747, %v1146
        %v1749 = vpop.permute.xlu0 %1748
        %1752 = vset.pattern.permute.xlu0 0
        %1753 = vperm.xlu0 %1752, %v1148
        %v1754 = vpop.permute.xlu0 %1753
        %1757 = vset.pattern.permute.xlu0 0
        %1758 = vperm.xlu0 %1757, %v1150
        %v1759 = vpop.permute.xlu0 %1758
        %1762 = vset.pattern.permute.xlu0 0
        %1763 = vperm.xlu0 %1762, %v1152
        %v1764 = vpop.permute.xlu0 %1763
        %1767 = vset.pattern.permute.xlu0 0
        %1768 = vperm.xlu0 %1767, %v1154
        %v1769 = vpop.permute.xlu0 %1768
        %1772 = vset.pattern.permute.xlu0 0
        %1773 = vperm.xlu0 %1772, %v1156
        %v1774 = vpop.permute.xlu0 %1773
        %1777 = vset.pattern.permute.xlu0 0
        %1778 = vperm.xlu0 %1777, %v1158
        %v1779 = vpop.permute.xlu0 %1778
        %1782 = vset.pattern.permute.xlu0 0
        %1783 = vperm.xlu0 %1782, %v1160
        %v1784 = vpop.permute.xlu0 %1783
        %1787 = vset.pattern.permute.xlu0 0
        %1788 = vperm.xlu0 %1787, %v1162
        %v1789 = vpop.permute.xlu0 %1788
        %1792 = vset.pattern.permute.xlu0 0
        %1793 = vperm.xlu0 %1792, %v1164
        %v1794 = vpop.permute.xlu0 %1793
        %1797 = vset.pattern.permute.xlu0 0
        %1798 = vperm.xlu0 %1797, %v1166
        %v1799 = vpop.permute.xlu0 %1798
        %1802 = vset.pattern.permute.xlu0 0
        %1803 = vperm.xlu0 %1802, %v1168
        %v1804 = vpop.permute.xlu0 %1803
        %1807 = vset.pattern.permute.xlu0 0
        %1808 = vperm.xlu0 %1807, %v1170
        %v1809 = vpop.permute.xlu0 %1808
        %1812 = vset.pattern.permute.xlu0 0
        %1813 = vperm.xlu0 %1812, %v1172
        %v1814 = vpop.permute.xlu0 %1813
        %1817 = vset.pattern.permute.xlu0 0
        %1818 = vperm.xlu0 %1817, %v1174
        %v1819 = vpop.permute.xlu0 %1818
        %1822 = vset.pattern.permute.xlu0 0
        %1823 = vperm.xlu0 %1822, %v1176
        %v1824 = vpop.permute.xlu0 %1823
        %1827 = vset.pattern.permute.xlu0 0
        %1828 = vperm.xlu0 %1827, %v1178
        %v1829 = vpop.permute.xlu0 %1828
        %1832 = vset.pattern.permute.xlu0 0
        %1833 = vperm.xlu0 %1832, %v1180
        %v1834 = vpop.permute.xlu0 %1833
        %1837 = vset.pattern.permute.xlu0 0
        %1838 = vperm.xlu0 %1837, %v1182
        %v1839 = vpop.permute.xlu0 %1838
        %1842 = vset.pattern.permute.xlu0 0
        %1843 = vperm.xlu0 %1842, %v1184
        %v1844 = vpop.permute.xlu0 %1843
        %1847 = vset.pattern.permute.xlu0 0
        %1848 = vperm.xlu0 %1847, %v1186
        %v1849 = vpop.permute.xlu0 %1848
        %1852 = vset.pattern.permute.xlu0 0
        %1853 = vperm.xlu0 %1852, %v1188
        %v1854 = vpop.permute.xlu0 %1853
        %1857 = vset.pattern.permute.xlu0 0
        %1858 = vperm.xlu0 %1857, %v1190
        %v1859 = vpop.permute.xlu0 %1858
        %1862 = vset.pattern.permute.xlu0 0
        %1863 = vperm.xlu0 %1862, %v1192
        %v1864 = vpop.permute.xlu0 %1863
        %v1866 = vmul.f32 %v1709, %v1674
        %v1867 = vmul.f32 %v1714, %v1675
        %v1868 = vmul.f32 %v1719, %v1676
        %v1869 = vmul.f32 %v1724, %v1677
        %v1870 = vmul.f32 %v1729, %v1678
        %v1871 = vmul.f32 %v1734, %v1679
        %v1872 = vmul.f32 %v1739, %v1680
        %v1873 = vmul.f32 %v1744, %v1681
        %v1874 = vmul.f32 %v1749, %v1682
        %v1875 = vmul.f32 %v1754, %v1683
        %v1876 = vmul.f32 %v1759, %v1684
        %v1877 = vmul.f32 %v1764, %v1685
        %v1878 = vmul.f32 %v1769, %v1686
        %v1879 = vmul.f32 %v1774, %v1687
        %v1880 = vmul.f32 %v1779, %v1688
        %v1881 = vmul.f32 %v1784, %v1689
        %v1882 = vmul.f32 %v1789, %v1690
        %v1883 = vmul.f32 %v1794, %v1691
        %v1884 = vmul.f32 %v1799, %v1692
        %v1885 = vmul.f32 %v1804, %v1693
        %v1886 = vmul.f32 %v1809, %v1694
        %v1887 = vmul.f32 %v1814, %v1695
        %v1888 = vmul.f32 %v1819, %v1696
        %v1889 = vmul.f32 %v1824, %v1697
        %v1890 = vmul.f32 %v1829, %v1698
        %v1891 = vmul.f32 %v1834, %v1699
        %v1892 = vmul.f32 %v1839, %v1700
        %v1893 = vmul.f32 %v1844, %v1701
        %v1894 = vmul.f32 %v1849, %v1702
        %v1895 = vmul.f32 %v1854, %v1703
        %v1896 = vmul.f32 %v1859, %v1704
        %v1897 = vmul.f32 %v1864, %v1705
        %v1898 = vpack.c.bf16 %v1386, %v1386
        %v1899 = vpack.c.bf16 %v1388, %v1388
        %v1900 = vpack.c.bf16 %v1390, %v1390
        %v1901 = vpack.c.bf16 %v1392, %v1392
        %v1902 = vpack.c.bf16 %v1394, %v1394
        %v1903 = vpack.c.bf16 %v1396, %v1396
        %v1904 = vpack.c.bf16 %v1398, %v1398
        %v1905 = vpack.c.bf16 %v1400, %v1400
        %v1906 = vpack.c.bf16 %v1402, %v1402
        %v1907 = vpack.c.bf16 %v1404, %v1404
        %v1908 = vpack.c.bf16 %v1406, %v1406
        %v1909 = vpack.c.bf16 %v1408, %v1408
        %v1910 = vpack.c.bf16 %v1410, %v1410
        %v1911 = vpack.c.bf16 %v1412, %v1412
        %v1912 = vpack.c.bf16 %v1414, %v1414
        %v1913 = vpack.c.bf16 %v1416, %v1416
        %v1914 = vpack.c.bf16 %v1418, %v1418
        %v1915 = vpack.c.bf16 %v1420, %v1420
        %v1916 = vpack.c.bf16 %v1422, %v1422
        %v1917 = vpack.c.bf16 %v1424, %v1424
        %v1918 = vpack.c.bf16 %v1426, %v1426
        %v1919 = vpack.c.bf16 %v1428, %v1428
        %v1920 = vpack.c.bf16 %v1430, %v1430
        %v1921 = vpack.c.bf16 %v1432, %v1432
        %v1922 = vpack.c.bf16 %v1434, %v1434
        %v1923 = vpack.c.bf16 %v1436, %v1436
        %v1924 = vpack.c.bf16 %v1438, %v1438
        %v1925 = vpack.c.bf16 %v1440, %v1440
        %v1926 = vpack.c.bf16 %v1442, %v1442
        %v1927 = vpack.c.bf16 %v1444, %v1444
        %v1928 = vpack.c.bf16 %v1446, %v1446
        %v1929 = vpack.c.bf16 %v1448, %v1448
        %v1946 = vunpack.c.l.b16 %v1898
        %v1947 = vunpack.c.l.b16 %v1899
        %v1948 = vunpack.c.l.b16 %v1900
        %v1949 = vunpack.c.l.b16 %v1901
        %v1950 = vunpack.c.l.b16 %v1902
        %v1951 = vunpack.c.l.b16 %v1903
        %v1952 = vunpack.c.l.b16 %v1904
        %v1953 = vunpack.c.l.b16 %v1905
        %v1954 = vunpack.c.l.b16 %v1906
        %v1955 = vunpack.c.l.b16 %v1907
        %v1956 = vunpack.c.l.b16 %v1908
        %v1957 = vunpack.c.l.b16 %v1909
        %v1958 = vunpack.c.l.b16 %v1910
        %v1959 = vunpack.c.l.b16 %v1911
        %v1960 = vunpack.c.l.b16 %v1912
        %v1961 = vunpack.c.l.b16 %v1913
        %v1962 = vpack.c.b16 %v1947, %v1946
        %v1963 = vpack.c.b16 %v1949, %v1948
        %v1964 = vpack.c.b16 %v1951, %v1950
        %v1965 = vpack.c.b16 %v1953, %v1952
        %v1966 = vpack.c.b16 %v1955, %v1954
        %v1967 = vpack.c.b16 %v1957, %v1956
        %v1968 = vpack.c.b16 %v1959, %v1958
        %v1969 = vpack.c.b16 %v1961, %v1960
        %v1978 = vunpack.c.l.b16 %v597
        %v1979 = vunpack.c.l.b16 %v598
        %v1980 = vunpack.c.l.b16 %v599
        %v1981 = vunpack.c.l.b16 %v600
        %v1982 = vunpack.c.l.b16 %v601
        %v1983 = vunpack.c.l.b16 %v602
        %v1984 = vunpack.c.l.b16 %v603
        %v1985 = vunpack.c.l.b16 %v604
        %v1986 = vpack.c.b16 %v1979, %v1978
        %v1987 = vpack.c.b16 %v1981, %v1980
        %v1988 = vpack.c.b16 %v1983, %v1982
        %v1989 = vpack.c.b16 %v1985, %v1984
        %v1995 = vsel %vm968, %v1962, 0
        %v1998 = vsel %vm968, %v1963, 0
        %v2001 = vsel %vm968, %v1964, 0
        %v2004 = vsel %vm968, %v1965, 0
        %v2007 = vsel %vm968, %v1966, 0
        %v2010 = vsel %vm968, %v1967, 0
        %v2013 = vsel %vm968, %v1968, 0
        %v2016 = vsel %vm968, %v1969, 0
        %2018 = vmatpush.bf16.msra.mxu0 0
        %2019 = vmatpush.bf16.msra.mxu0 0
        %2020 = vmatpush.bf16.msra.mxu0 0
        %2021 = vmatpush.bf16.msra.mxu0 0
        %2022 = vmatpush.bf16.msra.mxu0 %v1989
        %2023 = vmatpush.bf16.msra.mxu0 %v1988
        %2024 = vmatpush.bf16.msra.mxu0 %v1987
        %2025 = vmatpush.bf16.msra.mxu0 %v1986
        %2026 = vmatmul.bf16.gmra.mxu0 %v1995
        %v2027 = vpop.f32.mrf.mxu0
        %v2028 = vadd.f32 0.0, %v2027
        %v2029 = vpop.f32.mrf.mxu0
        %v2030 = vadd.f32 0.0, %v2029
        %2031 = vmatmul.bf16.gmra.mxu0 %v1998
        %v2032 = vpop.f32.mrf.mxu0
        %v2033 = vadd.f32 0.0, %v2032
        %v2034 = vpop.f32.mrf.mxu0
        %v2035 = vadd.f32 0.0, %v2034
        %2036 = vmatmul.bf16.gmra.mxu0 %v2001
        %v2037 = vpop.f32.mrf.mxu0
        %v2038 = vadd.f32 0.0, %v2037
        %v2039 = vpop.f32.mrf.mxu0
        %v2040 = vadd.f32 0.0, %v2039
        %2041 = vmatmul.bf16.gmra.mxu0 %v2004
        %v2042 = vpop.f32.mrf.mxu0
        %v2043 = vadd.f32 0.0, %v2042
        %v2044 = vpop.f32.mrf.mxu0
        %v2045 = vadd.f32 0.0, %v2044
        %2046 = vmatmul.bf16.gmra.mxu0 %v2007
        %v2047 = vpop.f32.mrf.mxu0
        %v2048 = vadd.f32 0.0, %v2047
        %v2049 = vpop.f32.mrf.mxu0
        %v2050 = vadd.f32 0.0, %v2049
        %2051 = vmatmul.bf16.gmra.mxu0 %v2010
        %v2052 = vpop.f32.mrf.mxu0
        %v2053 = vadd.f32 0.0, %v2052
        %v2054 = vpop.f32.mrf.mxu0
        %v2055 = vadd.f32 0.0, %v2054
        %2056 = vmatmul.bf16.gmra.mxu0 %v2013
        %v2057 = vpop.f32.mrf.mxu0
        %v2058 = vadd.f32 0.0, %v2057
        %v2059 = vpop.f32.mrf.mxu0
        %v2060 = vadd.f32 0.0, %v2059
        %2061 = vmatmul.bf16.gmra.mxu0 %v2016
        %v2062 = vpop.f32.mrf.mxu0
        %v2063 = vadd.f32 0.0, %v2062
        %v2064 = vpop.f32.mrf.mxu0
        %v2065 = vadd.f32 0.0, %v2064
        %2066 = vdwg.mxu0
        %v2083 = vunpack.c.l.b16 %v1914
        %v2084 = vunpack.c.l.b16 %v1915
        %v2085 = vunpack.c.l.b16 %v1916
        %v2086 = vunpack.c.l.b16 %v1917
        %v2087 = vunpack.c.l.b16 %v1918
        %v2088 = vunpack.c.l.b16 %v1919
        %v2089 = vunpack.c.l.b16 %v1920
        %v2090 = vunpack.c.l.b16 %v1921
        %v2091 = vunpack.c.l.b16 %v1922
        %v2092 = vunpack.c.l.b16 %v1923
        %v2093 = vunpack.c.l.b16 %v1924
        %v2094 = vunpack.c.l.b16 %v1925
        %v2095 = vunpack.c.l.b16 %v1926
        %v2096 = vunpack.c.l.b16 %v1927
        %v2097 = vunpack.c.l.b16 %v1928
        %v2098 = vunpack.c.l.b16 %v1929
        %v2099 = vpack.c.b16 %v2084, %v2083
        %v2100 = vpack.c.b16 %v2086, %v2085
        %v2101 = vpack.c.b16 %v2088, %v2087
        %v2102 = vpack.c.b16 %v2090, %v2089
        %v2103 = vpack.c.b16 %v2092, %v2091
        %v2104 = vpack.c.b16 %v2094, %v2093
        %v2105 = vpack.c.b16 %v2096, %v2095
        %v2106 = vpack.c.b16 %v2098, %v2097
        %v2115 = vunpack.c.l.b16 %v605
        %v2116 = vunpack.c.l.b16 %v606
        %v2117 = vunpack.c.l.b16 %v607
        %v2118 = vunpack.c.l.b16 %v608
        %v2119 = vunpack.c.l.b16 %v609
        %v2120 = vunpack.c.l.b16 %v610
        %v2121 = vunpack.c.l.b16 %v611
        %v2122 = vunpack.c.l.b16 %v612
        %v2123 = vpack.c.b16 %v2116, %v2115
        %v2124 = vpack.c.b16 %v2118, %v2117
        %v2125 = vpack.c.b16 %v2120, %v2119
        %v2126 = vpack.c.b16 %v2122, %v2121
        %v2132 = vsel %vm968, %v2099, 0
        %v2135 = vsel %vm968, %v2100, 0
        %v2138 = vsel %vm968, %v2101, 0
        %v2141 = vsel %vm968, %v2102, 0
        %v2144 = vsel %vm968, %v2103, 0
        %v2147 = vsel %vm968, %v2104, 0
        %v2150 = vsel %vm968, %v2105, 0
        %v2153 = vsel %vm968, %v2106, 0
        %2155 = vmatpush.bf16.msra.mxu0 0
        %2156 = vmatpush.bf16.msra.mxu0 0
        %2157 = vmatpush.bf16.msra.mxu0 0
        %2158 = vmatpush.bf16.msra.mxu0 0
        %2159 = vmatpush.bf16.msra.mxu0 %v2126
        %2160 = vmatpush.bf16.msra.mxu0 %v2125
        %2161 = vmatpush.bf16.msra.mxu0 %v2124
        %2162 = vmatpush.bf16.msra.mxu0 %v2123
        %2163 = vmatmul.bf16.gmra.mxu0 %v2132
        %v2164 = vpop.f32.mrf.mxu0
        %v2165 = vadd.f32 0.0, %v2164
        %v2166 = vpop.f32.mrf.mxu0
        %v2167 = vadd.f32 0.0, %v2166
        %2168 = vmatmul.bf16.gmra.mxu0 %v2135
        %v2169 = vpop.f32.mrf.mxu0
        %v2170 = vadd.f32 0.0, %v2169
        %v2171 = vpop.f32.mrf.mxu0
        %v2172 = vadd.f32 0.0, %v2171
        %2173 = vmatmul.bf16.gmra.mxu0 %v2138
        %v2174 = vpop.f32.mrf.mxu0
        %v2175 = vadd.f32 0.0, %v2174
        %v2176 = vpop.f32.mrf.mxu0
        %v2177 = vadd.f32 0.0, %v2176
        %2178 = vmatmul.bf16.gmra.mxu0 %v2141
        %v2179 = vpop.f32.mrf.mxu0
        %v2180 = vadd.f32 0.0, %v2179
        %v2181 = vpop.f32.mrf.mxu0
        %v2182 = vadd.f32 0.0, %v2181
        %2183 = vmatmul.bf16.gmra.mxu0 %v2144
        %v2184 = vpop.f32.mrf.mxu0
        %v2185 = vadd.f32 0.0, %v2184
        %v2186 = vpop.f32.mrf.mxu0
        %v2187 = vadd.f32 0.0, %v2186
        %2188 = vmatmul.bf16.gmra.mxu0 %v2147
        %v2189 = vpop.f32.mrf.mxu0
        %v2190 = vadd.f32 0.0, %v2189
        %v2191 = vpop.f32.mrf.mxu0
        %v2192 = vadd.f32 0.0, %v2191
        %2193 = vmatmul.bf16.gmra.mxu0 %v2150
        %v2194 = vpop.f32.mrf.mxu0
        %v2195 = vadd.f32 0.0, %v2194
        %v2196 = vpop.f32.mrf.mxu0
        %v2197 = vadd.f32 0.0, %v2196
        %2198 = vmatmul.bf16.gmra.mxu0 %v2153
        %v2199 = vpop.f32.mrf.mxu0
        %v2200 = vadd.f32 0.0, %v2199
        %v2201 = vpop.f32.mrf.mxu0
        %v2202 = vadd.f32 0.0, %v2201
        %2203 = vdwg.mxu0
        %v2204 = vadd.f32 %v1866, %v2028
        %v2205 = vadd.f32 %v1867, %v2030
        %v2206 = vadd.f32 %v1868, %v2033
        %v2207 = vadd.f32 %v1869, %v2035
        %v2208 = vadd.f32 %v1870, %v2038
        %v2209 = vadd.f32 %v1871, %v2040
        %v2210 = vadd.f32 %v1872, %v2043
        %v2211 = vadd.f32 %v1873, %v2045
        %v2212 = vadd.f32 %v1874, %v2048
        %v2213 = vadd.f32 %v1875, %v2050
        %v2214 = vadd.f32 %v1876, %v2053
        %v2215 = vadd.f32 %v1877, %v2055
        %v2216 = vadd.f32 %v1878, %v2058
        %v2217 = vadd.f32 %v1879, %v2060
        %v2218 = vadd.f32 %v1880, %v2063
        %v2219 = vadd.f32 %v1881, %v2065
        %v2220 = vadd.f32 %v1882, %v2165
        %v2221 = vadd.f32 %v1883, %v2167
        %v2222 = vadd.f32 %v1884, %v2170
        %v2223 = vadd.f32 %v1885, %v2172
        %v2224 = vadd.f32 %v1886, %v2175
        %v2225 = vadd.f32 %v1887, %v2177
        %v2226 = vadd.f32 %v1888, %v2180
        %v2227 = vadd.f32 %v1889, %v2182
        %v2228 = vadd.f32 %v1890, %v2185
        %v2229 = vadd.f32 %v1891, %v2187
        %v2230 = vadd.f32 %v1892, %v2190
        %v2231 = vadd.f32 %v1893, %v2192
        %v2232 = vadd.f32 %v1894, %v2195
        %v2233 = vadd.f32 %v1895, %v2197
        %v2234 = vadd.f32 %v1896, %v2200
        %v2235 = vadd.f32 %v1897, %v2202
        %2236 = vst.msk [vmem:[#allocation4] sm:$0xff] %vm673, %v2204
        %2237 = vst.msk [vmem:[#allocation4 + $0x8] sm:$0xff] %vm673, %v2205
        %2238 = vst.msk [vmem:[#allocation4 + $0x10] sm:$0xff] %vm673, %v2206
        %2239 = vst.msk [vmem:[#allocation4 + $0x18] sm:$0xff] %vm673, %v2207
        %2240 = vst.msk [vmem:[#allocation4 + $0x20] sm:$0xff] %vm673, %v2208
        %2241 = vst.msk [vmem:[#allocation4 + $0x28] sm:$0xff] %vm673, %v2209
        %2242 = vst.msk [vmem:[#allocation4 + $0x30] sm:$0xff] %vm673, %v2210
        %2243 = vst.msk [vmem:[#allocation4 + $0x38] sm:$0xff] %vm673, %v2211
        %2244 = vst.msk [vmem:[#allocation4 + $0x40] sm:$0xff] %vm673, %v2212
        %2245 = vst.msk [vmem:[#allocation4 + $0x48] sm:$0xff] %vm673, %v2213
        %2246 = vst.msk [vmem:[#allocation4 + $0x50] sm:$0xff] %vm673, %v2214
        %2247 = vst.msk [vmem:[#allocation4 + $0x58] sm:$0xff] %vm673, %v2215
        %2248 = vst.msk [vmem:[#allocation4 + $0x60] sm:$0xff] %vm673, %v2216
        %2249 = vst.msk [vmem:[#allocation4 + $0x68] sm:$0xff] %vm673, %v2217
        %2250 = vst.msk [vmem:[#allocation4 + $0x70] sm:$0xff] %vm673, %v2218
        %2251 = vst.msk [vmem:[#allocation4 + $0x78] sm:$0xff] %vm673, %v2219
        %2252 = vst.msk [vmem:[#allocation4 + $0x80] sm:$0xff] %vm673, %v2220
        %2253 = vst.msk [vmem:[#allocation4 + $0x88] sm:$0xff] %vm673, %v2221
        %2254 = vst.msk [vmem:[#allocation4 + $0x90] sm:$0xff] %vm673, %v2222
        %2255 = vst.msk [vmem:[#allocation4 + $0x98] sm:$0xff] %vm673, %v2223
        %2256 = vst.msk [vmem:[#allocation4 + $0xa0] sm:$0xff] %vm673, %v2224
        %2257 = vst.msk [vmem:[#allocation4 + $0xa8] sm:$0xff] %vm673, %v2225
        %2258 = vst.msk [vmem:[#allocation4 + $0xb0] sm:$0xff] %vm673, %v2226
        %2259 = vst.msk [vmem:[#allocation4 + $0xb8] sm:$0xff] %vm673, %v2227
        %2260 = vst.msk [vmem:[#allocation4 + $0xc0] sm:$0xff] %vm673, %v2228
        %2261 = vst.msk [vmem:[#allocation4 + $0xc8] sm:$0xff] %vm673, %v2229
        %2262 = vst.msk [vmem:[#allocation4 + $0xd0] sm:$0xff] %vm673, %v2230
        %2263 = vst.msk [vmem:[#allocation4 + $0xd8] sm:$0xff] %vm673, %v2231
        %2264 = vst.msk [vmem:[#allocation4 + $0xe0] sm:$0xff] %vm673, %v2232
        %2265 = vst.msk [vmem:[#allocation4 + $0xe8] sm:$0xff] %vm673, %v2233
        %2266 = vst.msk [vmem:[#allocation4 + $0xf0] sm:$0xff] %vm673, %v2234
        %2267 = vst.msk [vmem:[#allocation4 + $0xf8] sm:$0xff] %vm673, %v2235
        %2268 = vst.msk [vmem:[#allocation2] sm:$0xff] %vm1641, %v1065
        %2269 = vst.msk [vmem:[#allocation2 + $0x8] sm:$0xff] %vm1641, %v1066
        %2270 = vst.msk [vmem:[#allocation2 + $0x10] sm:$0xff] %vm1641, %v1067
        %2271 = vst.msk [vmem:[#allocation2 + $0x18] sm:$0xff] %vm1641, %v1068
        %2272 = vst.msk [vmem:[#allocation2 + $0x20] sm:$0xff] %vm1641, %v1069
        %2273 = vst.msk [vmem:[#allocation2 + $0x28] sm:$0xff] %vm1641, %v1070
        %2274 = vst.msk [vmem:[#allocation2 + $0x30] sm:$0xff] %vm1641, %v1071
        %2275 = vst.msk [vmem:[#allocation2 + $0x38] sm:$0xff] %vm1641, %v1072
        %2276 = vst.msk [vmem:[#allocation2 + $0x40] sm:$0xff] %vm1641, %v1073
        %2277 = vst.msk [vmem:[#allocation2 + $0x48] sm:$0xff] %vm1641, %v1074
        %2278 = vst.msk [vmem:[#allocation2 + $0x50] sm:$0xff] %vm1641, %v1075
        %2279 = vst.msk [vmem:[#allocation2 + $0x58] sm:$0xff] %vm1641, %v1076
        %2280 = vst.msk [vmem:[#allocation2 + $0x60] sm:$0xff] %vm1641, %v1077
        %2281 = vst.msk [vmem:[#allocation2 + $0x68] sm:$0xff] %vm1641, %v1078
        %2282 = vst.msk [vmem:[#allocation2 + $0x70] sm:$0xff] %vm1641, %v1079
        %2283 = vst.msk [vmem:[#allocation2 + $0x78] sm:$0xff] %vm1641, %v1080
        %2284 = vst.msk [vmem:[#allocation2 + $0x80] sm:$0xff] %vm1641, %v1081
        %2285 = vst.msk [vmem:[#allocation2 + $0x88] sm:$0xff] %vm1641, %v1082
        %2286 = vst.msk [vmem:[#allocation2 + $0x90] sm:$0xff] %vm1641, %v1083
        %2287 = vst.msk [vmem:[#allocation2 + $0x98] sm:$0xff] %vm1641, %v1084
        %2288 = vst.msk [vmem:[#allocation2 + $0xa0] sm:$0xff] %vm1641, %v1085
        %2289 = vst.msk [vmem:[#allocation2 + $0xa8] sm:$0xff] %vm1641, %v1086
        %2290 = vst.msk [vmem:[#allocation2 + $0xb0] sm:$0xff] %vm1641, %v1087
        %2291 = vst.msk [vmem:[#allocation2 + $0xb8] sm:$0xff] %vm1641, %v1088
        %2292 = vst.msk [vmem:[#allocation2 + $0xc0] sm:$0xff] %vm1641, %v1089
        %2293 = vst.msk [vmem:[#allocation2 + $0xc8] sm:$0xff] %vm1641, %v1090
        %2294 = vst.msk [vmem:[#allocation2 + $0xd0] sm:$0xff] %vm1641, %v1091
        %2295 = vst.msk [vmem:[#allocation2 + $0xd8] sm:$0xff] %vm1641, %v1092
        %2296 = vst.msk [vmem:[#allocation2 + $0xe0] sm:$0xff] %vm1641, %v1093
        %2297 = vst.msk [vmem:[#allocation2 + $0xe8] sm:$0xff] %vm1641, %v1094
        %2298 = vst.msk [vmem:[#allocation2 + $0xf0] sm:$0xff] %vm1641, %v1095
        %2299 = vst.msk [vmem:[#allocation2 + $0xf8] sm:$0xff] %vm1641, %v1096
        // Predicated region
        $region78: #{attention_forward.8} parent=68 // pred_check
          %p2300 = pneg %p447
        $region79: #{attention_forward.8} parent=68 // pred_check_branch
          %2302 = sbr.rel (%p2300) target = $region81
        $region80: #{attention_forward.8} parent=68 // pred_region
          %v2303 = vld [vmem:[#allocation3] sm:$0xff]
          %v2304 = vld [vmem:[#allocation3 + $0x8] sm:$0xff]
          %v2305 = vld [vmem:[#allocation3 + $0x10] sm:$0xff]
          %v2306 = vld [vmem:[#allocation3 + $0x18] sm:$0xff]
          %v2307 = vld [vmem:[#allocation3 + $0x20] sm:$0xff]
          %v2308 = vld [vmem:[#allocation3 + $0x28] sm:$0xff]
          %v2309 = vld [vmem:[#allocation3 + $0x30] sm:$0xff]
          %v2310 = vld [vmem:[#allocation3 + $0x38] sm:$0xff]
          %v2311 = vld [vmem:[#allocation3 + $0x40] sm:$0xff]
          %v2312 = vld [vmem:[#allocation3 + $0x48] sm:$0xff]
          %v2313 = vld [vmem:[#allocation3 + $0x50] sm:$0xff]
          %v2314 = vld [vmem:[#allocation3 + $0x58] sm:$0xff]
          %v2315 = vld [vmem:[#allocation3 + $0x60] sm:$0xff]
          %v2316 = vld [vmem:[#allocation3 + $0x68] sm:$0xff]
          %v2317 = vld [vmem:[#allocation3 + $0x70] sm:$0xff]
          %v2318 = vld [vmem:[#allocation3 + $0x78] sm:$0xff]
          %v2319 = vld [vmem:[#allocation3 + $0x80] sm:$0xff]
          %v2320 = vld [vmem:[#allocation3 + $0x88] sm:$0xff]
          %v2321 = vld [vmem:[#allocation3 + $0x90] sm:$0xff]
          %v2322 = vld [vmem:[#allocation3 + $0x98] sm:$0xff]
          %v2323 = vld [vmem:[#allocation3 + $0xa0] sm:$0xff]
          %v2324 = vld [vmem:[#allocation3 + $0xa8] sm:$0xff]
          %v2325 = vld [vmem:[#allocation3 + $0xb0] sm:$0xff]
          %v2326 = vld [vmem:[#allocation3 + $0xb8] sm:$0xff]
          %v2327 = vld [vmem:[#allocation3 + $0xc0] sm:$0xff]
          %v2328 = vld [vmem:[#allocation3 + $0xc8] sm:$0xff]
          %v2329 = vld [vmem:[#allocation3 + $0xd0] sm:$0xff]
          %v2330 = vld [vmem:[#allocation3 + $0xd8] sm:$0xff]
          %v2331 = vld [vmem:[#allocation3 + $0xe0] sm:$0xff]
          %v2332 = vld [vmem:[#allocation3 + $0xe8] sm:$0xff]
          %v2333 = vld [vmem:[#allocation3 + $0xf0] sm:$0xff]
          %v2334 = vld [vmem:[#allocation3 + $0xf8] sm:$0xff]
          %v2335 = vrcp.pop %v2303
          %v2336 = vrcp.pop %v2304
          %v2337 = vrcp.pop %v2305
          %v2338 = vrcp.pop %v2306
          %v2339 = vrcp.pop %v2307
          %v2340 = vrcp.pop %v2308
          %v2341 = vrcp.pop %v2309
          %v2342 = vrcp.pop %v2310
          %v2343 = vrcp.pop %v2311
          %v2344 = vrcp.pop %v2312
          %v2345 = vrcp.pop %v2313
          %v2346 = vrcp.pop %v2314
          %v2347 = vrcp.pop %v2315
          %v2348 = vrcp.pop %v2316
          %v2349 = vrcp.pop %v2317
          %v2350 = vrcp.pop %v2318
          %v2351 = vrcp.pop %v2319
          %v2352 = vrcp.pop %v2320
          %v2353 = vrcp.pop %v2321
          %v2354 = vrcp.pop %v2322
          %v2355 = vrcp.pop %v2323
          %v2356 = vrcp.pop %v2324
          %v2357 = vrcp.pop %v2325
          %v2358 = vrcp.pop %v2326
          %v2359 = vrcp.pop %v2327
          %v2360 = vrcp.pop %v2328
          %v2361 = vrcp.pop %v2329
          %v2362 = vrcp.pop %v2330
          %v2363 = vrcp.pop %v2331
          %v2364 = vrcp.pop %v2332
          %v2365 = vrcp.pop %v2333
          %v2366 = vrcp.pop %v2334
          %v2367 = vld [vmem:[#allocation4] sm:$0xff]
          %v2368 = vld [vmem:[#allocation4 + $0x8] sm:$0xff]
          %v2369 = vld [vmem:[#allocation4 + $0x10] sm:$0xff]
          %v2370 = vld [vmem:[#allocation4 + $0x18] sm:$0xff]
          %v2371 = vld [vmem:[#allocation4 + $0x20] sm:$0xff]
          %v2372 = vld [vmem:[#allocation4 + $0x28] sm:$0xff]
          %v2373 = vld [vmem:[#allocation4 + $0x30] sm:$0xff]
          %v2374 = vld [vmem:[#allocation4 + $0x38] sm:$0xff]
          %v2375 = vld [vmem:[#allocation4 + $0x40] sm:$0xff]
          %v2376 = vld [vmem:[#allocation4 + $0x48] sm:$0xff]
          %v2377 = vld [vmem:[#allocation4 + $0x50] sm:$0xff]
          %v2378 = vld [vmem:[#allocation4 + $0x58] sm:$0xff]
          %v2379 = vld [vmem:[#allocation4 + $0x60] sm:$0xff]
          %v2380 = vld [vmem:[#allocation4 + $0x68] sm:$0xff]
          %v2381 = vld [vmem:[#allocation4 + $0x70] sm:$0xff]
          %v2382 = vld [vmem:[#allocation4 + $0x78] sm:$0xff]
          %2384 = vset.pattern.permute.xlu0 0
          %2385 = vperm.xlu0 %2384, %v2335
          %v2386 = vpop.permute.xlu0 %2385
          %2389 = vset.pattern.permute.xlu0 0
          %2390 = vperm.xlu0 %2389, %v2336
          %v2391 = vpop.permute.xlu0 %2390
          %2394 = vset.pattern.permute.xlu0 0
          %2395 = vperm.xlu0 %2394, %v2337
          %v2396 = vpop.permute.xlu0 %2395
          %2399 = vset.pattern.permute.xlu0 0
          %2400 = vperm.xlu0 %2399, %v2338
          %v2401 = vpop.permute.xlu0 %2400
          %2404 = vset.pattern.permute.xlu0 0
          %2405 = vperm.xlu0 %2404, %v2339
          %v2406 = vpop.permute.xlu0 %2405
          %2409 = vset.pattern.permute.xlu0 0
          %2410 = vperm.xlu0 %2409, %v2340
          %v2411 = vpop.permute.xlu0 %2410
          %2414 = vset.pattern.permute.xlu0 0
          %2415 = vperm.xlu0 %2414, %v2341
          %v2416 = vpop.permute.xlu0 %2415
          %2419 = vset.pattern.permute.xlu0 0
          %2420 = vperm.xlu0 %2419, %v2342
          %v2421 = vpop.permute.xlu0 %2420
          %2424 = vset.pattern.permute.xlu0 0
          %2425 = vperm.xlu0 %2424, %v2343
          %v2426 = vpop.permute.xlu0 %2425
          %2429 = vset.pattern.permute.xlu0 0
          %2430 = vperm.xlu0 %2429, %v2344
          %v2431 = vpop.permute.xlu0 %2430
          %2434 = vset.pattern.permute.xlu0 0
          %2435 = vperm.xlu0 %2434, %v2345
          %v2436 = vpop.permute.xlu0 %2435
          %2439 = vset.pattern.permute.xlu0 0
          %2440 = vperm.xlu0 %2439, %v2346
          %v2441 = vpop.permute.xlu0 %2440
          %2444 = vset.pattern.permute.xlu0 0
          %2445 = vperm.xlu0 %2444, %v2347
          %v2446 = vpop.permute.xlu0 %2445
          %2449 = vset.pattern.permute.xlu0 0
          %2450 = vperm.xlu0 %2449, %v2348
          %v2451 = vpop.permute.xlu0 %2450
          %2454 = vset.pattern.permute.xlu0 0
          %2455 = vperm.xlu0 %2454, %v2349
          %v2456 = vpop.permute.xlu0 %2455
          %2459 = vset.pattern.permute.xlu0 0
          %2460 = vperm.xlu0 %2459, %v2350
          %v2461 = vpop.permute.xlu0 %2460
          %v2463 = vmul.f32 %v2367, %v2386
          %v2464 = vmul.f32 %v2368, %v2391
          %v2465 = vmul.f32 %v2369, %v2396
          %v2466 = vmul.f32 %v2370, %v2401
          %v2467 = vmul.f32 %v2371, %v2406
          %v2468 = vmul.f32 %v2372, %v2411
          %v2469 = vmul.f32 %v2373, %v2416
          %v2470 = vmul.f32 %v2374, %v2421
          %v2471 = vmul.f32 %v2375, %v2426
          %v2472 = vmul.f32 %v2376, %v2431
          %v2473 = vmul.f32 %v2377, %v2436
          %v2474 = vmul.f32 %v2378, %v2441
          %v2475 = vmul.f32 %v2379, %v2446
          %v2476 = vmul.f32 %v2380, %v2451
          %v2477 = vmul.f32 %v2381, %v2456
          %v2478 = vmul.f32 %v2382, %v2461
          %s2479 = scalar_lea.vmem [#allocation4], 128
          %v2480 = vld [vmem:[%s2479] sm:$0xff]
          %v2481 = vld [vmem:[%s2479 + $0x8] sm:$0xff]
          %v2482 = vld [vmem:[%s2479 + $0x10] sm:$0xff]
          %v2483 = vld [vmem:[%s2479 + $0x18] sm:$0xff]
          %v2484 = vld [vmem:[%s2479 + $0x20] sm:$0xff]
          %v2485 = vld [vmem:[%s2479 + $0x28] sm:$0xff]
          %v2486 = vld [vmem:[%s2479 + $0x30] sm:$0xff]
          %v2487 = vld [vmem:[%s2479 + $0x38] sm:$0xff]
          %v2488 = vld [vmem:[%s2479 + $0x40] sm:$0xff]
          %v2489 = vld [vmem:[%s2479 + $0x48] sm:$0xff]
          %v2490 = vld [vmem:[%s2479 + $0x50] sm:$0xff]
          %v2491 = vld [vmem:[%s2479 + $0x58] sm:$0xff]
          %v2492 = vld [vmem:[%s2479 + $0x60] sm:$0xff]
          %v2493 = vld [vmem:[%s2479 + $0x68] sm:$0xff]
          %v2494 = vld [vmem:[%s2479 + $0x70] sm:$0xff]
          %v2495 = vld [vmem:[%s2479 + $0x78] sm:$0xff]
          %2497 = vset.pattern.permute.xlu0 0
          %2498 = vperm.xlu0 %2497, %v2351
          %v2499 = vpop.permute.xlu0 %2498
          %2502 = vset.pattern.permute.xlu0 0
          %2503 = vperm.xlu0 %2502, %v2352
          %v2504 = vpop.permute.xlu0 %2503
          %2507 = vset.pattern.permute.xlu0 0
          %2508 = vperm.xlu0 %2507, %v2353
          %v2509 = vpop.permute.xlu0 %2508
          %2512 = vset.pattern.permute.xlu0 0
          %2513 = vperm.xlu0 %2512, %v2354
          %v2514 = vpop.permute.xlu0 %2513
          %2517 = vset.pattern.permute.xlu0 0
          %2518 = vperm.xlu0 %2517, %v2355
          %v2519 = vpop.permute.xlu0 %2518
          %2522 = vset.pattern.permute.xlu0 0
          %2523 = vperm.xlu0 %2522, %v2356
          %v2524 = vpop.permute.xlu0 %2523
          %2527 = vset.pattern.permute.xlu0 0
          %2528 = vperm.xlu0 %2527, %v2357
          %v2529 = vpop.permute.xlu0 %2528
          %2532 = vset.pattern.permute.xlu0 0
          %2533 = vperm.xlu0 %2532, %v2358
          %v2534 = vpop.permute.xlu0 %2533
          %2537 = vset.pattern.permute.xlu0 0
          %2538 = vperm.xlu0 %2537, %v2359
          %v2539 = vpop.permute.xlu0 %2538
          %2542 = vset.pattern.permute.xlu0 0
          %2543 = vperm.xlu0 %2542, %v2360
          %v2544 = vpop.permute.xlu0 %2543
          %2547 = vset.pattern.permute.xlu0 0
          %2548 = vperm.xlu0 %2547, %v2361
          %v2549 = vpop.permute.xlu0 %2548
          %2552 = vset.pattern.permute.xlu0 0
          %2553 = vperm.xlu0 %2552, %v2362
          %v2554 = vpop.permute.xlu0 %2553
          %2557 = vset.pattern.permute.xlu0 0
          %2558 = vperm.xlu0 %2557, %v2363
          %v2559 = vpop.permute.xlu0 %2558
          %2562 = vset.pattern.permute.xlu0 0
          %2563 = vperm.xlu0 %2562, %v2364
          %v2564 = vpop.permute.xlu0 %2563
          %2567 = vset.pattern.permute.xlu0 0
          %2568 = vperm.xlu0 %2567, %v2365
          %v2569 = vpop.permute.xlu0 %2568
          %2572 = vset.pattern.permute.xlu0 0
          %2573 = vperm.xlu0 %2572, %v2366
          %v2574 = vpop.permute.xlu0 %2573
          %v2576 = vmul.f32 %v2480, %v2499
          %v2577 = vmul.f32 %v2481, %v2504
          %v2578 = vmul.f32 %v2482, %v2509
          %v2579 = vmul.f32 %v2483, %v2514
          %v2580 = vmul.f32 %v2484, %v2519
          %v2581 = vmul.f32 %v2485, %v2524
          %v2582 = vmul.f32 %v2486, %v2529
          %v2583 = vmul.f32 %v2487, %v2534
          %v2584 = vmul.f32 %v2488, %v2539
          %v2585 = vmul.f32 %v2489, %v2544
          %v2586 = vmul.f32 %v2490, %v2549
          %v2587 = vmul.f32 %v2491, %v2554
          %v2588 = vmul.f32 %v2492, %v2559
          %v2589 = vmul.f32 %v2493, %v2564
          %v2590 = vmul.f32 %v2494, %v2569
          %v2591 = vmul.f32 %v2495, %v2574
          %2608 = vrot.lane.b32.xlu0 %v2576, 32
          %v2609 = vpop.permute.xlu0 %2608
          %2610 = vrot.lane.b32.xlu0 %v2577, 32
          %v2611 = vpop.permute.xlu0 %2610
          %2612 = vrot.lane.b32.xlu0 %v2578, 32
          %v2613 = vpop.permute.xlu0 %2612
          %2614 = vrot.lane.b32.xlu0 %v2579, 32
          %v2615 = vpop.permute.xlu0 %2614
          %2616 = vrot.lane.b32.xlu0 %v2580, 32
          %v2617 = vpop.permute.xlu0 %2616
          %2618 = vrot.lane.b32.xlu0 %v2581, 32
          %v2619 = vpop.permute.xlu0 %2618
          %2620 = vrot.lane.b32.xlu0 %v2582, 32
          %v2621 = vpop.permute.xlu0 %2620
          %2622 = vrot.lane.b32.xlu0 %v2583, 32
          %v2623 = vpop.permute.xlu0 %2622
          %2624 = vrot.lane.b32.xlu0 %v2584, 32
          %v2625 = vpop.permute.xlu0 %2624
          %2626 = vrot.lane.b32.xlu0 %v2585, 32
          %v2627 = vpop.permute.xlu0 %2626
          %2628 = vrot.lane.b32.xlu0 %v2586, 32
          %v2629 = vpop.permute.xlu0 %2628
          %2630 = vrot.lane.b32.xlu0 %v2587, 32
          %v2631 = vpop.permute.xlu0 %2630
          %2632 = vrot.lane.b32.xlu0 %v2588, 32
          %v2633 = vpop.permute.xlu0 %2632
          %2634 = vrot.lane.b32.xlu0 %v2589, 32
          %v2635 = vpop.permute.xlu0 %2634
          %2636 = vrot.lane.b32.xlu0 %v2590, 32
          %v2637 = vpop.permute.xlu0 %2636
          %2638 = vrot.lane.b32.xlu0 %v2591, 32
          %v2639 = vpop.permute.xlu0 %2638
          %v2656 = vsel %vm673, %v2463, %v2609
          %v2657 = vsel %vm673, %v2464, %v2611
          %v2658 = vsel %vm673, %v2465, %v2613
          %v2659 = vsel %vm673, %v2466, %v2615
          %v2660 = vsel %vm673, %v2467, %v2617
          %v2661 = vsel %vm673, %v2468, %v2619
          %v2662 = vsel %vm673, %v2469, %v2621
          %v2663 = vsel %vm673, %v2470, %v2623
          %v2664 = vsel %vm673, %v2471, %v2625
          %v2665 = vsel %vm673, %v2472, %v2627
          %v2666 = vsel %vm673, %v2473, %v2629
          %v2667 = vsel %vm673, %v2474, %v2631
          %v2668 = vsel %vm673, %v2475, %v2633
          %v2669 = vsel %vm673, %v2476, %v2635
          %v2670 = vsel %vm673, %v2477, %v2637
          %v2671 = vsel %vm673, %v2478, %v2639
          %2672 = vst.msk [vmem:[%s444] sm:$0xff] %vm968, %v2656
          %2673 = vst.msk [vmem:[%s444 + $0x8] sm:$0xff] %vm968, %v2657
          %2674 = vst.msk [vmem:[%s444 + $0x10] sm:$0xff] %vm968, %v2658
          %2675 = vst.msk [vmem:[%s444 + $0x18] sm:$0xff] %vm968, %v2659
          %2676 = vst.msk [vmem:[%s444 + $0x20] sm:$0xff] %vm968, %v2660
          %2677 = vst.msk [vmem:[%s444 + $0x28] sm:$0xff] %vm968, %v2661
          %2678 = vst.msk [vmem:[%s444 + $0x30] sm:$0xff] %vm968, %v2662
          %2679 = vst.msk [vmem:[%s444 + $0x38] sm:$0xff] %vm968, %v2663
          %2680 = vst.msk [vmem:[%s444 + $0x40] sm:$0xff] %vm968, %v2664
          %2681 = vst.msk [vmem:[%s444 + $0x48] sm:$0xff] %vm968, %v2665
          %2682 = vst.msk [vmem:[%s444 + $0x50] sm:$0xff] %vm968, %v2666
          %2683 = vst.msk [vmem:[%s444 + $0x58] sm:$0xff] %vm968, %v2667
          %2684 = vst.msk [vmem:[%s444 + $0x60] sm:$0xff] %vm968, %v2668
          %2685 = vst.msk [vmem:[%s444 + $0x68] sm:$0xff] %vm968, %v2669
          %2686 = vst.msk [vmem:[%s444 + $0x70] sm:$0xff] %vm968, %v2670
          %2687 = vst.msk [vmem:[%s444 + $0x78] sm:$0xff] %vm968, %v2671
        $region81: #{attention_forward.8} parent=68 // pred_fallthru
          _
        %s2688 = smul.u32 16, %s20
        %p2689 = scmp.lt.s32.totalorder %s19, 1
        %s2690 = scalar_select %p2689, %s19, 1
        %p2691 = scmp.lt.s32.totalorder %s2688, 31
        %s2692 = scalar_select %p2691, %s2688, 31
        %s2693 = smul.addr %s2690, 32
        %s2694 = sadd.s32 %s2692, %s2693
        %s2695 = smul.addr %s2694, 8
        %s2696 = scalar_lea.vmem %s3, %s2695
        // Predicated region
        $region82: #{attention_forward.8} parent=68 // pred_check
          %p2697 = pneg %p137
        $region83: #{attention_forward.8} parent=68 // pred_check_branch
          %2699 = sbr.rel (%p2697) target = $region85
        $region84: #{attention_forward.8} parent=68 // pred_region
          %s2700 = smul.u32 16, %s20
        $region85: #{attention_forward.8} parent=68 // pred_fallthru
          _
      $region69: #{attention_forward.8} parent=5 // pred_fallthru
        _
      %p2701 = scmp.le.s32.totalorder 2, %s9
      // Predicated region
      $region86: #{attention_forward.8} parent=5 // pred_check
        %p2702 = pneg %p2701
      $region87: #{attention_forward.8} parent=5 // pred_check_branch
        %2704 = sbr.rel (%p2702) target = $region89
      $region88: #{attention_forward.8} parent=5 // pred_region
        %s2705 = ssub.s32 %s9, 2
        // Predicated region
        $region90: #{attention_forward.8} parent=88 // pred_check
          %p2706 = pneg %p143
        $region91: #{attention_forward.8} parent=88 // pred_check_branch
          %2708 = sbr.rel (%p2706) target = $region93
        $region92: #{attention_forward.8} parent=88 // pred_region
          %s2709 = smul.u32 16, %s23
          %p2710 = scmp.lt.s32.totalorder %s22, 1
          %s2711 = scalar_select %p2710, %s22, 1
          %p2712 = scmp.lt.s32.totalorder %s2709, 31
          %s2713 = scalar_select %p2712, %s2709, 31
          %s2714 = smul.addr %s2711, 32
          %s2715 = sadd.s32 %s2713, %s2714
          %s2716 = smul.addr %s2715, 8
          %s2717 = scalar_lea.vmem %s3, %s2716
        $region93: #{attention_forward.8} parent=88 // pred_fallthru
          _
      $region89: #{attention_forward.8} parent=5 // pred_fallthru
        _
    $region6: #{attention_forward.8} parent=1 // loop_footer
      %s13 = sadd.s32 1, %s9
    $region7: #{attention_forward.8} parent=1 // loop_footer_branch
      %8 = sbr.rel target = $region3
    $region8: #{attention_forward.8} parent=1 // loop_exit
      _

</llo_original>
